<compile_context>
chip_gen: v7x
topology: tpu7x:2x2x1
jax: 0.10.0
libtpu: 0.0.40
codegen_flags: <defaults>
</compile_context>

<pallas_src>
import functools

import jax
import jax.numpy as jnp
from jax.experimental import pallas as pl
from jax.experimental.pallas import tpu as pltpu


def _resblock_kernel(x_ref, w1_ref, b1_ref, w2_ref, b2_ref, out_ref, *,
                     pitch, height, width):
    """Fused resblock on one image in channel-major flattened layout.

    x_ref:   (C, M)    zero-padded input image, M = (H+4)*(W+4), pitch = W+4
    w*_ref:  (9, C, C) conv weights, [ky*3+kx, c_out, c_in]
    b*_ref:  (C, 1)    conv biases
    out_ref: (C, M)    output in the padded layout (ring cropped by wrapper)
    """
    C, M = out_ref.shape
    P = pitch

    xv = x_ref[...].astype(jnp.float32)

    def shifted(v, d):
        # result[:, m] = v[:, m + d], zero-filled at the array ends.  Static
        # lane slices + lane concat; the fill / row wrap-around only ever
        # lands on pad-ring positions that are masked (h) or cropped (out).
        if d == 0:
            return v
        if d > 0:
            return jnp.concatenate(
                [v[:, d:], jnp.zeros((C, d), jnp.float32)], axis=1)
        return jnp.concatenate(
            [jnp.zeros((C, -d), jnp.float32), v[:, :M + d]], axis=1)

    def conv3x3(v, w_ref):
        # 9 small (C,C)@(C,M) MXU dots with a contiguous accumulation chain
        # into a dense (C, M) value (~4 vregs at C=4): no VMEM round trip.
        acc = jnp.zeros((C, M), jnp.float32)
        for ky in range(3):
            for kx in range(3):
                d = (ky - 1) * P + (kx - 1)
                w_tap = w_ref[ky * 3 + kx].astype(jnp.float32)  # (C_out, C_in)
                acc = acc + jnp.dot(w_tap, shifted(v, d),
                                    preferred_element_type=jnp.float32)
        return acc

    # Validity mask of the intermediate h (conv2 must see zeros outside the
    # image).  Built in-kernel: rows from a flat iota compare, columns by
    # lane-concatenating one per-row pattern (avoids vector div/mod and the
    # old DMA'd mask input).
    col_iota = jax.lax.broadcasted_iota(jnp.int32, (1, P), 1)
    col_mask = ((col_iota >= 2) & (col_iota < width + 2)).astype(jnp.float32)
    col_mask = jnp.concatenate([col_mask] * (M // P), axis=1)         # (1, M)
    m_iota = jax.lax.broadcasted_iota(jnp.int32, (1, M), 1)
    row_ok = (m_iota >= 2 * P) & (m_iota < (height + 2) * P)          # (1, M)

    # conv1 + bias + ReLU, zeroed on the pad ring; h stays on-chip.
    h = conv3x3(xv, w1_ref) + b1_ref[...].astype(jnp.float32)
    h = jnp.where(row_ok, jnp.maximum(h, 0.0) * col_mask, 0.0)

    # conv2 + bias + residual; one full dense store.
    y = conv3x3(h, w2_ref) + b2_ref[...].astype(jnp.float32) + xv
    out_ref[...] = y.astype(out_ref.dtype)


def resblock_forward(x_nchw, w1_oihw, b1, w2_oihw, b2):
    """Equivalent of _Resblock_.forward. x: (N,C,H,W); weights OIHW (C,C,3,3)."""
    N, C, H, W = x_nchw.shape
    PH = PW = 2                               # halo for two chained 3x3 convs
    Hp, P = H + 2 * PH, W + 2 * PW
    M = Hp * P

    # TODO(synk): add a row-tiled path (manual halo DMA) for very large images;
    # one whole image per grid step is sized for small/medium inputs and keeps
    # HBM traffic minimal (no overlapping slab copies, no halo recompute).

    # Zero-pad once and flatten rows*cols onto the minor (lane) axis -> (N,C,M).
    xp = jnp.pad(x_nchw, ((0, 0), (0, 0), (PH, PH), (PW, PW))).reshape(N, C, M)

    # Weights (C_out, C_in, 3, 3) -> tap-major (9, C_out, C_in); bias -> (C, 1).
    w1_t = jnp.transpose(w1_oihw, (2, 3, 0, 1)).reshape(9, C, C)
    w2_t = jnp.transpose(w2_oihw, (2, 3, 0, 1)).reshape(9, C, C)
    b1_c = b1.reshape(C, 1)
    b2_c = b2.reshape(C, 1)

    kernel = functools.partial(_resblock_kernel, pitch=P, height=H, width=W)

    flops = 4 * 9 * C * C * M * N                       # 2 convs, 2 flops/MAC
    bytes_accessed = 4 * (2 * N * C * M + 2 * 9 * C * C + 2 * C)

    out = pl.pallas_call(
        kernel,
        out_shape=jax.ShapeDtypeStruct((N, C, M), x_nchw.dtype),
        grid=(N,),
        in_specs=[
            pl.BlockSpec((None, C, M), lambda n: (n, 0, 0)),
            pl.BlockSpec((9, C, C), lambda n: (0, 0, 0)),
            pl.BlockSpec((C, 1), lambda n: (0, 0)),
            pl.BlockSpec((9, C, C), lambda n: (0, 0, 0)),
            pl.BlockSpec((C, 1), lambda n: (0, 0)),
        ],
        out_specs=pl.BlockSpec((None, C, M), lambda n: (n, 0, 0)),
        compiler_params=pltpu.CompilerParams(
            dimension_semantics=("parallel",)),
        cost_estimate=pl.CostEstimate(flops=flops, transcendentals=0,
                                      bytes_accessed=bytes_accessed),
    )(xp, w1_t, b1_c, w2_t, b2_c)

    # Crop the pad ring; the data is already NCHW, so no transpose is needed.
    return out.reshape(N, C, Hp, P)[:, :, PH:PH + H, PW:PW + W]


def _reference_resblock(x, w1_oihw, b1, w2_oihw, b2):
    """Pure-JAX reference (matches nn.Conv2d cross-correlation semantics)."""
    dn = jax.lax.conv_dimension_numbers(x.shape, w1_oihw.shape,
                                        ('NCHW', 'OIHW', 'NCHW'))
    h = jax.lax.conv_general_dilated(x, w1_oihw, (1, 1), ((1, 1), (1, 1)),
                                     dimension_numbers=dn)
    h = jnp.maximum(h + b1[None, :, None, None], 0.0)
    y = jax.lax.conv_general_dilated(h, w2_oihw, (1, 1), ((1, 1), (1, 1)),
                                     dimension_numbers=dn)
    return x + y + b2[None, :, None, None]


if __name__ == "__main__":
    N, C, H, W = 2, 4, 16, 16

    key = jax.random.PRNGKey(0)
    kx, kw1, kb1, kw2, kb2 = jax.random.split(key, 5)

    # Deterministic synthetic parameters (nn.Conv2d(c, c, 3) shapes, OIHW).
    x = jax.random.normal(kx, (N, C, H, W), jnp.float32)
    w1 = jax.random.normal(kw1, (C, C, 3, 3), jnp.float32) * 0.1
    b1 = jax.random.normal(kb1, (C,), jnp.float32) * 0.1
    w2 = jax.random.normal(kw2, (C, C, 3, 3), jnp.float32) * 0.1
    b2 = jax.random.normal(kb2, (C,), jnp.float32) * 0.1

    out = jax.block_until_ready(resblock_forward(x, w1, b1, w2, b2))

    ref = _reference_resblock(x, w1, b1, w2, b2)
    assert out.shape == (N, C, H, W) and out.dtype == jnp.float32
    max_err = float(jnp.max(jnp.abs(out - ref)))
    assert jnp.allclose(out, ref, atol=1e-4, rtol=1e-4), f"max_err={max_err}"

    print("KERNEL_OK")
</pallas_src>

<mosaic_0001>
module attributes {stable_mosaic.version = 11 : i64} {
  func.func @_resblock_kernel(%arg0: i32, %arg1: memref<1x4x400xf32, #tpu.memory_space<vmem>>, %arg2: memref<9x4x4xf32, #tpu.memory_space<vmem>>, %arg3: memref<4x1xf32, #tpu.memory_space<vmem>>, %arg4: memref<9x4x4xf32, #tpu.memory_space<vmem>>, %arg5: memref<4x1xf32, #tpu.memory_space<vmem>>, %arg6: memref<1x4x400xf32, #tpu.memory_space<vmem>>) attributes {dimension_semantics = [#tpu.dimension_semantics<parallel>], iteration_bounds = array<i64: 2>, scalar_prefetch = 0 : i64, scratch_operands = 0 : i64, tpu.core_type = #tpu.core_type<tc>, window_params = [{transform_indices = @transform_0, window_bounds = array<i64: 1, 4, 400>}, {pipeline_mode = #tpu.pipeline_mode<synchronous>, transform_indices = @transform_1, window_bounds = array<i64: 9, 4, 4>}, {pipeline_mode = #tpu.pipeline_mode<synchronous>, transform_indices = @transform_2, window_bounds = array<i64: 4, 1>}, {pipeline_mode = #tpu.pipeline_mode<synchronous>, transform_indices = @transform_3, window_bounds = array<i64: 9, 4, 4>}, {pipeline_mode = #tpu.pipeline_mode<synchronous>, transform_indices = @transform_4, window_bounds = array<i64: 4, 1>}, {transform_indices = @transform_5, window_bounds = array<i64: 1, 4, 400>}]} {
    %c0 = arith.constant 0 : index
    %c0_0 = arith.constant 0 : index
    %c0_1 = arith.constant 0 : index
    %0 = vector.load %arg1[%c0, %c0_0, %c0_1] : memref<1x4x400xf32, #tpu.memory_space<vmem>>, vector<1x4x400xf32>
    %1 = vector.shape_cast %0 : vector<1x4x400xf32> to vector<4x400xf32>
    %2 = tpu.iota {dimensions = array<i32: 1>} : vector<1x20xi32>
    %c2_i32 = arith.constant 2 : i32
    %3 = vector.broadcast %c2_i32 : i32 to vector<1x20xi32>
    %4 = arith.cmpi sge, %2, %3 : vector<1x20xi32>
    %c18_i32 = arith.constant 18 : i32
    %5 = vector.broadcast %c18_i32 : i32 to vector<1x20xi32>
    %6 = arith.cmpi slt, %2, %5 : vector<1x20xi32>
    %7 = arith.andi %4, %6 : vector<1x20xi1>
    %8 = arith.extui %7 : vector<1x20xi1> to vector<1x20xi32>
    %9 = arith.sitofp %8 : vector<1x20xi32> to vector<1x20xf32>
    %10 = tpu.concatenate %9, %9, %9, %9, %9, %9, %9, %9, %9, %9, %9, %9, %9, %9, %9, %9 in 1 : vector<1x20xf32>, vector<1x20xf32>, vector<1x20xf32>, vector<1x20xf32>, vector<1x20xf32>, vector<1x20xf32>, vector<1x20xf32>, vector<1x20xf32>, vector<1x20xf32>, vector<1x20xf32>, vector<1x20xf32>, vector<1x20xf32>, vector<1x20xf32>, vector<1x20xf32>, vector<1x20xf32>, vector<1x20xf32> -> vector<1x320xf32>
    %11 = tpu.concatenate %9, %9, %9, %9 in 1 : vector<1x20xf32>, vector<1x20xf32>, vector<1x20xf32>, vector<1x20xf32> -> vector<1x80xf32>
    %12 = tpu.concatenate %10, %11 in 1 : vector<1x320xf32>, vector<1x80xf32> -> vector<1x400xf32>
    %13 = tpu.iota {dimensions = array<i32: 1>} : vector<1x400xi32>
    %c40_i32 = arith.constant 40 : i32
    %14 = vector.broadcast %c40_i32 : i32 to vector<1x400xi32>
    %15 = arith.cmpi sge, %13, %14 : vector<1x400xi32>
    %c360_i32 = arith.constant 360 : i32
    %16 = vector.broadcast %c360_i32 : i32 to vector<1x400xi32>
    %17 = arith.cmpi slt, %13, %16 : vector<1x400xi32>
    %18 = arith.andi %15, %17 : vector<1x400xi1>
    %cst = arith.constant 0.000000e+00 : f32
    %19 = vector.broadcast %cst : f32 to vector<4x400xf32>
    %c0_2 = arith.constant 0 : index
    %c0_3 = arith.constant 0 : index
    %c0_4 = arith.constant 0 : index
    %20 = vector.load %arg2[%c0_2, %c0_3, %c0_4] : memref<9x4x4xf32, #tpu.memory_space<vmem>>, vector<1x4x4xf32>
    %21 = vector.shape_cast %20 : vector<1x4x4xf32> to vector<4x4xf32>
    %cst_5 = arith.constant 0.000000e+00 : f32
    %22 = vector.broadcast %cst_5 : f32 to vector<4x21xf32>
    %23 = vector.extract_strided_slice %1 {offsets = [0, 0], sizes = [4, 379], strides = [1, 1]} : vector<4x400xf32> to vector<4x379xf32>
    %24 = tpu.concatenate %22, %23 in 1 : vector<4x21xf32>, vector<4x379xf32> -> vector<4x400xf32>
    %cst_6 = arith.constant dense<0.000000e+00> : vector<4x400xf32>
    %25 = tpu.matmul %21, %24, %cst_6 {dimension_numbers = #tpu.dot_dimension_numbers<[1], [0], [0], [1], [0, 0, 1, 1], [], []>} : vector<4x4xf32>, vector<4x400xf32>, vector<4x400xf32> -> vector<4x400xf32>
    %26 = arith.addf %19, %25 : vector<4x400xf32>
    %c1 = arith.constant 1 : index
    %c0_7 = arith.constant 0 : index
    %c0_8 = arith.constant 0 : index
    %27 = vector.load %arg2[%c1, %c0_7, %c0_8] : memref<9x4x4xf32, #tpu.memory_space<vmem>>, vector<1x4x4xf32>
    %28 = vector.shape_cast %27 : vector<1x4x4xf32> to vector<4x4xf32>
    %cst_9 = arith.constant 0.000000e+00 : f32
    %29 = vector.broadcast %cst_9 : f32 to vector<4x20xf32>
    %30 = vector.extract_strided_slice %1 {offsets = [0, 0], sizes = [4, 380], strides = [1, 1]} : vector<4x400xf32> to vector<4x380xf32>
    %31 = tpu.concatenate %29, %30 in 1 : vector<4x20xf32>, vector<4x380xf32> -> vector<4x400xf32>
    %cst_10 = arith.constant dense<0.000000e+00> : vector<4x400xf32>
    %32 = tpu.matmul %28, %31, %cst_10 {dimension_numbers = #tpu.dot_dimension_numbers<[1], [0], [0], [1], [0, 0, 1, 1], [], []>} : vector<4x4xf32>, vector<4x400xf32>, vector<4x400xf32> -> vector<4x400xf32>
    %33 = arith.addf %26, %32 : vector<4x400xf32>
    %c2 = arith.constant 2 : index
    %c0_11 = arith.constant 0 : index
    %c0_12 = arith.constant 0 : index
    %34 = vector.load %arg2[%c2, %c0_11, %c0_12] : memref<9x4x4xf32, #tpu.memory_space<vmem>>, vector<1x4x4xf32>
    %35 = vector.shape_cast %34 : vector<1x4x4xf32> to vector<4x4xf32>
    %cst_13 = arith.constant 0.000000e+00 : f32
    %36 = vector.broadcast %cst_13 : f32 to vector<4x19xf32>
    %37 = vector.extract_strided_slice %1 {offsets = [0, 0], sizes = [4, 381], strides = [1, 1]} : vector<4x400xf32> to vector<4x381xf32>
    %38 = tpu.concatenate %36, %37 in 1 : vector<4x19xf32>, vector<4x381xf32> -> vector<4x400xf32>
    %cst_14 = arith.constant dense<0.000000e+00> : vector<4x400xf32>
    %39 = tpu.matmul %35, %38, %cst_14 {dimension_numbers = #tpu.dot_dimension_numbers<[1], [0], [0], [1], [0, 0, 1, 1], [], []>} : vector<4x4xf32>, vector<4x400xf32>, vector<4x400xf32> -> vector<4x400xf32>
    %40 = arith.addf %33, %39 : vector<4x400xf32>
    %c3 = arith.constant 3 : index
    %c0_15 = arith.constant 0 : index
    %c0_16 = arith.constant 0 : index
    %41 = vector.load %arg2[%c3, %c0_15, %c0_16] : memref<9x4x4xf32, #tpu.memory_space<vmem>>, vector<1x4x4xf32>
    %42 = vector.shape_cast %41 : vector<1x4x4xf32> to vector<4x4xf32>
    %cst_17 = arith.constant 0.000000e+00 : f32
    %43 = vector.broadcast %cst_17 : f32 to vector<4x1xf32>
    %44 = vector.extract_strided_slice %1 {offsets = [0, 0], sizes = [4, 399], strides = [1, 1]} : vector<4x400xf32> to vector<4x399xf32>
    %45 = tpu.concatenate %43, %44 in 1 : vector<4x1xf32>, vector<4x399xf32> -> vector<4x400xf32>
    %cst_18 = arith.constant dense<0.000000e+00> : vector<4x400xf32>
    %46 = tpu.matmul %42, %45, %cst_18 {dimension_numbers = #tpu.dot_dimension_numbers<[1], [0], [0], [1], [0, 0, 1, 1], [], []>} : vector<4x4xf32>, vector<4x400xf32>, vector<4x400xf32> -> vector<4x400xf32>
    %47 = arith.addf %40, %46 : vector<4x400xf32>
    %c4 = arith.constant 4 : index
    %c0_19 = arith.constant 0 : index
    %c0_20 = arith.constant 0 : index
    %48 = vector.load %arg2[%c4, %c0_19, %c0_20] : memref<9x4x4xf32, #tpu.memory_space<vmem>>, vector<1x4x4xf32>
    %49 = vector.shape_cast %48 : vector<1x4x4xf32> to vector<4x4xf32>
    %cst_21 = arith.constant dense<0.000000e+00> : vector<4x400xf32>
    %50 = tpu.matmul %49, %1, %cst_21 {dimension_numbers = #tpu.dot_dimension_numbers<[1], [0], [0], [1], [0, 0, 1, 1], [], []>} : vector<4x4xf32>, vector<4x400xf32>, vector<4x400xf32> -> vector<4x400xf32>
    %51 = arith.addf %47, %50 : vector<4x400xf32>
    %c5 = arith.constant 5 : index
    %c0_22 = arith.constant 0 : index
    %c0_23 = arith.constant 0 : index
    %52 = vector.load %arg2[%c5, %c0_22, %c0_23] : memref<9x4x4xf32, #tpu.memory_space<vmem>>, vector<1x4x4xf32>
    %53 = vector.shape_cast %52 : vector<1x4x4xf32> to vector<4x4xf32>
    %54 = vector.extract_strided_slice %1 {offsets = [0, 1], sizes = [4, 399], strides = [1, 1]} : vector<4x400xf32> to vector<4x399xf32>
    %cst_24 = arith.constant 0.000000e+00 : f32
    %55 = vector.broadcast %cst_24 : f32 to vector<4x1xf32>
    %56 = tpu.concatenate %54, %55 in 1 : vector<4x399xf32>, vector<4x1xf32> -> vector<4x400xf32>
    %cst_25 = arith.constant dense<0.000000e+00> : vector<4x400xf32>
    %57 = tpu.matmul %53, %56, %cst_25 {dimension_numbers = #tpu.dot_dimension_numbers<[1], [0], [0], [1], [0, 0, 1, 1], [], []>} : vector<4x4xf32>, vector<4x400xf32>, vector<4x400xf32> -> vector<4x400xf32>
    %58 = arith.addf %51, %57 : vector<4x400xf32>
    %c6 = arith.constant 6 : index
    %c0_26 = arith.constant 0 : index
    %c0_27 = arith.constant 0 : index
    %59 = vector.load %arg2[%c6, %c0_26, %c0_27] : memref<9x4x4xf32, #tpu.memory_space<vmem>>, vector<1x4x4xf32>
    %60 = vector.shape_cast %59 : vector<1x4x4xf32> to vector<4x4xf32>
    %61 = vector.extract_strided_slice %1 {offsets = [0, 19], sizes = [4, 381], strides = [1, 1]} : vector<4x400xf32> to vector<4x381xf32>
    %cst_28 = arith.constant 0.000000e+00 : f32
    %62 = vector.broadcast %cst_28 : f32 to vector<4x19xf32>
    %63 = tpu.concatenate %61, %62 in 1 : vector<4x381xf32>, vector<4x19xf32> -> vector<4x400xf32>
    %cst_29 = arith.constant dense<0.000000e+00> : vector<4x400xf32>
    %64 = tpu.matmul %60, %63, %cst_29 {dimension_numbers = #tpu.dot_dimension_numbers<[1], [0], [0], [1], [0, 0, 1, 1], [], []>} : vector<4x4xf32>, vector<4x400xf32>, vector<4x400xf32> -> vector<4x400xf32>
    %65 = arith.addf %58, %64 : vector<4x400xf32>
    %c7 = arith.constant 7 : index
    %c0_30 = arith.constant 0 : index
    %c0_31 = arith.constant 0 : index
    %66 = vector.load %arg2[%c7, %c0_30, %c0_31] : memref<9x4x4xf32, #tpu.memory_space<vmem>>, vector<1x4x4xf32>
    %67 = vector.shape_cast %66 : vector<1x4x4xf32> to vector<4x4xf32>
    %68 = vector.extract_strided_slice %1 {offsets = [0, 20], sizes = [4, 380], strides = [1, 1]} : vector<4x400xf32> to vector<4x380xf32>
    %cst_32 = arith.constant 0.000000e+00 : f32
    %69 = vector.broadcast %cst_32 : f32 to vector<4x20xf32>
    %70 = tpu.concatenate %68, %69 in 1 : vector<4x380xf32>, vector<4x20xf32> -> vector<4x400xf32>
    %cst_33 = arith.constant dense<0.000000e+00> : vector<4x400xf32>
    %71 = tpu.matmul %67, %70, %cst_33 {dimension_numbers = #tpu.dot_dimension_numbers<[1], [0], [0], [1], [0, 0, 1, 1], [], []>} : vector<4x4xf32>, vector<4x400xf32>, vector<4x400xf32> -> vector<4x400xf32>
    %72 = arith.addf %65, %71 : vector<4x400xf32>
    %c8 = arith.constant 8 : index
    %c0_34 = arith.constant 0 : index
    %c0_35 = arith.constant 0 : index
    %73 = vector.load %arg2[%c8, %c0_34, %c0_35] : memref<9x4x4xf32, #tpu.memory_space<vmem>>, vector<1x4x4xf32>
    %74 = vector.shape_cast %73 : vector<1x4x4xf32> to vector<4x4xf32>
    %75 = vector.extract_strided_slice %1 {offsets = [0, 21], sizes = [4, 379], strides = [1, 1]} : vector<4x400xf32> to vector<4x379xf32>
    %cst_36 = arith.constant 0.000000e+00 : f32
    %76 = vector.broadcast %cst_36 : f32 to vector<4x21xf32>
    %77 = tpu.concatenate %75, %76 in 1 : vector<4x379xf32>, vector<4x21xf32> -> vector<4x400xf32>
    %cst_37 = arith.constant dense<0.000000e+00> : vector<4x400xf32>
    %78 = tpu.matmul %74, %77, %cst_37 {dimension_numbers = #tpu.dot_dimension_numbers<[1], [0], [0], [1], [0, 0, 1, 1], [], []>} : vector<4x4xf32>, vector<4x400xf32>, vector<4x400xf32> -> vector<4x400xf32>
    %79 = arith.addf %72, %78 : vector<4x400xf32>
    %c0_38 = arith.constant 0 : index
    %c0_39 = arith.constant 0 : index
    %80 = vector.load %arg3[%c0_38, %c0_39] : memref<4x1xf32, #tpu.memory_space<vmem>>, vector<4x1xf32>
    %81 = vector.broadcast %80 : vector<4x1xf32> to vector<4x400xf32>
    %82 = arith.addf %79, %81 : vector<4x400xf32>
    %cst_40 = arith.constant 0.000000e+00 : f32
    %83 = vector.broadcast %cst_40 : f32 to vector<4x400xf32>
    %84 = arith.maximumf %82, %83 : vector<4x400xf32>
    %85 = vector.broadcast %12 : vector<1x400xf32> to vector<4x400xf32>
    %86 = arith.mulf %84, %85 : vector<4x400xf32>
    %cst_41 = arith.constant 0.000000e+00 : f32
    %87 = vector.shape_cast %18 : vector<1x400xi1> to vector<1x400xi1>
    %88 = vector.broadcast %87 : vector<1x400xi1> to vector<4x400xi1>
    %89 = vector.broadcast %cst_41 : f32 to vector<4x400xf32>
    %90 = arith.select %88, %86, %89 : vector<4x400xi1>, vector<4x400xf32>
    %cst_42 = arith.constant 0.000000e+00 : f32
    %91 = vector.broadcast %cst_42 : f32 to vector<4x400xf32>
    %c0_43 = arith.constant 0 : index
    %c0_44 = arith.constant 0 : index
    %c0_45 = arith.constant 0 : index
    %92 = vector.load %arg4[%c0_43, %c0_44, %c0_45] : memref<9x4x4xf32, #tpu.memory_space<vmem>>, vector<1x4x4xf32>
    %93 = vector.shape_cast %92 : vector<1x4x4xf32> to vector<4x4xf32>
    %cst_46 = arith.constant 0.000000e+00 : f32
    %94 = vector.broadcast %cst_46 : f32 to vector<4x21xf32>
    %95 = vector.extract_strided_slice %90 {offsets = [0, 0], sizes = [4, 379], strides = [1, 1]} : vector<4x400xf32> to vector<4x379xf32>
    %96 = tpu.concatenate %94, %95 in 1 : vector<4x21xf32>, vector<4x379xf32> -> vector<4x400xf32>
    %cst_47 = arith.constant dense<0.000000e+00> : vector<4x400xf32>
    %97 = tpu.matmul %93, %96, %cst_47 {dimension_numbers = #tpu.dot_dimension_numbers<[1], [0], [0], [1], [0, 0, 1, 1], [], []>} : vector<4x4xf32>, vector<4x400xf32>, vector<4x400xf32> -> vector<4x400xf32>
    %98 = arith.addf %91, %97 : vector<4x400xf32>
    %c1_48 = arith.constant 1 : index
    %c0_49 = arith.constant 0 : index
    %c0_50 = arith.constant 0 : index
    %99 = vector.load %arg4[%c1_48, %c0_49, %c0_50] : memref<9x4x4xf32, #tpu.memory_space<vmem>>, vector<1x4x4xf32>
    %100 = vector.shape_cast %99 : vector<1x4x4xf32> to vector<4x4xf32>
    %cst_51 = arith.constant 0.000000e+00 : f32
    %101 = vector.broadcast %cst_51 : f32 to vector<4x20xf32>
    %102 = vector.extract_strided_slice %90 {offsets = [0, 0], sizes = [4, 380], strides = [1, 1]} : vector<4x400xf32> to vector<4x380xf32>
    %103 = tpu.concatenate %101, %102 in 1 : vector<4x20xf32>, vector<4x380xf32> -> vector<4x400xf32>
    %cst_52 = arith.constant dense<0.000000e+00> : vector<4x400xf32>
    %104 = tpu.matmul %100, %103, %cst_52 {dimension_numbers = #tpu.dot_dimension_numbers<[1], [0], [0], [1], [0, 0, 1, 1], [], []>} : vector<4x4xf32>, vector<4x400xf32>, vector<4x400xf32> -> vector<4x400xf32>
    %105 = arith.addf %98, %104 : vector<4x400xf32>
    %c2_53 = arith.constant 2 : index
    %c0_54 = arith.constant 0 : index
    %c0_55 = arith.constant 0 : index
    %106 = vector.load %arg4[%c2_53, %c0_54, %c0_55] : memref<9x4x4xf32, #tpu.memory_space<vmem>>, vector<1x4x4xf32>
    %107 = vector.shape_cast %106 : vector<1x4x4xf32> to vector<4x4xf32>
    %cst_56 = arith.constant 0.000000e+00 : f32
    %108 = vector.broadcast %cst_56 : f32 to vector<4x19xf32>
    %109 = vector.extract_strided_slice %90 {offsets = [0, 0], sizes = [4, 381], strides = [1, 1]} : vector<4x400xf32> to vector<4x381xf32>
    %110 = tpu.concatenate %108, %109 in 1 : vector<4x19xf32>, vector<4x381xf32> -> vector<4x400xf32>
    %cst_57 = arith.constant dense<0.000000e+00> : vector<4x400xf32>
    %111 = tpu.matmul %107, %110, %cst_57 {dimension_numbers = #tpu.dot_dimension_numbers<[1], [0], [0], [1], [0, 0, 1, 1], [], []>} : vector<4x4xf32>, vector<4x400xf32>, vector<4x400xf32> -> vector<4x400xf32>
    %112 = arith.addf %105, %111 : vector<4x400xf32>
    %c3_58 = arith.constant 3 : index
    %c0_59 = arith.constant 0 : index
    %c0_60 = arith.constant 0 : index
    %113 = vector.load %arg4[%c3_58, %c0_59, %c0_60] : memref<9x4x4xf32, #tpu.memory_space<vmem>>, vector<1x4x4xf32>
    %114 = vector.shape_cast %113 : vector<1x4x4xf32> to vector<4x4xf32>
    %cst_61 = arith.constant 0.000000e+00 : f32
    %115 = vector.broadcast %cst_61 : f32 to vector<4x1xf32>
    %116 = vector.extract_strided_slice %90 {offsets = [0, 0], sizes = [4, 399], strides = [1, 1]} : vector<4x400xf32> to vector<4x399xf32>
    %117 = tpu.concatenate %115, %116 in 1 : vector<4x1xf32>, vector<4x399xf32> -> vector<4x400xf32>
    %cst_62 = arith.constant dense<0.000000e+00> : vector<4x400xf32>
    %118 = tpu.matmul %114, %117, %cst_62 {dimension_numbers = #tpu.dot_dimension_numbers<[1], [0], [0], [1], [0, 0, 1, 1], [], []>} : vector<4x4xf32>, vector<4x400xf32>, vector<4x400xf32> -> vector<4x400xf32>
    %119 = arith.addf %112, %118 : vector<4x400xf32>
    %c4_63 = arith.constant 4 : index
    %c0_64 = arith.constant 0 : index
    %c0_65 = arith.constant 0 : index
    %120 = vector.load %arg4[%c4_63, %c0_64, %c0_65] : memref<9x4x4xf32, #tpu.memory_space<vmem>>, vector<1x4x4xf32>
    %121 = vector.shape_cast %120 : vector<1x4x4xf32> to vector<4x4xf32>
    %cst_66 = arith.constant dense<0.000000e+00> : vector<4x400xf32>
    %122 = tpu.matmul %121, %90, %cst_66 {dimension_numbers = #tpu.dot_dimension_numbers<[1], [0], [0], [1], [0, 0, 1, 1], [], []>} : vector<4x4xf32>, vector<4x400xf32>, vector<4x400xf32> -> vector<4x400xf32>
    %123 = arith.addf %119, %122 : vector<4x400xf32>
    %c5_67 = arith.constant 5 : index
    %c0_68 = arith.constant 0 : index
    %c0_69 = arith.constant 0 : index
    %124 = vector.load %arg4[%c5_67, %c0_68, %c0_69] : memref<9x4x4xf32, #tpu.memory_space<vmem>>, vector<1x4x4xf32>
    %125 = vector.shape_cast %124 : vector<1x4x4xf32> to vector<4x4xf32>
    %126 = vector.extract_strided_slice %90 {offsets = [0, 1], sizes = [4, 399], strides = [1, 1]} : vector<4x400xf32> to vector<4x399xf32>
    %cst_70 = arith.constant 0.000000e+00 : f32
    %127 = vector.broadcast %cst_70 : f32 to vector<4x1xf32>
    %128 = tpu.concatenate %126, %127 in 1 : vector<4x399xf32>, vector<4x1xf32> -> vector<4x400xf32>
    %cst_71 = arith.constant dense<0.000000e+00> : vector<4x400xf32>
    %129 = tpu.matmul %125, %128, %cst_71 {dimension_numbers = #tpu.dot_dimension_numbers<[1], [0], [0], [1], [0, 0, 1, 1], [], []>} : vector<4x4xf32>, vector<4x400xf32>, vector<4x400xf32> -> vector<4x400xf32>
    %130 = arith.addf %123, %129 : vector<4x400xf32>
    %c6_72 = arith.constant 6 : index
    %c0_73 = arith.constant 0 : index
    %c0_74 = arith.constant 0 : index
    %131 = vector.load %arg4[%c6_72, %c0_73, %c0_74] : memref<9x4x4xf32, #tpu.memory_space<vmem>>, vector<1x4x4xf32>
    %132 = vector.shape_cast %131 : vector<1x4x4xf32> to vector<4x4xf32>
    %133 = vector.extract_strided_slice %90 {offsets = [0, 19], sizes = [4, 381], strides = [1, 1]} : vector<4x400xf32> to vector<4x381xf32>
    %cst_75 = arith.constant 0.000000e+00 : f32
    %134 = vector.broadcast %cst_75 : f32 to vector<4x19xf32>
    %135 = tpu.concatenate %133, %134 in 1 : vector<4x381xf32>, vector<4x19xf32> -> vector<4x400xf32>
    %cst_76 = arith.constant dense<0.000000e+00> : vector<4x400xf32>
    %136 = tpu.matmul %132, %135, %cst_76 {dimension_numbers = #tpu.dot_dimension_numbers<[1], [0], [0], [1], [0, 0, 1, 1], [], []>} : vector<4x4xf32>, vector<4x400xf32>, vector<4x400xf32> -> vector<4x400xf32>
    %137 = arith.addf %130, %136 : vector<4x400xf32>
    %c7_77 = arith.constant 7 : index
    %c0_78 = arith.constant 0 : index
    %c0_79 = arith.constant 0 : index
    %138 = vector.load %arg4[%c7_77, %c0_78, %c0_79] : memref<9x4x4xf32, #tpu.memory_space<vmem>>, vector<1x4x4xf32>
    %139 = vector.shape_cast %138 : vector<1x4x4xf32> to vector<4x4xf32>
    %140 = vector.extract_strided_slice %90 {offsets = [0, 20], sizes = [4, 380], strides = [1, 1]} : vector<4x400xf32> to vector<4x380xf32>
    %cst_80 = arith.constant 0.000000e+00 : f32
    %141 = vector.broadcast %cst_80 : f32 to vector<4x20xf32>
    %142 = tpu.concatenate %140, %141 in 1 : vector<4x380xf32>, vector<4x20xf32> -> vector<4x400xf32>
    %cst_81 = arith.constant dense<0.000000e+00> : vector<4x400xf32>
    %143 = tpu.matmul %139, %142, %cst_81 {dimension_numbers = #tpu.dot_dimension_numbers<[1], [0], [0], [1], [0, 0, 1, 1], [], []>} : vector<4x4xf32>, vector<4x400xf32>, vector<4x400xf32> -> vector<4x400xf32>
    %144 = arith.addf %137, %143 : vector<4x400xf32>
    %c8_82 = arith.constant 8 : index
    %c0_83 = arith.constant 0 : index
    %c0_84 = arith.constant 0 : index
    %145 = vector.load %arg4[%c8_82, %c0_83, %c0_84] : memref<9x4x4xf32, #tpu.memory_space<vmem>>, vector<1x4x4xf32>
    %146 = vector.shape_cast %145 : vector<1x4x4xf32> to vector<4x4xf32>
    %147 = vector.extract_strided_slice %90 {offsets = [0, 21], sizes = [4, 379], strides = [1, 1]} : vector<4x400xf32> to vector<4x379xf32>
    %cst_85 = arith.constant 0.000000e+00 : f32
    %148 = vector.broadcast %cst_85 : f32 to vector<4x21xf32>
    %149 = tpu.concatenate %147, %148 in 1 : vector<4x379xf32>, vector<4x21xf32> -> vector<4x400xf32>
    %cst_86 = arith.constant dense<0.000000e+00> : vector<4x400xf32>
    %150 = tpu.matmul %146, %149, %cst_86 {dimension_numbers = #tpu.dot_dimension_numbers<[1], [0], [0], [1], [0, 0, 1, 1], [], []>} : vector<4x4xf32>, vector<4x400xf32>, vector<4x400xf32> -> vector<4x400xf32>
    %151 = arith.addf %144, %150 : vector<4x400xf32>
    %c0_87 = arith.constant 0 : index
    %c0_88 = arith.constant 0 : index
    %152 = vector.load %arg5[%c0_87, %c0_88] : memref<4x1xf32, #tpu.memory_space<vmem>>, vector<4x1xf32>
    %153 = vector.broadcast %152 : vector<4x1xf32> to vector<4x400xf32>
    %154 = arith.addf %151, %153 : vector<4x400xf32>
    %155 = arith.addf %154, %1 : vector<4x400xf32>
    %c0_89 = arith.constant 0 : index
    %c0_90 = arith.constant 0 : index
    %c0_91 = arith.constant 0 : index
    %156 = vector.load %arg6[%c0_89, %c0_90, %c0_91] : memref<1x4x400xf32, #tpu.memory_space<vmem>>, vector<1x4x400xf32>
    %157 = vector.shape_cast %156 : vector<1x4x400xf32> to vector<4x400xf32>
    %158 = vector.shape_cast %155 : vector<4x400xf32> to vector<1x4x400xf32>
    tpu.vector_store %arg6[%c0_89, %c0_90, %c0_91], %158 {strides = array<i32>} : memref<1x4x400xf32, #tpu.memory_space<vmem>>, vector<1x4x400xf32>,
    return
  }
  func.func @transform_0(%arg0: i32) -> (i32, i32, i32) {
    %c0_i32 = arith.constant 0 : i32
    %c0_i32_0 = arith.constant 0 : i32
    %c0_i32_1 = arith.constant 0 : i32
    return %arg0, %c0_i32, %c0_i32_0 : i32, i32, i32
  }
  func.func @transform_1(%arg0: i32) -> (i32, i32, i32) {
    %c0_i32 = arith.constant 0 : i32
    %c0_i32_0 = arith.constant 0 : i32
    %c0_i32_1 = arith.constant 0 : i32
    %c0_i32_2 = arith.constant 0 : i32
    return %c0_i32, %c0_i32_0, %c0_i32_1 : i32, i32, i32
  }
  func.func @transform_2(%arg0: i32) -> (i32, i32) {
    %c0_i32 = arith.constant 0 : i32
    %c0_i32_0 = arith.constant 0 : i32
    %c0_i32_1 = arith.constant 0 : i32
    return %c0_i32, %c0_i32_0 : i32, i32
  }
  func.func @transform_3(%arg0: i32) -> (i32, i32, i32) {
    %c0_i32 = arith.constant 0 : i32
    %c0_i32_0 = arith.constant 0 : i32
    %c0_i32_1 = arith.constant 0 : i32
    %c0_i32_2 = arith.constant 0 : i32
    return %c0_i32, %c0_i32_0, %c0_i32_1 : i32, i32, i32
  }
  func.func @transform_4(%arg0: i32) -> (i32, i32) {
    %c0_i32 = arith.constant 0 : i32
    %c0_i32_0 = arith.constant 0 : i32
    %c0_i32_1 = arith.constant 0 : i32
    return %c0_i32, %c0_i32_0 : i32, i32
  }
  func.func @transform_5(%arg0: i32) -> (i32, i32, i32) {
    %c0_i32 = arith.constant 0 : i32
    %c0_i32_0 = arith.constant 0 : i32
    %c0_i32_1 = arith.constant 0 : i32
    return %arg0, %c0_i32, %c0_i32_0 : i32, i32, i32
  }
}

</mosaic_0001>

<llo_original>
// kernel: tpu_custom_call.1
$region0: #{tpu_custom_call.1}
  #allocation0 [shape = 'u32[]', space=smem, size = 0x4, offset = 0x4, fixed_abs, tag = 'smem constant byte address 0x4 - core index']
  #allocation1 [shape = 'u32[144,128]{1,0:T(1,128)}', space=vmem, size = 0x12000, scoped, tag = 'internal scratch']
  %s0 = inlined_call_operand.vmem [shape: f32[2,4,400], index: 0, kind: input, shape index: {}]
  %s1 = inlined_call_operand.vmem [shape: f32[9,4,4], index: 1, kind: input, shape index: {}]
  %s2 = inlined_call_operand.vmem [shape: f32[4,1], index: 2, kind: input, shape index: {}]
  %s3 = inlined_call_operand.vmem [shape: f32[9,4,4], index: 3, kind: input, shape index: {}]
  %s4 = inlined_call_operand.vmem [shape: f32[4,1], index: 4, kind: input, shape index: {}]
  %s5 = inlined_call_operand.hbm [shape: f32[2,4,400], index: 5, kind: output, shape index: {}]
  %s6 = sld [smem:[#allocation0]]
  $region53: #{tpu_custom_call.1} parent=0
    _
  %s8 = ssub.s32 1, %s6
  %s9 = scalar_select 0, %s8, %s6
  $region1: #{tpu_custom_call.1} parent=0
    #allocation2 [shape = 'u8[16384]{0}', space=vmem, size = 0x4000, scoped, tag = 'output window, operand 0']
    #allocation3 [shape = 's32[2]{0}', space=sflag, size = 0x8, scoped, tag = 'scoped memory for tpu_custom_call.1']
    %10 = vsyncpa [#allocation3], 0
    %s11 = scalar_lea.sflag [#allocation3], 1
    %12 = vsyncpa %s11, 0
    loop: start=0, step=1, limit=4
    $region2: #{tpu_custom_call.1} parent=1 // loop_pre_header
      _
    $region3: #{tpu_custom_call.1} parent=1 // loop_header
      %s14 = sphi 0, %s18
      %p15 = scmp.ge.s32.totalorder %s14, 4
      %s24 = sphi 0, %s26
      %s27 = sphi 0, %s24
      %s28 = sphi 0, %s27
      %s44 = sphi 0, %s28
      %s48 = sphi 0, %s48
      %s50 = sphi 0, %s48
      %s51 = sphi 0, %s50
      %s65 = sphi 0, %s51
      %s69 = sphi 0, %s69
      %s71 = sphi 0, %s69
      %s72 = sphi 0, %s71
      %s86 = sphi 0, %s72
      %s90 = sphi 0, %s90
      %s92 = sphi 0, %s90
      %s93 = sphi 0, %s92
      %s107 = sphi 0, %s93
      %s111 = sphi 0, %s111
      %s113 = sphi 0, %s111
      %s114 = sphi 0, %s113
      %s128 = sphi 0, %s114
      %s134 = sphi 0, %s136
      %s137 = sphi 0, %s134
      %s138 = sphi 0, %s137
      %s154 = sphi 0, %s138
    $region4: #{tpu_custom_call.1} parent=1 // loop_header_branch
      %17 = sbr.rel (%p15) target = $region8
    $region5: #{tpu_custom_call.1} parent=1 // loop_body
      %s19 = ssub.s32 %s14, 1
      %s20 = ssub.s32 %s14, 2
      %s21 = sadd.s32 %s14, 1
      %s22 = ssub.s32 %s14, %s21
      %p23 = scmp.eq.s32.totalorder %s22, 0
      %s25 = sadd.s32 %s24, 1
      %s26 = scalar_select %p23, %s24, %s25
      %p29 = pneg %p23
      %p30 = scmp.eq.s32.totalorder %s14, 1
      %p31 = por %p29, %p30
      %p32 = scmp.ne.s32.totalorder %s24, %s27
      %p33 = scmp.eq.s32.totalorder %s14, 0
      %p34 = por %p32, %p33
      %p35 = scmp.ne.s32.totalorder %s24, %s27
      %p36 = scmp.eq.s32.totalorder %s19, 1
      %p37 = por %p35, %p36
      %p38 = scmp.ne.s32.totalorder %s27, %s28
      %p39 = scmp.eq.s32.totalorder %s19, 0
      %p40 = por %p38, %p39
      %p41 = scmp.ne.s32.totalorder %s27, %s28
      %p42 = scmp.eq.s32.totalorder %s20, 1
      %p43 = por %p41, %p42
      %p45 = scmp.ne.s32.totalorder %s28, %s44
      %p46 = scmp.eq.s32.totalorder %s20, 0
      %p47 = por %p45, %p46
      %s49 = sadd.s32 %s48, 1
      %p52 = scmp.eq.s32.totalorder %s14, 1
      %p53 = scmp.ne.s32.totalorder %s48, %s50
      %p54 = scmp.eq.s32.totalorder %s14, 0
      %p55 = por %p53, %p54
      %p56 = scmp.ne.s32.totalorder %s48, %s50
      %p57 = scmp.eq.s32.totalorder %s19, 1
      %p58 = por %p56, %p57
      %p59 = scmp.ne.s32.totalorder %s50, %s51
      %p60 = scmp.eq.s32.totalorder %s19, 0
      %p61 = por %p59, %p60
      %p62 = scmp.ne.s32.totalorder %s50, %s51
      %p63 = scmp.eq.s32.totalorder %s20, 1
      %p64 = por %p62, %p63
      %p66 = scmp.ne.s32.totalorder %s51, %s65
      %p67 = scmp.eq.s32.totalorder %s20, 0
      %p68 = por %p66, %p67
      %s70 = sadd.s32 %s69, 1
      %p73 = scmp.eq.s32.totalorder %s14, 1
      %p74 = scmp.ne.s32.totalorder %s69, %s71
      %p75 = scmp.eq.s32.totalorder %s14, 0
      %p76 = por %p74, %p75
      %p77 = scmp.ne.s32.totalorder %s69, %s71
      %p78 = scmp.eq.s32.totalorder %s19, 1
      %p79 = por %p77, %p78
      %p80 = scmp.ne.s32.totalorder %s71, %s72
      %p81 = scmp.eq.s32.totalorder %s19, 0
      %p82 = por %p80, %p81
      %p83 = scmp.ne.s32.totalorder %s71, %s72
      %p84 = scmp.eq.s32.totalorder %s20, 1
      %p85 = por %p83, %p84
      %p87 = scmp.ne.s32.totalorder %s72, %s86
      %p88 = scmp.eq.s32.totalorder %s20, 0
      %p89 = por %p87, %p88
      %s91 = sadd.s32 %s90, 1
      %p94 = scmp.eq.s32.totalorder %s14, 1
      %p95 = scmp.ne.s32.totalorder %s90, %s92
      %p96 = scmp.eq.s32.totalorder %s14, 0
      %p97 = por %p95, %p96
      %p98 = scmp.ne.s32.totalorder %s90, %s92
      %p99 = scmp.eq.s32.totalorder %s19, 1
      %p100 = por %p98, %p99
      %p101 = scmp.ne.s32.totalorder %s92, %s93
      %p102 = scmp.eq.s32.totalorder %s19, 0
      %p103 = por %p101, %p102
      %p104 = scmp.ne.s32.totalorder %s92, %s93
      %p105 = scmp.eq.s32.totalorder %s20, 1
      %p106 = por %p104, %p105
      %p108 = scmp.ne.s32.totalorder %s93, %s107
      %p109 = scmp.eq.s32.totalorder %s20, 0
      %p110 = por %p108, %p109
      %s112 = sadd.s32 %s111, 1
      %p115 = scmp.eq.s32.totalorder %s14, 1
      %p116 = scmp.ne.s32.totalorder %s111, %s113
      %p117 = scmp.eq.s32.totalorder %s14, 0
      %p118 = por %p116, %p117
      %p119 = scmp.ne.s32.totalorder %s111, %s113
      %p120 = scmp.eq.s32.totalorder %s19, 1
      %p121 = por %p119, %p120
      %p122 = scmp.ne.s32.totalorder %s113, %s114
      %p123 = scmp.eq.s32.totalorder %s19, 0
      %p124 = por %p122, %p123
      %p125 = scmp.ne.s32.totalorder %s113, %s114
      %p126 = scmp.eq.s32.totalorder %s20, 1
      %p127 = por %p125, %p126
      %p129 = scmp.ne.s32.totalorder %s114, %s128
      %p130 = scmp.eq.s32.totalorder %s20, 0
      %p131 = por %p129, %p130
      %s132 = ssub.s32 %s14, %s21
      %p133 = scmp.eq.s32.totalorder %s132, 0
      %s135 = sadd.s32 %s134, 1
      %s136 = scalar_select %p133, %s134, %s135
      %p139 = pneg %p133
      %p140 = scmp.eq.s32.totalorder %s14, 1
      %p141 = por %p139, %p140
      %p142 = scmp.ne.s32.totalorder %s134, %s137
      %p143 = scmp.eq.s32.totalorder %s14, 0
      %p144 = por %p142, %p143
      %p145 = scmp.ne.s32.totalorder %s134, %s137
      %p146 = scmp.eq.s32.totalorder %s19, 1
      %p147 = por %p145, %p146
      %p148 = scmp.ne.s32.totalorder %s137, %s138
      %p149 = scmp.eq.s32.totalorder %s19, 0
      %p150 = por %p148, %p149
      %p151 = scmp.ne.s32.totalorder %s137, %s138
      %p152 = scmp.eq.s32.totalorder %s20, 1
      %p153 = por %p151, %p152
      %p155 = scmp.ne.s32.totalorder %s138, %s154
      %p156 = scmp.eq.s32.totalorder %s20, 0
      %p157 = por %p155, %p156
      %p158 = scmp.le.s32.totalorder 1, %s14
      %p159 = scmp.lt.s32.totalorder %s14, 3
      %p160 = pnand %p158, %p159
      %p161 = pneg %p160
      // Predicated region
      $region9: #{tpu_custom_call.1} parent=5 // pred_check
        _
      $region10: #{tpu_custom_call.1} parent=5 // pred_check_branch
        %163 = sbr.rel (%p160) target = $region12
      $region11: #{tpu_custom_call.1} parent=5 // pred_region
        %s164 = ssub.s32 %s14, 1
        // Predicated region
        $region13: #{tpu_custom_call.1} parent=11 // pred_check
          %p165 = pneg %p61
        $region14: #{tpu_custom_call.1} parent=11 // pred_check_branch
          %167 = sbr.rel (%p165) target = $region16
        $region15: #{tpu_custom_call.1} parent=11 // pred_region
          _
        $region16: #{tpu_custom_call.1} parent=11 // pred_fallthru
          _
        // Predicated region
        $region17: #{tpu_custom_call.1} parent=11 // pred_check
          %p168 = pneg %p82
        $region18: #{tpu_custom_call.1} parent=11 // pred_check_branch
          %170 = sbr.rel (%p168) target = $region20
        $region19: #{tpu_custom_call.1} parent=11 // pred_region
          _
        $region20: #{tpu_custom_call.1} parent=11 // pred_fallthru
          _
        // Predicated region
        $region21: #{tpu_custom_call.1} parent=11 // pred_check
          %p171 = pneg %p103
        $region22: #{tpu_custom_call.1} parent=11 // pred_check_branch
          %173 = sbr.rel (%p171) target = $region24
        $region23: #{tpu_custom_call.1} parent=11 // pred_region
          _
        $region24: #{tpu_custom_call.1} parent=11 // pred_fallthru
          _
        // Predicated region
        $region25: #{tpu_custom_call.1} parent=11 // pred_check
          %p174 = pneg %p124
        $region26: #{tpu_custom_call.1} parent=11 // pred_check_branch
          %176 = sbr.rel (%p174) target = $region28
        $region27: #{tpu_custom_call.1} parent=11 // pred_region
          _
        $region28: #{tpu_custom_call.1} parent=11 // pred_fallthru
          _
      $region12: #{tpu_custom_call.1} parent=5 // pred_fallthru
        _
      %p177 = scmp.lt.s32.totalorder %s14, 2
      // Predicated region
      $region29: #{tpu_custom_call.1} parent=5 // pred_check
        %p178 = pneg %p177
      $region30: #{tpu_custom_call.1} parent=5 // pred_check_branch
        %180 = sbr.rel (%p178) target = $region32
      $region31: #{tpu_custom_call.1} parent=5 // pred_region
        // Predicated region
        $region33: #{tpu_custom_call.1} parent=31 // pred_check
          %p181 = pneg %p34
        $region34: #{tpu_custom_call.1} parent=31 // pred_check_branch
          %183 = sbr.rel (%p181) target = $region36
        $region35: #{tpu_custom_call.1} parent=31 // pred_region
          %p184 = scmp.lt.s32.totalorder %s14, 1
          %s185 = scalar_select %p184, %s14, 1
          %s186 = smul.addr %s185, 4
          %s187 = smul.addr %s186, 4
          %s188 = scalar_lea.vmem %s0, %s187
        $region36: #{tpu_custom_call.1} parent=31 // pred_fallthru
          _
      $region32: #{tpu_custom_call.1} parent=5 // pred_fallthru
        _
      %p189 = scmp.le.s32.totalorder 1, %s14
      %p190 = scmp.lt.s32.totalorder %s14, 3
      %p191 = pnand %p189, %p190
      %p192 = pneg %p191
      // Predicated region
      $region37: #{tpu_custom_call.1} parent=5 // pred_check
        _
      $region38: #{tpu_custom_call.1} parent=5 // pred_check_branch
        %194 = sbr.rel (%p191) target = $region40
      $region39: #{tpu_custom_call.1} parent=5 // pred_region
        %s195 = ssub.s32 %s14, 1
        %p196 = scmp.lt.s32.totalorder %s19, 1
        %s197 = scalar_select %p196, %s19, 1
        %s198 = smul.addr %s197, 4
        %s199 = smul.addr %s198, 4
        %s200 = scalar_lea.vmem %s0, %s199
        %p201 = pneg %p40
        %p202 = pneg %p37
        %p203 = pneg %p61
        %p204 = pneg %p58
        %p205 = pneg %p82
        %p206 = pneg %p79
        %p207 = pneg %p103
        %p208 = pneg %p100
        %p209 = pneg %p124
        %p210 = pneg %p121
        %p211 = pneg %p150
        %p212 = pneg %p147
        %s213 = sand.u32 %s137, 1
        %s214 = scalar_lea.sflag [#allocation3], %s213
        %s215 = sand.u32 %s137, 1
        %s216 = smul.addr %s215, 16
        %s217 = scalar_lea.vmem [#allocation2], %s216
        %p218 = scmp.lt.s32.totalorder %s19, 1
        %s219 = scalar_select %p218, %s19, 1
        %s220 = smul.addr %s219, 4
        %s221 = smul.addr %s220, 4
        %s222 = scalar_lea.vmem %s0, %s221
        %v223 = vld [vmem:[%s222] sm:$0xff]
        %v224 = vld [vmem:[%s222 + $0x8] sm:$0xff]
        %v225 = vlaneseq
        %v226 = vand.u32 %v225, 127
        %vm227 = vcmp.ge.s32.totalorder %v226, 2
        %vm228 = vcmp.lt.s32.totalorder %v226, 18
        %vm229 = vmand %vm227, %vm228
        %v230 = vsel %vm229, 1, 0
        %v231 = vcvt.s32.f32 %v230
        %233 = vrot.lane.b32.xlu0 %v231, 20
        %v234 = vpop.permute.xlu0 %233
        %236 = vrot.lane.b32.xlu0 %v231, 40
        %v237 = vpop.permute.xlu0 %236
        %239 = vrot.lane.b32.xlu0 %v231, 60
        %v240 = vpop.permute.xlu0 %239
        %242 = vrot.lane.b32.xlu0 %v231, 80
        %v243 = vpop.permute.xlu0 %242
        %245 = vrot.lane.b32.xlu0 %v231, 100
        %v246 = vpop.permute.xlu0 %245
        %248 = vrot.lane.b32.xlu0 %v231, 120
        %v249 = vpop.permute.xlu0 %248
        %251 = vrot.lane.b32.xlu0 %v231, 12
        %v252 = vpop.permute.xlu0 %251
        %254 = vrot.lane.b32.xlu0 %v231, 32
        %v255 = vpop.permute.xlu0 %254
        %257 = vrot.lane.b32.xlu0 %v231, 52
        %v258 = vpop.permute.xlu0 %257
        %260 = vrot.lane.b32.xlu0 %v231, 72
        %v261 = vpop.permute.xlu0 %260
        %263 = vrot.lane.b32.xlu0 %v231, 92
        %v264 = vpop.permute.xlu0 %263
        %266 = vrot.lane.b32.xlu0 %v231, 112
        %v267 = vpop.permute.xlu0 %266
        %269 = vrot.lane.b32.xlu0 %v231, 4
        %v270 = vpop.permute.xlu0 %269
        %272 = vrot.lane.b32.xlu0 %v231, 24
        %v273 = vpop.permute.xlu0 %272
        %275 = vrot.lane.b32.xlu0 %v231, 44
        %v276 = vpop.permute.xlu0 %275
        %vm278 = vcmask 162816
        %v279 = vsel %vm278, %v231, %v234
        %vm280 = vcmask 326656
        %v281 = vsel %vm280, %v279, %v237
        %vm282 = vcmask 490496
        %v283 = vsel %vm282, %v281, %v240
        %vm284 = vcmask 654336
        %v285 = vsel %vm284, %v283, %v243
        %vm286 = vcmask 818176
        %v287 = vsel %vm286, %v285, %v246
        %vm288 = vcmask 982016
        %v289 = vsel %vm288, %v287, %v249
        %vm290 = vcmask 97280
        %v291 = vsel %vm290, %v249, %v252
        %vm292 = vcmask 261120
        %v293 = vsel %vm292, %v291, %v255
        %vm294 = vcmask 424960
        %v295 = vsel %vm294, %v293, %v258
        %vm296 = vcmask 588800
        %v297 = vsel %vm296, %v295, %v261
        %vm298 = vcmask 752640
        %v299 = vsel %vm298, %v297, %v264
        %vm300 = vcmask 916480
        %v301 = vsel %vm300, %v299, %v267
        %vm302 = vcmask 31744
        %v303 = vsel %vm302, %v267, %v270
        %vm304 = vcmask 195584
        %v305 = vsel %vm304, %v303, %v273
        %vm306 = vcmask 359424
        %v307 = vsel %vm306, %v305, %v276
        %309 = vrot.lane.b32.xlu0 %v283, 64
        %v310 = vpop.permute.xlu0 %309
        %vm312 = vcmask 523264
        %v313 = vsel %vm312, %v307, %v310
        %v314 = vadd.s32 %v226, 128
        %v315 = vadd.s32 %v226, 256
        %v316 = vadd.s32 %v226, 384
        %vm317 = vcmp.ge.s32.totalorder %v226, 40
        %vm318 = vcmp.ge.s32.totalorder %v314, 40
        %vm319 = vcmp.ge.s32.totalorder %v315, 40
        %vm320 = vcmp.ge.s32.totalorder %v316, 40
        %vm321 = vcmp.lt.s32.totalorder %v226, 360
        %vm322 = vcmp.lt.s32.totalorder %v314, 360
        %vm323 = vcmp.lt.s32.totalorder %v315, 360
        %vm324 = vcmp.lt.s32.totalorder %v316, 360
        %vm325 = vmand %vm317, %vm321
        %vm326 = vmand %vm318, %vm322
        %vm327 = vmand %vm319, %vm323
        %vm328 = vmand %vm320, %vm324
        %v329 = vld [vmem:[%s1] sm:$0xf]
        %v332 = vcombine.high %v223, %v223
        %333 = vrot.lane.b32.xlu0 %v223, 21
        %v334 = vpop.permute.xlu0 %333
        %335 = vrot.lane.b32.xlu0 %v332, 21
        %v336 = vpop.permute.xlu0 %335
        %337 = vrot.lane.b32.xlu0 %v224, 21
        %v338 = vpop.permute.xlu0 %337
        %vm339 = vcmask 171008
        %v340 = vsel %vm339, %v334, %v336
        %v341 = vsel %vm339, %v336, %v338
        %v343 = vsel %vm339, 0.0, %v334
        %s344 = scalar_lea.vmem %s1, 4
        %v345 = vld [vmem:[%s344] sm:$0xf]
        %346 = vrot.lane.b32.xlu0 %v223, 20
        %v347 = vpop.permute.xlu0 %346
        %348 = vrot.lane.b32.xlu0 %v332, 20
        %v349 = vpop.permute.xlu0 %348
        %350 = vrot.lane.b32.xlu0 %v224, 20
        %v351 = vpop.permute.xlu0 %350
        %v352 = vsel %vm278, %v347, %v349
        %v353 = vsel %vm278, %v349, %v351
        %v355 = vsel %vm278, 0.0, %v347
        %v357 = vsel %vm302, %v345, 0
        %vm359 = vcmask 1043456
        %v361 = vsel %vm359, %v355, 0
        %v363 = vsel %vm359, %v352, 0
        %v365 = vsel %vm359, %v353, 0
        %v367 = vsel %vm359, %v351, 0
        %369 = vmatprep.subr.mxu0 %v363
        %370 = vmatpush1.msra.mxu0 %v361
        %371 = vmatprep.subr.mxu0 0.0
        %372 = vmatpush1.msra.mxu0 0.0
        %373 = vmatprep.subr.mxu0 0.0
        %374 = vmatpush1.msra.mxu0 0.0
        %375 = vmatprep.subr.mxu0 0.0
        %376 = vmatpush1.msra.mxu0 0.0
        %377 = vmatprep.subr.mxu0 0.0
        %378 = vmatpush1.msra.mxu0 0.0
        %379 = vmatprep.subr.mxu0 0.0
        %380 = vmatpush1.msra.mxu0 0.0
        %381 = vmatprep.subr.mxu0 0.0
        %382 = vmatpush1.msra.mxu0 0.0
        %383 = vmatprep.subr.mxu0 0.0
        %384 = vmatpush1.msra.mxu0 0.0
        %385 = vmatprep.subr.mxu0 0.0
        %386 = vmatpush1.msra.mxu0 0.0
        %387 = vmatprep.subr.mxu0 0.0
        %388 = vmatpush1.msra.mxu0 0.0
        %389 = vmatprep.subr.mxu0 0.0
        %390 = vmatpush1.msra.mxu0 0.0
        %391 = vmatprep.subr.mxu0 0.0
        %392 = vmatpush1.msra.mxu0 0.0
        %393 = vmatprep.subr.mxu0 0.0
        %394 = vmatpush1.msra.mxu0 0.0
        %395 = vmatprep.subr.mxu0 0.0
        %396 = vmatpush1.msra.mxu0 0.0
        %397 = vmatprep.subr.mxu0 0.0
        %398 = vmatpush1.msra.mxu0 0.0
        %399 = vmatprep.subr.mxu0 0.0
        %400 = vmatpush1.msra.mxu0 0.0
        %401 = vmatprep.subr.mxu0 0.0
        %402 = vmatpush1.msra.mxu0 0.0
        %403 = vmatprep.subr.mxu0 0.0
        %404 = vmatpush1.msra.mxu0 0.0
        %405 = vmatprep.subr.mxu0 0.0
        %406 = vmatpush1.msra.mxu0 0.0
        %407 = vmatprep.subr.mxu0 0.0
        %408 = vmatpush1.msra.mxu0 0.0
        %409 = vmatprep.subr.mxu0 0.0
        %410 = vmatpush1.msra.mxu0 0.0
        %411 = vmatprep.subr.mxu0 0.0
        %412 = vmatpush1.msra.mxu0 0.0
        %413 = vmatprep.subr.mxu0 0.0
        %414 = vmatpush1.msra.mxu0 0.0
        %415 = vmatprep.subr.mxu0 0.0
        %416 = vmatpush1.msra.mxu0 0.0
        %417 = vmatprep.subr.mxu0 0.0
        %418 = vmatpush1.msra.mxu0 0.0
        %419 = vmatprep.subr.mxu0 0.0
        %420 = vmatpush1.msra.mxu0 0.0
        %421 = vmatprep.subr.mxu0 0.0
        %422 = vmatpush1.msra.mxu0 0.0
        %423 = vmatprep.subr.mxu0 0.0
        %424 = vmatpush1.msra.mxu0 0.0
        %425 = vmatprep.subr.mxu0 0.0
        %426 = vmatpush1.msra.mxu0 0.0
        %427 = vmatprep.subr.mxu0 0.0
        %428 = vmatpush1.msra.mxu0 0.0
        %429 = vmatprep.subr.mxu0 0.0
        %430 = vmatpush1.msra.mxu0 0.0
        %431 = vmatprep.subr.mxu0 0.0
        %432 = vmatpush1.msra.mxu0 0.0
        %433 = vmatprep.mubr.f32.mxu0 0.0
        %434 = vmatmul.mubr.f32.gmra.mrb[0].mxu0 %v357
        %v435 = vpop.f32.mrb[0].mxu0
        %v436 = vadd.f32 0.0, %v435
        %v437 = vpop.f32.mrb[0].mxu0
        %v438 = vadd.f32 0.0, %v437
        %439 = vdwg.mxu0
        %440 = vmatprep.subr.mxu0 %v367
        %441 = vmatpush1.msra.mxu0 %v365
        %442 = vmatprep.subr.mxu0 0.0
        %443 = vmatpush1.msra.mxu0 0.0
        %444 = vmatprep.subr.mxu0 0.0
        %445 = vmatpush1.msra.mxu0 0.0
        %446 = vmatprep.subr.mxu0 0.0
        %447 = vmatpush1.msra.mxu0 0.0
        %448 = vmatprep.subr.mxu0 0.0
        %449 = vmatpush1.msra.mxu0 0.0
        %450 = vmatprep.subr.mxu0 0.0
        %451 = vmatpush1.msra.mxu0 0.0
        %452 = vmatprep.subr.mxu0 0.0
        %453 = vmatpush1.msra.mxu0 0.0
        %454 = vmatprep.subr.mxu0 0.0
        %455 = vmatpush1.msra.mxu0 0.0
        %456 = vmatprep.subr.mxu0 0.0
        %457 = vmatpush1.msra.mxu0 0.0
        %458 = vmatprep.subr.mxu0 0.0
        %459 = vmatpush1.msra.mxu0 0.0
        %460 = vmatprep.subr.mxu0 0.0
        %461 = vmatpush1.msra.mxu0 0.0
        %462 = vmatprep.subr.mxu0 0.0
        %463 = vmatpush1.msra.mxu0 0.0
        %464 = vmatprep.subr.mxu0 0.0
        %465 = vmatpush1.msra.mxu0 0.0
        %466 = vmatprep.subr.mxu0 0.0
        %467 = vmatpush1.msra.mxu0 0.0
        %468 = vmatprep.subr.mxu0 0.0
        %469 = vmatpush1.msra.mxu0 0.0
        %470 = vmatprep.subr.mxu0 0.0
        %471 = vmatpush1.msra.mxu0 0.0
        %472 = vmatprep.subr.mxu0 0.0
        %473 = vmatpush1.msra.mxu0 0.0
        %474 = vmatprep.subr.mxu0 0.0
        %475 = vmatpush1.msra.mxu0 0.0
        %476 = vmatprep.subr.mxu0 0.0
        %477 = vmatpush1.msra.mxu0 0.0
        %478 = vmatprep.subr.mxu0 0.0
        %479 = vmatpush1.msra.mxu0 0.0
        %480 = vmatprep.subr.mxu0 0.0
        %481 = vmatpush1.msra.mxu0 0.0
        %482 = vmatprep.subr.mxu0 0.0
        %483 = vmatpush1.msra.mxu0 0.0
        %484 = vmatprep.subr.mxu0 0.0
        %485 = vmatpush1.msra.mxu0 0.0
        %486 = vmatprep.subr.mxu0 0.0
        %487 = vmatpush1.msra.mxu0 0.0
        %488 = vmatprep.subr.mxu0 0.0
        %489 = vmatpush1.msra.mxu0 0.0
        %490 = vmatprep.subr.mxu0 0.0
        %491 = vmatpush1.msra.mxu0 0.0
        %492 = vmatprep.subr.mxu0 0.0
        %493 = vmatpush1.msra.mxu0 0.0
        %494 = vmatprep.subr.mxu0 0.0
        %495 = vmatpush1.msra.mxu0 0.0
        %496 = vmatprep.subr.mxu0 0.0
        %497 = vmatpush1.msra.mxu0 0.0
        %498 = vmatprep.subr.mxu0 0.0
        %499 = vmatpush1.msra.mxu0 0.0
        %500 = vmatprep.subr.mxu0 0.0
        %501 = vmatpush1.msra.mxu0 0.0
        %502 = vmatprep.subr.mxu0 0.0
        %503 = vmatpush1.msra.mxu0 0.0
        %504 = vmatprep.mubr.f32.mxu0 0.0
        %505 = vmatmul.mubr.f32.gmra.mrb[0].mxu0 %v357
        %v506 = vpop.f32.mrb[0].mxu0
        %v507 = vadd.f32 0.0, %v506
        %v508 = vpop.f32.mrb[0].mxu0
        %v509 = vadd.f32 0.0, %v508
        %510 = vdwg.mxu0
        %v512 = vsel %vm302, %v329, 0
        %v515 = vsel %vm359, %v343, 0
        %v517 = vsel %vm359, %v340, 0
        %v519 = vsel %vm359, %v341, 0
        %v521 = vsel %vm359, %v338, 0
        %523 = vmatprep.subr.mxu0 %v517
        %524 = vmatpush1.msra.mxu0 %v515
        %525 = vmatprep.subr.mxu0 0.0
        %526 = vmatpush1.msra.mxu0 0.0
        %527 = vmatprep.subr.mxu0 0.0
        %528 = vmatpush1.msra.mxu0 0.0
        %529 = vmatprep.subr.mxu0 0.0
        %530 = vmatpush1.msra.mxu0 0.0
        %531 = vmatprep.subr.mxu0 0.0
        %532 = vmatpush1.msra.mxu0 0.0
        %533 = vmatprep.subr.mxu0 0.0
        %534 = vmatpush1.msra.mxu0 0.0
        %535 = vmatprep.subr.mxu0 0.0
        %536 = vmatpush1.msra.mxu0 0.0
        %537 = vmatprep.subr.mxu0 0.0
        %538 = vmatpush1.msra.mxu0 0.0
        %539 = vmatprep.subr.mxu0 0.0
        %540 = vmatpush1.msra.mxu0 0.0
        %541 = vmatprep.subr.mxu0 0.0
        %542 = vmatpush1.msra.mxu0 0.0
        %543 = vmatprep.subr.mxu0 0.0
        %544 = vmatpush1.msra.mxu0 0.0
        %545 = vmatprep.subr.mxu0 0.0
        %546 = vmatpush1.msra.mxu0 0.0
        %547 = vmatprep.subr.mxu0 0.0
        %548 = vmatpush1.msra.mxu0 0.0
        %549 = vmatprep.subr.mxu0 0.0
        %550 = vmatpush1.msra.mxu0 0.0
        %551 = vmatprep.subr.mxu0 0.0
        %552 = vmatpush1.msra.mxu0 0.0
        %553 = vmatprep.subr.mxu0 0.0
        %554 = vmatpush1.msra.mxu0 0.0
        %555 = vmatprep.subr.mxu0 0.0
        %556 = vmatpush1.msra.mxu0 0.0
        %557 = vmatprep.subr.mxu0 0.0
        %558 = vmatpush1.msra.mxu0 0.0
        %559 = vmatprep.subr.mxu0 0.0
        %560 = vmatpush1.msra.mxu0 0.0
        %561 = vmatprep.subr.mxu0 0.0
        %562 = vmatpush1.msra.mxu0 0.0
        %563 = vmatprep.subr.mxu0 0.0
        %564 = vmatpush1.msra.mxu0 0.0
        %565 = vmatprep.subr.mxu0 0.0
        %566 = vmatpush1.msra.mxu0 0.0
        %567 = vmatprep.subr.mxu0 0.0
        %568 = vmatpush1.msra.mxu0 0.0
        %569 = vmatprep.subr.mxu0 0.0
        %570 = vmatpush1.msra.mxu0 0.0
        %571 = vmatprep.subr.mxu0 0.0
        %572 = vmatpush1.msra.mxu0 0.0
        %573 = vmatprep.subr.mxu0 0.0
        %574 = vmatpush1.msra.mxu0 0.0
        %575 = vmatprep.subr.mxu0 0.0
        %576 = vmatpush1.msra.mxu0 0.0
        %577 = vmatprep.subr.mxu0 0.0
        %578 = vmatpush1.msra.mxu0 0.0
        %579 = vmatprep.subr.mxu0 0.0
        %580 = vmatpush1.msra.mxu0 0.0
        %581 = vmatprep.subr.mxu0 0.0
        %582 = vmatpush1.msra.mxu0 0.0
        %583 = vmatprep.subr.mxu0 0.0
        %584 = vmatpush1.msra.mxu0 0.0
        %585 = vmatprep.subr.mxu0 0.0
        %586 = vmatpush1.msra.mxu0 0.0
        %587 = vmatprep.mubr.f32.mxu0 0.0
        %588 = vmatmul.mubr.f32.gmra.mrb[0].mxu0 %v512
        %v589 = vpop.f32.mrb[0].mxu0
        %v590 = vadd.f32 %v436, %v589
        %v591 = vpop.f32.mrb[0].mxu0
        %v592 = vadd.f32 %v438, %v591
        %593 = vdwg.mxu0
        %594 = vmatprep.subr.mxu0 %v521
        %595 = vmatpush1.msra.mxu0 %v519
        %596 = vmatprep.subr.mxu0 0.0
        %597 = vmatpush1.msra.mxu0 0.0
        %598 = vmatprep.subr.mxu0 0.0
        %599 = vmatpush1.msra.mxu0 0.0
        %600 = vmatprep.subr.mxu0 0.0
        %601 = vmatpush1.msra.mxu0 0.0
        %602 = vmatprep.subr.mxu0 0.0
        %603 = vmatpush1.msra.mxu0 0.0
        %604 = vmatprep.subr.mxu0 0.0
        %605 = vmatpush1.msra.mxu0 0.0
        %606 = vmatprep.subr.mxu0 0.0
        %607 = vmatpush1.msra.mxu0 0.0
        %608 = vmatprep.subr.mxu0 0.0
        %609 = vmatpush1.msra.mxu0 0.0
        %610 = vmatprep.subr.mxu0 0.0
        %611 = vmatpush1.msra.mxu0 0.0
        %612 = vmatprep.subr.mxu0 0.0
        %613 = vmatpush1.msra.mxu0 0.0
        %614 = vmatprep.subr.mxu0 0.0
        %615 = vmatpush1.msra.mxu0 0.0
        %616 = vmatprep.subr.mxu0 0.0
        %617 = vmatpush1.msra.mxu0 0.0
        %618 = vmatprep.subr.mxu0 0.0
        %619 = vmatpush1.msra.mxu0 0.0
        %620 = vmatprep.subr.mxu0 0.0
        %621 = vmatpush1.msra.mxu0 0.0
        %622 = vmatprep.subr.mxu0 0.0
        %623 = vmatpush1.msra.mxu0 0.0
        %624 = vmatprep.subr.mxu0 0.0
        %625 = vmatpush1.msra.mxu0 0.0
        %626 = vmatprep.subr.mxu0 0.0
        %627 = vmatpush1.msra.mxu0 0.0
        %628 = vmatprep.subr.mxu0 0.0
        %629 = vmatpush1.msra.mxu0 0.0
        %630 = vmatprep.subr.mxu0 0.0
        %631 = vmatpush1.msra.mxu0 0.0
        %632 = vmatprep.subr.mxu0 0.0
        %633 = vmatpush1.msra.mxu0 0.0
        %634 = vmatprep.subr.mxu0 0.0
        %635 = vmatpush1.msra.mxu0 0.0
        %636 = vmatprep.subr.mxu0 0.0
        %637 = vmatpush1.msra.mxu0 0.0
        %638 = vmatprep.subr.mxu0 0.0
        %639 = vmatpush1.msra.mxu0 0.0
        %640 = vmatprep.subr.mxu0 0.0
        %641 = vmatpush1.msra.mxu0 0.0
        %642 = vmatprep.subr.mxu0 0.0
        %643 = vmatpush1.msra.mxu0 0.0
        %644 = vmatprep.subr.mxu0 0.0
        %645 = vmatpush1.msra.mxu0 0.0
        %646 = vmatprep.subr.mxu0 0.0
        %647 = vmatpush1.msra.mxu0 0.0
        %648 = vmatprep.subr.mxu0 0.0
        %649 = vmatpush1.msra.mxu0 0.0
        %650 = vmatprep.subr.mxu0 0.0
        %651 = vmatpush1.msra.mxu0 0.0
        %652 = vmatprep.subr.mxu0 0.0
        %653 = vmatpush1.msra.mxu0 0.0
        %654 = vmatprep.subr.mxu0 0.0
        %655 = vmatpush1.msra.mxu0 0.0
        %656 = vmatprep.subr.mxu0 0.0
        %657 = vmatpush1.msra.mxu0 0.0
        %658 = vmatprep.mubr.f32.mxu0 0.0
        %659 = vmatmul.mubr.f32.gmra.mrb[0].mxu0 %v512
        %v660 = vpop.f32.mrb[0].mxu0
        %v661 = vadd.f32 %v507, %v660
        %v662 = vpop.f32.mrb[0].mxu0
        %v663 = vadd.f32 %v509, %v662
        %664 = vdwg.mxu0
        %s665 = scalar_lea.vmem %s1, 8
        %v666 = vld [vmem:[%s665] sm:$0xf]
        %667 = vrot.lane.b32.xlu0 %v223, 19
        %v668 = vpop.permute.xlu0 %667
        %669 = vrot.lane.b32.xlu0 %v332, 19
        %v670 = vpop.permute.xlu0 %669
        %671 = vrot.lane.b32.xlu0 %v224, 19
        %v672 = vpop.permute.xlu0 %671
        %vm673 = vcmask 154624
        %v674 = vsel %vm673, %v668, %v670
        %v675 = vsel %vm673, %v670, %v672
        %v677 = vsel %vm673, 0.0, %v668
        %v679 = vsel %vm302, %v666, 0
        %v682 = vsel %vm359, %v677, 0
        %v684 = vsel %vm359, %v674, 0
        %v686 = vsel %vm359, %v675, 0
        %v688 = vsel %vm359, %v672, 0
        %690 = vmatprep.subr.mxu0 %v684
        %691 = vmatpush1.msra.mxu0 %v682
        %692 = vmatprep.subr.mxu0 0.0
        %693 = vmatpush1.msra.mxu0 0.0
        %694 = vmatprep.subr.mxu0 0.0
        %695 = vmatpush1.msra.mxu0 0.0
        %696 = vmatprep.subr.mxu0 0.0
        %697 = vmatpush1.msra.mxu0 0.0
        %698 = vmatprep.subr.mxu0 0.0
        %699 = vmatpush1.msra.mxu0 0.0
        %700 = vmatprep.subr.mxu0 0.0
        %701 = vmatpush1.msra.mxu0 0.0
        %702 = vmatprep.subr.mxu0 0.0
        %703 = vmatpush1.msra.mxu0 0.0
        %704 = vmatprep.subr.mxu0 0.0
        %705 = vmatpush1.msra.mxu0 0.0
        %706 = vmatprep.subr.mxu0 0.0
        %707 = vmatpush1.msra.mxu0 0.0
        %708 = vmatprep.subr.mxu0 0.0
        %709 = vmatpush1.msra.mxu0 0.0
        %710 = vmatprep.subr.mxu0 0.0
        %711 = vmatpush1.msra.mxu0 0.0
        %712 = vmatprep.subr.mxu0 0.0
        %713 = vmatpush1.msra.mxu0 0.0
        %714 = vmatprep.subr.mxu0 0.0
        %715 = vmatpush1.msra.mxu0 0.0
        %716 = vmatprep.subr.mxu0 0.0
        %717 = vmatpush1.msra.mxu0 0.0
        %718 = vmatprep.subr.mxu0 0.0
        %719 = vmatpush1.msra.mxu0 0.0
        %720 = vmatprep.subr.mxu0 0.0
        %721 = vmatpush1.msra.mxu0 0.0
        %722 = vmatprep.subr.mxu0 0.0
        %723 = vmatpush1.msra.mxu0 0.0
        %724 = vmatprep.subr.mxu0 0.0
        %725 = vmatpush1.msra.mxu0 0.0
        %726 = vmatprep.subr.mxu0 0.0
        %727 = vmatpush1.msra.mxu0 0.0
        %728 = vmatprep.subr.mxu0 0.0
        %729 = vmatpush1.msra.mxu0 0.0
        %730 = vmatprep.subr.mxu0 0.0
        %731 = vmatpush1.msra.mxu0 0.0
        %732 = vmatprep.subr.mxu0 0.0
        %733 = vmatpush1.msra.mxu0 0.0
        %734 = vmatprep.subr.mxu0 0.0
        %735 = vmatpush1.msra.mxu0 0.0
        %736 = vmatprep.subr.mxu0 0.0
        %737 = vmatpush1.msra.mxu0 0.0
        %738 = vmatprep.subr.mxu0 0.0
        %739 = vmatpush1.msra.mxu0 0.0
        %740 = vmatprep.subr.mxu0 0.0
        %741 = vmatpush1.msra.mxu0 0.0
        %742 = vmatprep.subr.mxu0 0.0
        %743 = vmatpush1.msra.mxu0 0.0
        %744 = vmatprep.subr.mxu0 0.0
        %745 = vmatpush1.msra.mxu0 0.0
        %746 = vmatprep.subr.mxu0 0.0
        %747 = vmatpush1.msra.mxu0 0.0
        %748 = vmatprep.subr.mxu0 0.0
        %749 = vmatpush1.msra.mxu0 0.0
        %750 = vmatprep.subr.mxu0 0.0
        %751 = vmatpush1.msra.mxu0 0.0
        %752 = vmatprep.subr.mxu0 0.0
        %753 = vmatpush1.msra.mxu0 0.0
        %754 = vmatprep.mubr.f32.mxu0 0.0
        %755 = vmatmul.mubr.f32.gmra.mrb[0].mxu0 %v679
        %v756 = vpop.f32.mrb[0].mxu0
        %v757 = vadd.f32 0.0, %v756
        %v758 = vpop.f32.mrb[0].mxu0
        %v759 = vadd.f32 0.0, %v758
        %760 = vdwg.mxu0
        %761 = vmatprep.subr.mxu0 %v688
        %762 = vmatpush1.msra.mxu0 %v686
        %763 = vmatprep.subr.mxu0 0.0
        %764 = vmatpush1.msra.mxu0 0.0
        %765 = vmatprep.subr.mxu0 0.0
        %766 = vmatpush1.msra.mxu0 0.0
        %767 = vmatprep.subr.mxu0 0.0
        %768 = vmatpush1.msra.mxu0 0.0
        %769 = vmatprep.subr.mxu0 0.0
        %770 = vmatpush1.msra.mxu0 0.0
        %771 = vmatprep.subr.mxu0 0.0
        %772 = vmatpush1.msra.mxu0 0.0
        %773 = vmatprep.subr.mxu0 0.0
        %774 = vmatpush1.msra.mxu0 0.0
        %775 = vmatprep.subr.mxu0 0.0
        %776 = vmatpush1.msra.mxu0 0.0
        %777 = vmatprep.subr.mxu0 0.0
        %778 = vmatpush1.msra.mxu0 0.0
        %779 = vmatprep.subr.mxu0 0.0
        %780 = vmatpush1.msra.mxu0 0.0
        %781 = vmatprep.subr.mxu0 0.0
        %782 = vmatpush1.msra.mxu0 0.0
        %783 = vmatprep.subr.mxu0 0.0
        %784 = vmatpush1.msra.mxu0 0.0
        %785 = vmatprep.subr.mxu0 0.0
        %786 = vmatpush1.msra.mxu0 0.0
        %787 = vmatprep.subr.mxu0 0.0
        %788 = vmatpush1.msra.mxu0 0.0
        %789 = vmatprep.subr.mxu0 0.0
        %790 = vmatpush1.msra.mxu0 0.0
        %791 = vmatprep.subr.mxu0 0.0
        %792 = vmatpush1.msra.mxu0 0.0
        %793 = vmatprep.subr.mxu0 0.0
        %794 = vmatpush1.msra.mxu0 0.0
        %795 = vmatprep.subr.mxu0 0.0
        %796 = vmatpush1.msra.mxu0 0.0
        %797 = vmatprep.subr.mxu0 0.0
        %798 = vmatpush1.msra.mxu0 0.0
        %799 = vmatprep.subr.mxu0 0.0
        %800 = vmatpush1.msra.mxu0 0.0
        %801 = vmatprep.subr.mxu0 0.0
        %802 = vmatpush1.msra.mxu0 0.0
        %803 = vmatprep.subr.mxu0 0.0
        %804 = vmatpush1.msra.mxu0 0.0
        %805 = vmatprep.subr.mxu0 0.0
        %806 = vmatpush1.msra.mxu0 0.0
        %807 = vmatprep.subr.mxu0 0.0
        %808 = vmatpush1.msra.mxu0 0.0
        %809 = vmatprep.subr.mxu0 0.0
        %810 = vmatpush1.msra.mxu0 0.0
        %811 = vmatprep.subr.mxu0 0.0
        %812 = vmatpush1.msra.mxu0 0.0
        %813 = vmatprep.subr.mxu0 0.0
        %814 = vmatpush1.msra.mxu0 0.0
        %815 = vmatprep.subr.mxu0 0.0
        %816 = vmatpush1.msra.mxu0 0.0
        %817 = vmatprep.subr.mxu0 0.0
        %818 = vmatpush1.msra.mxu0 0.0
        %819 = vmatprep.subr.mxu0 0.0
        %820 = vmatpush1.msra.mxu0 0.0
        %821 = vmatprep.subr.mxu0 0.0
        %822 = vmatpush1.msra.mxu0 0.0
        %823 = vmatprep.subr.mxu0 0.0
        %824 = vmatpush1.msra.mxu0 0.0
        %825 = vmatprep.mubr.f32.mxu0 0.0
        %826 = vmatmul.mubr.f32.gmra.mrb[0].mxu0 %v679
        %v827 = vpop.f32.mrb[0].mxu0
        %v828 = vadd.f32 0.0, %v827
        %v829 = vpop.f32.mrb[0].mxu0
        %v830 = vadd.f32 0.0, %v829
        %831 = vdwg.mxu0
        %v832 = vadd.f32 %v590, %v757
        %v833 = vadd.f32 %v592, %v759
        %v834 = vadd.f32 %v661, %v828
        %v835 = vadd.f32 %v663, %v830
        %s836 = scalar_lea.vmem %s1, 12
        %v837 = vld [vmem:[%s836] sm:$0xf]
        %v838 = vcombine.high %v224, %v224
        %839 = vrot.lane.b32.xlu0 %v223, 1
        %v840 = vpop.permute.xlu0 %839
        %841 = vrot.lane.b32.xlu0 %v332, 1
        %v842 = vpop.permute.xlu0 %841
        %843 = vrot.lane.b32.xlu0 %v224, 1
        %v844 = vpop.permute.xlu0 %843
        %845 = vrot.lane.b32.xlu0 %v838, 1
        %v846 = vpop.permute.xlu0 %845
        %vm847 = vcmask 7168
        %v848 = vsel %vm847, %v840, %v842
        %v849 = vsel %vm847, %v842, %v844
        %v850 = vsel %vm847, %v844, %v846
        %v852 = vsel %vm847, 0.0, %v840
        %v854 = vsel %vm302, %v837, 0
        %v857 = vsel %vm359, %v852, 0
        %v859 = vsel %vm359, %v848, 0
        %v861 = vsel %vm359, %v849, 0
        %v863 = vsel %vm359, %v850, 0
        %865 = vmatprep.subr.mxu0 %v859
        %866 = vmatpush1.msra.mxu0 %v857
        %867 = vmatprep.subr.mxu0 0.0
        %868 = vmatpush1.msra.mxu0 0.0
        %869 = vmatprep.subr.mxu0 0.0
        %870 = vmatpush1.msra.mxu0 0.0
        %871 = vmatprep.subr.mxu0 0.0
        %872 = vmatpush1.msra.mxu0 0.0
        %873 = vmatprep.subr.mxu0 0.0
        %874 = vmatpush1.msra.mxu0 0.0
        %875 = vmatprep.subr.mxu0 0.0
        %876 = vmatpush1.msra.mxu0 0.0
        %877 = vmatprep.subr.mxu0 0.0
        %878 = vmatpush1.msra.mxu0 0.0
        %879 = vmatprep.subr.mxu0 0.0
        %880 = vmatpush1.msra.mxu0 0.0
        %881 = vmatprep.subr.mxu0 0.0
        %882 = vmatpush1.msra.mxu0 0.0
        %883 = vmatprep.subr.mxu0 0.0
        %884 = vmatpush1.msra.mxu0 0.0
        %885 = vmatprep.subr.mxu0 0.0
        %886 = vmatpush1.msra.mxu0 0.0
        %887 = vmatprep.subr.mxu0 0.0
        %888 = vmatpush1.msra.mxu0 0.0
        %889 = vmatprep.subr.mxu0 0.0
        %890 = vmatpush1.msra.mxu0 0.0
        %891 = vmatprep.subr.mxu0 0.0
        %892 = vmatpush1.msra.mxu0 0.0
        %893 = vmatprep.subr.mxu0 0.0
        %894 = vmatpush1.msra.mxu0 0.0
        %895 = vmatprep.subr.mxu0 0.0
        %896 = vmatpush1.msra.mxu0 0.0
        %897 = vmatprep.subr.mxu0 0.0
        %898 = vmatpush1.msra.mxu0 0.0
        %899 = vmatprep.subr.mxu0 0.0
        %900 = vmatpush1.msra.mxu0 0.0
        %901 = vmatprep.subr.mxu0 0.0
        %902 = vmatpush1.msra.mxu0 0.0
        %903 = vmatprep.subr.mxu0 0.0
        %904 = vmatpush1.msra.mxu0 0.0
        %905 = vmatprep.subr.mxu0 0.0
        %906 = vmatpush1.msra.mxu0 0.0
        %907 = vmatprep.subr.mxu0 0.0
        %908 = vmatpush1.msra.mxu0 0.0
        %909 = vmatprep.subr.mxu0 0.0
        %910 = vmatpush1.msra.mxu0 0.0
        %911 = vmatprep.subr.mxu0 0.0
        %912 = vmatpush1.msra.mxu0 0.0
        %913 = vmatprep.subr.mxu0 0.0
        %914 = vmatpush1.msra.mxu0 0.0
        %915 = vmatprep.subr.mxu0 0.0
        %916 = vmatpush1.msra.mxu0 0.0
        %917 = vmatprep.subr.mxu0 0.0
        %918 = vmatpush1.msra.mxu0 0.0
        %919 = vmatprep.subr.mxu0 0.0
        %920 = vmatpush1.msra.mxu0 0.0
        %921 = vmatprep.subr.mxu0 0.0
        %922 = vmatpush1.msra.mxu0 0.0
        %923 = vmatprep.subr.mxu0 0.0
        %924 = vmatpush1.msra.mxu0 0.0
        %925 = vmatprep.subr.mxu0 0.0
        %926 = vmatpush1.msra.mxu0 0.0
        %927 = vmatprep.subr.mxu0 0.0
        %928 = vmatpush1.msra.mxu0 0.0
        %929 = vmatprep.mubr.f32.mxu0 0.0
        %930 = vmatmul.mubr.f32.gmra.mrb[0].mxu0 %v854
        %v931 = vpop.f32.mrb[0].mxu0
        %v932 = vadd.f32 0.0, %v931
        %v933 = vpop.f32.mrb[0].mxu0
        %v934 = vadd.f32 0.0, %v933
        %935 = vdwg.mxu0
        %936 = vmatprep.subr.mxu0 %v863
        %937 = vmatpush1.msra.mxu0 %v861
        %938 = vmatprep.subr.mxu0 0.0
        %939 = vmatpush1.msra.mxu0 0.0
        %940 = vmatprep.subr.mxu0 0.0
        %941 = vmatpush1.msra.mxu0 0.0
        %942 = vmatprep.subr.mxu0 0.0
        %943 = vmatpush1.msra.mxu0 0.0
        %944 = vmatprep.subr.mxu0 0.0
        %945 = vmatpush1.msra.mxu0 0.0
        %946 = vmatprep.subr.mxu0 0.0
        %947 = vmatpush1.msra.mxu0 0.0
        %948 = vmatprep.subr.mxu0 0.0
        %949 = vmatpush1.msra.mxu0 0.0
        %950 = vmatprep.subr.mxu0 0.0
        %951 = vmatpush1.msra.mxu0 0.0
        %952 = vmatprep.subr.mxu0 0.0
        %953 = vmatpush1.msra.mxu0 0.0
        %954 = vmatprep.subr.mxu0 0.0
        %955 = vmatpush1.msra.mxu0 0.0
        %956 = vmatprep.subr.mxu0 0.0
        %957 = vmatpush1.msra.mxu0 0.0
        %958 = vmatprep.subr.mxu0 0.0
        %959 = vmatpush1.msra.mxu0 0.0
        %960 = vmatprep.subr.mxu0 0.0
        %961 = vmatpush1.msra.mxu0 0.0
        %962 = vmatprep.subr.mxu0 0.0
        %963 = vmatpush1.msra.mxu0 0.0
        %964 = vmatprep.subr.mxu0 0.0
        %965 = vmatpush1.msra.mxu0 0.0
        %966 = vmatprep.subr.mxu0 0.0
        %967 = vmatpush1.msra.mxu0 0.0
        %968 = vmatprep.subr.mxu0 0.0
        %969 = vmatpush1.msra.mxu0 0.0
        %970 = vmatprep.subr.mxu0 0.0
        %971 = vmatpush1.msra.mxu0 0.0
        %972 = vmatprep.subr.mxu0 0.0
        %973 = vmatpush1.msra.mxu0 0.0
        %974 = vmatprep.subr.mxu0 0.0
        %975 = vmatpush1.msra.mxu0 0.0
        %976 = vmatprep.subr.mxu0 0.0
        %977 = vmatpush1.msra.mxu0 0.0
        %978 = vmatprep.subr.mxu0 0.0
        %979 = vmatpush1.msra.mxu0 0.0
        %980 = vmatprep.subr.mxu0 0.0
        %981 = vmatpush1.msra.mxu0 0.0
        %982 = vmatprep.subr.mxu0 0.0
        %983 = vmatpush1.msra.mxu0 0.0
        %984 = vmatprep.subr.mxu0 0.0
        %985 = vmatpush1.msra.mxu0 0.0
        %986 = vmatprep.subr.mxu0 0.0
        %987 = vmatpush1.msra.mxu0 0.0
        %988 = vmatprep.subr.mxu0 0.0
        %989 = vmatpush1.msra.mxu0 0.0
        %990 = vmatprep.subr.mxu0 0.0
        %991 = vmatpush1.msra.mxu0 0.0
        %992 = vmatprep.subr.mxu0 0.0
        %993 = vmatpush1.msra.mxu0 0.0
        %994 = vmatprep.subr.mxu0 0.0
        %995 = vmatpush1.msra.mxu0 0.0
        %996 = vmatprep.subr.mxu0 0.0
        %997 = vmatpush1.msra.mxu0 0.0
        %998 = vmatprep.subr.mxu0 0.0
        %999 = vmatpush1.msra.mxu0 0.0
        %1000 = vmatprep.mubr.f32.mxu0 0.0
        %1001 = vmatmul.mubr.f32.gmra.mrb[0].mxu0 %v854
        %v1002 = vpop.f32.mrb[0].mxu0
        %v1003 = vadd.f32 0.0, %v1002
        %v1004 = vpop.f32.mrb[0].mxu0
        %v1005 = vadd.f32 0.0, %v1004
        %1006 = vdwg.mxu0
        %v1007 = vadd.f32 %v832, %v932
        %v1008 = vadd.f32 %v833, %v934
        %v1009 = vadd.f32 %v834, %v1003
        %v1010 = vadd.f32 %v835, %v1005
        %s1011 = scalar_lea.vmem %s1, 16
        %v1012 = vld [vmem:[%s1011] sm:$0xf]
        %v1014 = vsel %vm302, %v1012, 0
        %v1016 = vsel %vm359, %v223, 0
        %v1018 = vsel %vm359, %v332, 0
        %v1020 = vsel %vm359, %v224, 0
        %v1022 = vsel %vm359, %v838, 0
        %1024 = vmatprep.subr.mxu0 %v1018
        %1025 = vmatpush1.msra.mxu0 %v1016
        %1026 = vmatprep.subr.mxu0 0.0
        %1027 = vmatpush1.msra.mxu0 0.0
        %1028 = vmatprep.subr.mxu0 0.0
        %1029 = vmatpush1.msra.mxu0 0.0
        %1030 = vmatprep.subr.mxu0 0.0
        %1031 = vmatpush1.msra.mxu0 0.0
        %1032 = vmatprep.subr.mxu0 0.0
        %1033 = vmatpush1.msra.mxu0 0.0
        %1034 = vmatprep.subr.mxu0 0.0
        %1035 = vmatpush1.msra.mxu0 0.0
        %1036 = vmatprep.subr.mxu0 0.0
        %1037 = vmatpush1.msra.mxu0 0.0
        %1038 = vmatprep.subr.mxu0 0.0
        %1039 = vmatpush1.msra.mxu0 0.0
        %1040 = vmatprep.subr.mxu0 0.0
        %1041 = vmatpush1.msra.mxu0 0.0
        %1042 = vmatprep.subr.mxu0 0.0
        %1043 = vmatpush1.msra.mxu0 0.0
        %1044 = vmatprep.subr.mxu0 0.0
        %1045 = vmatpush1.msra.mxu0 0.0
        %1046 = vmatprep.subr.mxu0 0.0
        %1047 = vmatpush1.msra.mxu0 0.0
        %1048 = vmatprep.subr.mxu0 0.0
        %1049 = vmatpush1.msra.mxu0 0.0
        %1050 = vmatprep.subr.mxu0 0.0
        %1051 = vmatpush1.msra.mxu0 0.0
        %1052 = vmatprep.subr.mxu0 0.0
        %1053 = vmatpush1.msra.mxu0 0.0
        %1054 = vmatprep.subr.mxu0 0.0
        %1055 = vmatpush1.msra.mxu0 0.0
        %1056 = vmatprep.subr.mxu0 0.0
        %1057 = vmatpush1.msra.mxu0 0.0
        %1058 = vmatprep.subr.mxu0 0.0
        %1059 = vmatpush1.msra.mxu0 0.0
        %1060 = vmatprep.subr.mxu0 0.0
        %1061 = vmatpush1.msra.mxu0 0.0
        %1062 = vmatprep.subr.mxu0 0.0
        %1063 = vmatpush1.msra.mxu0 0.0
        %1064 = vmatprep.subr.mxu0 0.0
        %1065 = vmatpush1.msra.mxu0 0.0
        %1066 = vmatprep.subr.mxu0 0.0
        %1067 = vmatpush1.msra.mxu0 0.0
        %1068 = vmatprep.subr.mxu0 0.0
        %1069 = vmatpush1.msra.mxu0 0.0
        %1070 = vmatprep.subr.mxu0 0.0
        %1071 = vmatpush1.msra.mxu0 0.0
        %1072 = vmatprep.subr.mxu0 0.0
        %1073 = vmatpush1.msra.mxu0 0.0
        %1074 = vmatprep.subr.mxu0 0.0
        %1075 = vmatpush1.msra.mxu0 0.0
        %1076 = vmatprep.subr.mxu0 0.0
        %1077 = vmatpush1.msra.mxu0 0.0
        %1078 = vmatprep.subr.mxu0 0.0
        %1079 = vmatpush1.msra.mxu0 0.0
        %1080 = vmatprep.subr.mxu0 0.0
        %1081 = vmatpush1.msra.mxu0 0.0
        %1082 = vmatprep.subr.mxu0 0.0
        %1083 = vmatpush1.msra.mxu0 0.0
        %1084 = vmatprep.subr.mxu0 0.0
        %1085 = vmatpush1.msra.mxu0 0.0
        %1086 = vmatprep.subr.mxu0 0.0
        %1087 = vmatpush1.msra.mxu0 0.0
        %1088 = vmatprep.mubr.f32.mxu0 0.0
        %1089 = vmatmul.mubr.f32.gmra.mrb[0].mxu0 %v1014
        %v1090 = vpop.f32.mrb[0].mxu0
        %v1091 = vadd.f32 0.0, %v1090
        %v1092 = vpop.f32.mrb[0].mxu0
        %v1093 = vadd.f32 0.0, %v1092
        %1094 = vdwg.mxu0
        %1095 = vmatprep.subr.mxu0 %v1022
        %1096 = vmatpush1.msra.mxu0 %v1020
        %1097 = vmatprep.subr.mxu0 0.0
        %1098 = vmatpush1.msra.mxu0 0.0
        %1099 = vmatprep.subr.mxu0 0.0
        %1100 = vmatpush1.msra.mxu0 0.0
        %1101 = vmatprep.subr.mxu0 0.0
        %1102 = vmatpush1.msra.mxu0 0.0
        %1103 = vmatprep.subr.mxu0 0.0
        %1104 = vmatpush1.msra.mxu0 0.0
        %1105 = vmatprep.subr.mxu0 0.0
        %1106 = vmatpush1.msra.mxu0 0.0
        %1107 = vmatprep.subr.mxu0 0.0
        %1108 = vmatpush1.msra.mxu0 0.0
        %1109 = vmatprep.subr.mxu0 0.0
        %1110 = vmatpush1.msra.mxu0 0.0
        %1111 = vmatprep.subr.mxu0 0.0
        %1112 = vmatpush1.msra.mxu0 0.0
        %1113 = vmatprep.subr.mxu0 0.0
        %1114 = vmatpush1.msra.mxu0 0.0
        %1115 = vmatprep.subr.mxu0 0.0
        %1116 = vmatpush1.msra.mxu0 0.0
        %1117 = vmatprep.subr.mxu0 0.0
        %1118 = vmatpush1.msra.mxu0 0.0
        %1119 = vmatprep.subr.mxu0 0.0
        %1120 = vmatpush1.msra.mxu0 0.0
        %1121 = vmatprep.subr.mxu0 0.0
        %1122 = vmatpush1.msra.mxu0 0.0
        %1123 = vmatprep.subr.mxu0 0.0
        %1124 = vmatpush1.msra.mxu0 0.0
        %1125 = vmatprep.subr.mxu0 0.0
        %1126 = vmatpush1.msra.mxu0 0.0
        %1127 = vmatprep.subr.mxu0 0.0
        %1128 = vmatpush1.msra.mxu0 0.0
        %1129 = vmatprep.subr.mxu0 0.0
        %1130 = vmatpush1.msra.mxu0 0.0
        %1131 = vmatprep.subr.mxu0 0.0
        %1132 = vmatpush1.msra.mxu0 0.0
        %1133 = vmatprep.subr.mxu0 0.0
        %1134 = vmatpush1.msra.mxu0 0.0
        %1135 = vmatprep.subr.mxu0 0.0
        %1136 = vmatpush1.msra.mxu0 0.0
        %1137 = vmatprep.subr.mxu0 0.0
        %1138 = vmatpush1.msra.mxu0 0.0
        %1139 = vmatprep.subr.mxu0 0.0
        %1140 = vmatpush1.msra.mxu0 0.0
        %1141 = vmatprep.subr.mxu0 0.0
        %1142 = vmatpush1.msra.mxu0 0.0
        %1143 = vmatprep.subr.mxu0 0.0
        %1144 = vmatpush1.msra.mxu0 0.0
        %1145 = vmatprep.subr.mxu0 0.0
        %1146 = vmatpush1.msra.mxu0 0.0
        %1147 = vmatprep.subr.mxu0 0.0
        %1148 = vmatpush1.msra.mxu0 0.0
        %1149 = vmatprep.subr.mxu0 0.0
        %1150 = vmatpush1.msra.mxu0 0.0
        %1151 = vmatprep.subr.mxu0 0.0
        %1152 = vmatpush1.msra.mxu0 0.0
        %1153 = vmatprep.subr.mxu0 0.0
        %1154 = vmatpush1.msra.mxu0 0.0
        %1155 = vmatprep.subr.mxu0 0.0
        %1156 = vmatpush1.msra.mxu0 0.0
        %1157 = vmatprep.subr.mxu0 0.0
        %1158 = vmatpush1.msra.mxu0 0.0
        %1159 = vmatprep.mubr.f32.mxu0 0.0
        %1160 = vmatmul.mubr.f32.gmra.mrb[0].mxu0 %v1014
        %v1161 = vpop.f32.mrb[0].mxu0
        %v1162 = vadd.f32 0.0, %v1161
        %v1163 = vpop.f32.mrb[0].mxu0
        %v1164 = vadd.f32 0.0, %v1163
        %1165 = vdwg.mxu0
        %v1166 = vadd.f32 %v1007, %v1091
        %v1167 = vadd.f32 %v1008, %v1093
        %v1168 = vadd.f32 %v1009, %v1162
        %v1169 = vadd.f32 %v1010, %v1164
        %s1170 = scalar_lea.vmem %s1, 20
        %v1171 = vld [vmem:[%s1170] sm:$0xf]
        %1172 = vrot.lane.b32.xlu0 %v223, 127
        %v1173 = vpop.permute.xlu0 %1172
        %1174 = vrot.lane.b32.xlu0 %v332, 127
        %v1175 = vpop.permute.xlu0 %1174
        %1176 = vrot.lane.b32.xlu0 %v224, 127
        %v1177 = vpop.permute.xlu0 %1176
        %1178 = vrot.lane.b32.xlu0 %v838, 127
        %v1179 = vpop.permute.xlu0 %1178
        %vm1180 = vcmask 1039360
        %v1181 = vsel %vm1180, %v1173, %v1175
        %v1182 = vsel %vm1180, %v1175, %v1177
        %v1183 = vsel %vm1180, %v1177, %v1179
        %vm1185 = vcmask 121856
        %v1186 = vsel %vm1185, %v1179, 0.0
        %v1188 = vsel %vm302, %v1171, 0
        %v1190 = vsel %vm359, %v1181, 0
        %v1192 = vsel %vm359, %v1182, 0
        %v1194 = vsel %vm359, %v1183, 0
        %v1197 = vsel %vm359, %v1186, 0
        %1199 = vmatprep.subr.mxu0 %v1192
        %1200 = vmatpush1.msra.mxu0 %v1190
        %1201 = vmatprep.subr.mxu0 0.0
        %1202 = vmatpush1.msra.mxu0 0.0
        %1203 = vmatprep.subr.mxu0 0.0
        %1204 = vmatpush1.msra.mxu0 0.0
        %1205 = vmatprep.subr.mxu0 0.0
        %1206 = vmatpush1.msra.mxu0 0.0
        %1207 = vmatprep.subr.mxu0 0.0
        %1208 = vmatpush1.msra.mxu0 0.0
        %1209 = vmatprep.subr.mxu0 0.0
        %1210 = vmatpush1.msra.mxu0 0.0
        %1211 = vmatprep.subr.mxu0 0.0
        %1212 = vmatpush1.msra.mxu0 0.0
        %1213 = vmatprep.subr.mxu0 0.0
        %1214 = vmatpush1.msra.mxu0 0.0
        %1215 = vmatprep.subr.mxu0 0.0
        %1216 = vmatpush1.msra.mxu0 0.0
        %1217 = vmatprep.subr.mxu0 0.0
        %1218 = vmatpush1.msra.mxu0 0.0
        %1219 = vmatprep.subr.mxu0 0.0
        %1220 = vmatpush1.msra.mxu0 0.0
        %1221 = vmatprep.subr.mxu0 0.0
        %1222 = vmatpush1.msra.mxu0 0.0
        %1223 = vmatprep.subr.mxu0 0.0
        %1224 = vmatpush1.msra.mxu0 0.0
        %1225 = vmatprep.subr.mxu0 0.0
        %1226 = vmatpush1.msra.mxu0 0.0
        %1227 = vmatprep.subr.mxu0 0.0
        %1228 = vmatpush1.msra.mxu0 0.0
        %1229 = vmatprep.subr.mxu0 0.0
        %1230 = vmatpush1.msra.mxu0 0.0
        %1231 = vmatprep.subr.mxu0 0.0
        %1232 = vmatpush1.msra.mxu0 0.0
        %1233 = vmatprep.subr.mxu0 0.0
        %1234 = vmatpush1.msra.mxu0 0.0
        %1235 = vmatprep.subr.mxu0 0.0
        %1236 = vmatpush1.msra.mxu0 0.0
        %1237 = vmatprep.subr.mxu0 0.0
        %1238 = vmatpush1.msra.mxu0 0.0
        %1239 = vmatprep.subr.mxu0 0.0
        %1240 = vmatpush1.msra.mxu0 0.0
        %1241 = vmatprep.subr.mxu0 0.0
        %1242 = vmatpush1.msra.mxu0 0.0
        %1243 = vmatprep.subr.mxu0 0.0
        %1244 = vmatpush1.msra.mxu0 0.0
        %1245 = vmatprep.subr.mxu0 0.0
        %1246 = vmatpush1.msra.mxu0 0.0
        %1247 = vmatprep.subr.mxu0 0.0
        %1248 = vmatpush1.msra.mxu0 0.0
        %1249 = vmatprep.subr.mxu0 0.0
        %1250 = vmatpush1.msra.mxu0 0.0
        %1251 = vmatprep.subr.mxu0 0.0
        %1252 = vmatpush1.msra.mxu0 0.0
        %1253 = vmatprep.subr.mxu0 0.0
        %1254 = vmatpush1.msra.mxu0 0.0
        %1255 = vmatprep.subr.mxu0 0.0
        %1256 = vmatpush1.msra.mxu0 0.0
        %1257 = vmatprep.subr.mxu0 0.0
        %1258 = vmatpush1.msra.mxu0 0.0
        %1259 = vmatprep.subr.mxu0 0.0
        %1260 = vmatpush1.msra.mxu0 0.0
        %1261 = vmatprep.subr.mxu0 0.0
        %1262 = vmatpush1.msra.mxu0 0.0
        %1263 = vmatprep.mubr.f32.mxu0 0.0
        %1264 = vmatmul.mubr.f32.gmra.mrb[0].mxu0 %v1188
        %v1265 = vpop.f32.mrb[0].mxu0
        %v1266 = vadd.f32 0.0, %v1265
        %v1267 = vpop.f32.mrb[0].mxu0
        %v1268 = vadd.f32 0.0, %v1267
        %1269 = vdwg.mxu0
        %1270 = vmatprep.subr.mxu0 %v1197
        %1271 = vmatpush1.msra.mxu0 %v1194
        %1272 = vmatprep.subr.mxu0 0.0
        %1273 = vmatpush1.msra.mxu0 0.0
        %1274 = vmatprep.subr.mxu0 0.0
        %1275 = vmatpush1.msra.mxu0 0.0
        %1276 = vmatprep.subr.mxu0 0.0
        %1277 = vmatpush1.msra.mxu0 0.0
        %1278 = vmatprep.subr.mxu0 0.0
        %1279 = vmatpush1.msra.mxu0 0.0
        %1280 = vmatprep.subr.mxu0 0.0
        %1281 = vmatpush1.msra.mxu0 0.0
        %1282 = vmatprep.subr.mxu0 0.0
        %1283 = vmatpush1.msra.mxu0 0.0
        %1284 = vmatprep.subr.mxu0 0.0
        %1285 = vmatpush1.msra.mxu0 0.0
        %1286 = vmatprep.subr.mxu0 0.0
        %1287 = vmatpush1.msra.mxu0 0.0
        %1288 = vmatprep.subr.mxu0 0.0
        %1289 = vmatpush1.msra.mxu0 0.0
        %1290 = vmatprep.subr.mxu0 0.0
        %1291 = vmatpush1.msra.mxu0 0.0
        %1292 = vmatprep.subr.mxu0 0.0
        %1293 = vmatpush1.msra.mxu0 0.0
        %1294 = vmatprep.subr.mxu0 0.0
        %1295 = vmatpush1.msra.mxu0 0.0
        %1296 = vmatprep.subr.mxu0 0.0
        %1297 = vmatpush1.msra.mxu0 0.0
        %1298 = vmatprep.subr.mxu0 0.0
        %1299 = vmatpush1.msra.mxu0 0.0
        %1300 = vmatprep.subr.mxu0 0.0
        %1301 = vmatpush1.msra.mxu0 0.0
        %1302 = vmatprep.subr.mxu0 0.0
        %1303 = vmatpush1.msra.mxu0 0.0
        %1304 = vmatprep.subr.mxu0 0.0
        %1305 = vmatpush1.msra.mxu0 0.0
        %1306 = vmatprep.subr.mxu0 0.0
        %1307 = vmatpush1.msra.mxu0 0.0
        %1308 = vmatprep.subr.mxu0 0.0
        %1309 = vmatpush1.msra.mxu0 0.0
        %1310 = vmatprep.subr.mxu0 0.0
        %1311 = vmatpush1.msra.mxu0 0.0
        %1312 = vmatprep.subr.mxu0 0.0
        %1313 = vmatpush1.msra.mxu0 0.0
        %1314 = vmatprep.subr.mxu0 0.0
        %1315 = vmatpush1.msra.mxu0 0.0
        %1316 = vmatprep.subr.mxu0 0.0
        %1317 = vmatpush1.msra.mxu0 0.0
        %1318 = vmatprep.subr.mxu0 0.0
        %1319 = vmatpush1.msra.mxu0 0.0
        %1320 = vmatprep.subr.mxu0 0.0
        %1321 = vmatpush1.msra.mxu0 0.0
        %1322 = vmatprep.subr.mxu0 0.0
        %1323 = vmatpush1.msra.mxu0 0.0
        %1324 = vmatprep.subr.mxu0 0.0
        %1325 = vmatpush1.msra.mxu0 0.0
        %1326 = vmatprep.subr.mxu0 0.0
        %1327 = vmatpush1.msra.mxu0 0.0
        %1328 = vmatprep.subr.mxu0 0.0
        %1329 = vmatpush1.msra.mxu0 0.0
        %1330 = vmatprep.subr.mxu0 0.0
        %1331 = vmatpush1.msra.mxu0 0.0
        %1332 = vmatprep.subr.mxu0 0.0
        %1333 = vmatpush1.msra.mxu0 0.0
        %1334 = vmatprep.mubr.f32.mxu0 0.0
        %1335 = vmatmul.mubr.f32.gmra.mrb[0].mxu0 %v1188
        %v1336 = vpop.f32.mrb[0].mxu0
        %v1337 = vadd.f32 0.0, %v1336
        %v1338 = vpop.f32.mrb[0].mxu0
        %v1339 = vadd.f32 0.0, %v1338
        %1340 = vdwg.mxu0
        %v1341 = vadd.f32 %v1166, %v1266
        %v1342 = vadd.f32 %v1167, %v1268
        %v1343 = vadd.f32 %v1168, %v1337
        %v1344 = vadd.f32 %v1169, %v1339
        %s1345 = scalar_lea.vmem %s1, 24
        %v1346 = vld [vmem:[%s1345] sm:$0xf]
        %1347 = vrot.lane.b32.xlu0 %v223, 109
        %v1348 = vpop.permute.xlu0 %1347
        %1349 = vrot.lane.b32.xlu0 %v332, 109
        %v1350 = vpop.permute.xlu0 %1349
        %1351 = vrot.lane.b32.xlu0 %v224, 109
        %v1352 = vpop.permute.xlu0 %1351
        %1353 = vrot.lane.b32.xlu0 %v838, 109
        %v1354 = vpop.permute.xlu0 %1353
        %vm1355 = vcmask 891904
        %v1356 = vsel %vm1355, %v1348, %v1350
        %v1357 = vsel %vm1355, %v1350, %v1352
        %v1358 = vsel %vm1355, %v1352, %v1354
        %vm1360 = vcmask 1022976
        %v1361 = vsel %vm1360, %v1358, 0.0
        %v1363 = vsel %vm302, %v1346, 0
        %v1365 = vsel %vm359, %v1356, 0
        %v1367 = vsel %vm359, %v1357, 0
        %v1370 = vsel %vm359, %v1361, 0
        %v1373 = vsel %vm359, 0.0, 0
        %1375 = vmatprep.subr.mxu0 %v1367
        %1376 = vmatpush1.msra.mxu0 %v1365
        %1377 = vmatprep.subr.mxu0 0.0
        %1378 = vmatpush1.msra.mxu0 0.0
        %1379 = vmatprep.subr.mxu0 0.0
        %1380 = vmatpush1.msra.mxu0 0.0
        %1381 = vmatprep.subr.mxu0 0.0
        %1382 = vmatpush1.msra.mxu0 0.0
        %1383 = vmatprep.subr.mxu0 0.0
        %1384 = vmatpush1.msra.mxu0 0.0
        %1385 = vmatprep.subr.mxu0 0.0
        %1386 = vmatpush1.msra.mxu0 0.0
        %1387 = vmatprep.subr.mxu0 0.0
        %1388 = vmatpush1.msra.mxu0 0.0
        %1389 = vmatprep.subr.mxu0 0.0
        %1390 = vmatpush1.msra.mxu0 0.0
        %1391 = vmatprep.subr.mxu0 0.0
        %1392 = vmatpush1.msra.mxu0 0.0
        %1393 = vmatprep.subr.mxu0 0.0
        %1394 = vmatpush1.msra.mxu0 0.0
        %1395 = vmatprep.subr.mxu0 0.0
        %1396 = vmatpush1.msra.mxu0 0.0
        %1397 = vmatprep.subr.mxu0 0.0
        %1398 = vmatpush1.msra.mxu0 0.0
        %1399 = vmatprep.subr.mxu0 0.0
        %1400 = vmatpush1.msra.mxu0 0.0
        %1401 = vmatprep.subr.mxu0 0.0
        %1402 = vmatpush1.msra.mxu0 0.0
        %1403 = vmatprep.subr.mxu0 0.0
        %1404 = vmatpush1.msra.mxu0 0.0
        %1405 = vmatprep.subr.mxu0 0.0
        %1406 = vmatpush1.msra.mxu0 0.0
        %1407 = vmatprep.subr.mxu0 0.0
        %1408 = vmatpush1.msra.mxu0 0.0
        %1409 = vmatprep.subr.mxu0 0.0
        %1410 = vmatpush1.msra.mxu0 0.0
        %1411 = vmatprep.subr.mxu0 0.0
        %1412 = vmatpush1.msra.mxu0 0.0
        %1413 = vmatprep.subr.mxu0 0.0
        %1414 = vmatpush1.msra.mxu0 0.0
        %1415 = vmatprep.subr.mxu0 0.0
        %1416 = vmatpush1.msra.mxu0 0.0
        %1417 = vmatprep.subr.mxu0 0.0
        %1418 = vmatpush1.msra.mxu0 0.0
        %1419 = vmatprep.subr.mxu0 0.0
        %1420 = vmatpush1.msra.mxu0 0.0
        %1421 = vmatprep.subr.mxu0 0.0
        %1422 = vmatpush1.msra.mxu0 0.0
        %1423 = vmatprep.subr.mxu0 0.0
        %1424 = vmatpush1.msra.mxu0 0.0
        %1425 = vmatprep.subr.mxu0 0.0
        %1426 = vmatpush1.msra.mxu0 0.0
        %1427 = vmatprep.subr.mxu0 0.0
        %1428 = vmatpush1.msra.mxu0 0.0
        %1429 = vmatprep.subr.mxu0 0.0
        %1430 = vmatpush1.msra.mxu0 0.0
        %1431 = vmatprep.subr.mxu0 0.0
        %1432 = vmatpush1.msra.mxu0 0.0
        %1433 = vmatprep.subr.mxu0 0.0
        %1434 = vmatpush1.msra.mxu0 0.0
        %1435 = vmatprep.subr.mxu0 0.0
        %1436 = vmatpush1.msra.mxu0 0.0
        %1437 = vmatprep.subr.mxu0 0.0
        %1438 = vmatpush1.msra.mxu0 0.0
        %1439 = vmatprep.mubr.f32.mxu0 0.0
        %1440 = vmatmul.mubr.f32.gmra.mrb[0].mxu0 %v1363
        %v1441 = vpop.f32.mrb[0].mxu0
        %v1442 = vadd.f32 0.0, %v1441
        %v1443 = vpop.f32.mrb[0].mxu0
        %v1444 = vadd.f32 0.0, %v1443
        %1445 = vdwg.mxu0
        %1446 = vmatprep.subr.mxu0 %v1373
        %1447 = vmatpush1.msra.mxu0 %v1370
        %1448 = vmatprep.subr.mxu0 0.0
        %1449 = vmatpush1.msra.mxu0 0.0
        %1450 = vmatprep.subr.mxu0 0.0
        %1451 = vmatpush1.msra.mxu0 0.0
        %1452 = vmatprep.subr.mxu0 0.0
        %1453 = vmatpush1.msra.mxu0 0.0
        %1454 = vmatprep.subr.mxu0 0.0
        %1455 = vmatpush1.msra.mxu0 0.0
        %1456 = vmatprep.subr.mxu0 0.0
        %1457 = vmatpush1.msra.mxu0 0.0
        %1458 = vmatprep.subr.mxu0 0.0
        %1459 = vmatpush1.msra.mxu0 0.0
        %1460 = vmatprep.subr.mxu0 0.0
        %1461 = vmatpush1.msra.mxu0 0.0
        %1462 = vmatprep.subr.mxu0 0.0
        %1463 = vmatpush1.msra.mxu0 0.0
        %1464 = vmatprep.subr.mxu0 0.0
        %1465 = vmatpush1.msra.mxu0 0.0
        %1466 = vmatprep.subr.mxu0 0.0
        %1467 = vmatpush1.msra.mxu0 0.0
        %1468 = vmatprep.subr.mxu0 0.0
        %1469 = vmatpush1.msra.mxu0 0.0
        %1470 = vmatprep.subr.mxu0 0.0
        %1471 = vmatpush1.msra.mxu0 0.0
        %1472 = vmatprep.subr.mxu0 0.0
        %1473 = vmatpush1.msra.mxu0 0.0
        %1474 = vmatprep.subr.mxu0 0.0
        %1475 = vmatpush1.msra.mxu0 0.0
        %1476 = vmatprep.subr.mxu0 0.0
        %1477 = vmatpush1.msra.mxu0 0.0
        %1478 = vmatprep.subr.mxu0 0.0
        %1479 = vmatpush1.msra.mxu0 0.0
        %1480 = vmatprep.subr.mxu0 0.0
        %1481 = vmatpush1.msra.mxu0 0.0
        %1482 = vmatprep.subr.mxu0 0.0
        %1483 = vmatpush1.msra.mxu0 0.0
        %1484 = vmatprep.subr.mxu0 0.0
        %1485 = vmatpush1.msra.mxu0 0.0
        %1486 = vmatprep.subr.mxu0 0.0
        %1487 = vmatpush1.msra.mxu0 0.0
        %1488 = vmatprep.subr.mxu0 0.0
        %1489 = vmatpush1.msra.mxu0 0.0
        %1490 = vmatprep.subr.mxu0 0.0
        %1491 = vmatpush1.msra.mxu0 0.0
        %1492 = vmatprep.subr.mxu0 0.0
        %1493 = vmatpush1.msra.mxu0 0.0
        %1494 = vmatprep.subr.mxu0 0.0
        %1495 = vmatpush1.msra.mxu0 0.0
        %1496 = vmatprep.subr.mxu0 0.0
        %1497 = vmatpush1.msra.mxu0 0.0
        %1498 = vmatprep.subr.mxu0 0.0
        %1499 = vmatpush1.msra.mxu0 0.0
        %1500 = vmatprep.subr.mxu0 0.0
        %1501 = vmatpush1.msra.mxu0 0.0
        %1502 = vmatprep.subr.mxu0 0.0
        %1503 = vmatpush1.msra.mxu0 0.0
        %1504 = vmatprep.subr.mxu0 0.0
        %1505 = vmatpush1.msra.mxu0 0.0
        %1506 = vmatprep.subr.mxu0 0.0
        %1507 = vmatpush1.msra.mxu0 0.0
        %1508 = vmatprep.subr.mxu0 0.0
        %1509 = vmatpush1.msra.mxu0 0.0
        %1510 = vmatprep.mubr.f32.mxu0 0.0
        %1511 = vmatmul.mubr.f32.gmra.mrb[0].mxu0 %v1363
        %v1512 = vpop.f32.mrb[0].mxu0
        %v1513 = vadd.f32 0.0, %v1512
        %v1514 = vpop.f32.mrb[0].mxu0
        %v1515 = vadd.f32 0.0, %v1514
        %1516 = vdwg.mxu0
        %v1517 = vadd.f32 %v1341, %v1442
        %v1518 = vadd.f32 %v1342, %v1444
        %v1519 = vadd.f32 %v1343, %v1513
        %v1520 = vadd.f32 %v1344, %v1515
        %s1521 = scalar_lea.vmem %s1, 28
        %v1522 = vld [vmem:[%s1521] sm:$0xf]
        %1523 = vrot.lane.b32.xlu0 %v223, 108
        %v1524 = vpop.permute.xlu0 %1523
        %1525 = vrot.lane.b32.xlu0 %v332, 108
        %v1526 = vpop.permute.xlu0 %1525
        %1527 = vrot.lane.b32.xlu0 %v224, 108
        %v1528 = vpop.permute.xlu0 %1527
        %1529 = vrot.lane.b32.xlu0 %v838, 108
        %v1530 = vpop.permute.xlu0 %1529
        %vm1531 = vcmask 883712
        %v1532 = vsel %vm1531, %v1524, %v1526
        %v1533 = vsel %vm1531, %v1526, %v1528
        %v1534 = vsel %vm1531, %v1528, %v1530
        %vm1536 = vcmask 1014784
        %v1537 = vsel %vm1536, %v1534, 0.0
        %v1539 = vsel %vm302, %v1522, 0
        %v1541 = vsel %vm359, %v1532, 0
        %v1543 = vsel %vm359, %v1533, 0
        %v1546 = vsel %vm359, %v1537, 0
        %1548 = vmatprep.subr.mxu0 %v1543
        %1549 = vmatpush1.msra.mxu0 %v1541
        %1550 = vmatprep.subr.mxu0 0.0
        %1551 = vmatpush1.msra.mxu0 0.0
        %1552 = vmatprep.subr.mxu0 0.0
        %1553 = vmatpush1.msra.mxu0 0.0
        %1554 = vmatprep.subr.mxu0 0.0
        %1555 = vmatpush1.msra.mxu0 0.0
        %1556 = vmatprep.subr.mxu0 0.0
        %1557 = vmatpush1.msra.mxu0 0.0
        %1558 = vmatprep.subr.mxu0 0.0
        %1559 = vmatpush1.msra.mxu0 0.0
        %1560 = vmatprep.subr.mxu0 0.0
        %1561 = vmatpush1.msra.mxu0 0.0
        %1562 = vmatprep.subr.mxu0 0.0
        %1563 = vmatpush1.msra.mxu0 0.0
        %1564 = vmatprep.subr.mxu0 0.0
        %1565 = vmatpush1.msra.mxu0 0.0
        %1566 = vmatprep.subr.mxu0 0.0
        %1567 = vmatpush1.msra.mxu0 0.0
        %1568 = vmatprep.subr.mxu0 0.0
        %1569 = vmatpush1.msra.mxu0 0.0
        %1570 = vmatprep.subr.mxu0 0.0
        %1571 = vmatpush1.msra.mxu0 0.0
        %1572 = vmatprep.subr.mxu0 0.0
        %1573 = vmatpush1.msra.mxu0 0.0
        %1574 = vmatprep.subr.mxu0 0.0
        %1575 = vmatpush1.msra.mxu0 0.0
        %1576 = vmatprep.subr.mxu0 0.0
        %1577 = vmatpush1.msra.mxu0 0.0
        %1578 = vmatprep.subr.mxu0 0.0
        %1579 = vmatpush1.msra.mxu0 0.0
        %1580 = vmatprep.subr.mxu0 0.0
        %1581 = vmatpush1.msra.mxu0 0.0
        %1582 = vmatprep.subr.mxu0 0.0
        %1583 = vmatpush1.msra.mxu0 0.0
        %1584 = vmatprep.subr.mxu0 0.0
        %1585 = vmatpush1.msra.mxu0 0.0
        %1586 = vmatprep.subr.mxu0 0.0
        %1587 = vmatpush1.msra.mxu0 0.0
        %1588 = vmatprep.subr.mxu0 0.0
        %1589 = vmatpush1.msra.mxu0 0.0
        %1590 = vmatprep.subr.mxu0 0.0
        %1591 = vmatpush1.msra.mxu0 0.0
        %1592 = vmatprep.subr.mxu0 0.0
        %1593 = vmatpush1.msra.mxu0 0.0
        %1594 = vmatprep.subr.mxu0 0.0
        %1595 = vmatpush1.msra.mxu0 0.0
        %1596 = vmatprep.subr.mxu0 0.0
        %1597 = vmatpush1.msra.mxu0 0.0
        %1598 = vmatprep.subr.mxu0 0.0
        %1599 = vmatpush1.msra.mxu0 0.0
        %1600 = vmatprep.subr.mxu0 0.0
        %1601 = vmatpush1.msra.mxu0 0.0
        %1602 = vmatprep.subr.mxu0 0.0
        %1603 = vmatpush1.msra.mxu0 0.0
        %1604 = vmatprep.subr.mxu0 0.0
        %1605 = vmatpush1.msra.mxu0 0.0
        %1606 = vmatprep.subr.mxu0 0.0
        %1607 = vmatpush1.msra.mxu0 0.0
        %1608 = vmatprep.subr.mxu0 0.0
        %1609 = vmatpush1.msra.mxu0 0.0
        %1610 = vmatprep.subr.mxu0 0.0
        %1611 = vmatpush1.msra.mxu0 0.0
        %1612 = vmatprep.mubr.f32.mxu0 0.0
        %1613 = vmatmul.mubr.f32.gmra.mrb[0].mxu0 %v1539
        %v1614 = vpop.f32.mrb[0].mxu0
        %v1615 = vadd.f32 0.0, %v1614
        %v1616 = vpop.f32.mrb[0].mxu0
        %v1617 = vadd.f32 0.0, %v1616
        %1618 = vdwg.mxu0
        %1619 = vmatprep.subr.mxu0 %v1373
        %1620 = vmatpush1.msra.mxu0 %v1546
        %1621 = vmatprep.subr.mxu0 0.0
        %1622 = vmatpush1.msra.mxu0 0.0
        %1623 = vmatprep.subr.mxu0 0.0
        %1624 = vmatpush1.msra.mxu0 0.0
        %1625 = vmatprep.subr.mxu0 0.0
        %1626 = vmatpush1.msra.mxu0 0.0
        %1627 = vmatprep.subr.mxu0 0.0
        %1628 = vmatpush1.msra.mxu0 0.0
        %1629 = vmatprep.subr.mxu0 0.0
        %1630 = vmatpush1.msra.mxu0 0.0
        %1631 = vmatprep.subr.mxu0 0.0
        %1632 = vmatpush1.msra.mxu0 0.0
        %1633 = vmatprep.subr.mxu0 0.0
        %1634 = vmatpush1.msra.mxu0 0.0
        %1635 = vmatprep.subr.mxu0 0.0
        %1636 = vmatpush1.msra.mxu0 0.0
        %1637 = vmatprep.subr.mxu0 0.0
        %1638 = vmatpush1.msra.mxu0 0.0
        %1639 = vmatprep.subr.mxu0 0.0
        %1640 = vmatpush1.msra.mxu0 0.0
        %1641 = vmatprep.subr.mxu0 0.0
        %1642 = vmatpush1.msra.mxu0 0.0
        %1643 = vmatprep.subr.mxu0 0.0
        %1644 = vmatpush1.msra.mxu0 0.0
        %1645 = vmatprep.subr.mxu0 0.0
        %1646 = vmatpush1.msra.mxu0 0.0
        %1647 = vmatprep.subr.mxu0 0.0
        %1648 = vmatpush1.msra.mxu0 0.0
        %1649 = vmatprep.subr.mxu0 0.0
        %1650 = vmatpush1.msra.mxu0 0.0
        %1651 = vmatprep.subr.mxu0 0.0
        %1652 = vmatpush1.msra.mxu0 0.0
        %1653 = vmatprep.subr.mxu0 0.0
        %1654 = vmatpush1.msra.mxu0 0.0
        %1655 = vmatprep.subr.mxu0 0.0
        %1656 = vmatpush1.msra.mxu0 0.0
        %1657 = vmatprep.subr.mxu0 0.0
        %1658 = vmatpush1.msra.mxu0 0.0
        %1659 = vmatprep.subr.mxu0 0.0
        %1660 = vmatpush1.msra.mxu0 0.0
        %1661 = vmatprep.subr.mxu0 0.0
        %1662 = vmatpush1.msra.mxu0 0.0
        %1663 = vmatprep.subr.mxu0 0.0
        %1664 = vmatpush1.msra.mxu0 0.0
        %1665 = vmatprep.subr.mxu0 0.0
        %1666 = vmatpush1.msra.mxu0 0.0
        %1667 = vmatprep.subr.mxu0 0.0
        %1668 = vmatpush1.msra.mxu0 0.0
        %1669 = vmatprep.subr.mxu0 0.0
        %1670 = vmatpush1.msra.mxu0 0.0
        %1671 = vmatprep.subr.mxu0 0.0
        %1672 = vmatpush1.msra.mxu0 0.0
        %1673 = vmatprep.subr.mxu0 0.0
        %1674 = vmatpush1.msra.mxu0 0.0
        %1675 = vmatprep.subr.mxu0 0.0
        %1676 = vmatpush1.msra.mxu0 0.0
        %1677 = vmatprep.subr.mxu0 0.0
        %1678 = vmatpush1.msra.mxu0 0.0
        %1679 = vmatprep.subr.mxu0 0.0
        %1680 = vmatpush1.msra.mxu0 0.0
        %1681 = vmatprep.subr.mxu0 0.0
        %1682 = vmatpush1.msra.mxu0 0.0
        %1683 = vmatprep.mubr.f32.mxu0 0.0
        %1684 = vmatmul.mubr.f32.gmra.mrb[0].mxu0 %v1539
        %v1685 = vpop.f32.mrb[0].mxu0
        %v1686 = vadd.f32 0.0, %v1685
        %v1687 = vpop.f32.mrb[0].mxu0
        %v1688 = vadd.f32 0.0, %v1687
        %1689 = vdwg.mxu0
        %v1690 = vadd.f32 %v1517, %v1615
        %v1691 = vadd.f32 %v1518, %v1617
        %v1692 = vadd.f32 %v1519, %v1686
        %v1693 = vadd.f32 %v1520, %v1688
        %s1694 = scalar_lea.vmem %s1, 32
        %v1695 = vld [vmem:[%s1694] sm:$0xf]
        %1696 = vrot.lane.b32.xlu0 %v223, 107
        %v1697 = vpop.permute.xlu0 %1696
        %1698 = vrot.lane.b32.xlu0 %v332, 107
        %v1699 = vpop.permute.xlu0 %1698
        %1700 = vrot.lane.b32.xlu0 %v224, 107
        %v1701 = vpop.permute.xlu0 %1700
        %1702 = vrot.lane.b32.xlu0 %v838, 107
        %v1703 = vpop.permute.xlu0 %1702
        %vm1704 = vcmask 875520
        %v1705 = vsel %vm1704, %v1697, %v1699
        %v1706 = vsel %vm1704, %v1699, %v1701
        %v1707 = vsel %vm1704, %v1701, %v1703
        %vm1709 = vcmask 1006592
        %v1710 = vsel %vm1709, %v1707, 0.0
        %v1712 = vsel %vm302, %v1695, 0
        %v1714 = vsel %vm359, %v1705, 0
        %v1716 = vsel %vm359, %v1706, 0
        %v1719 = vsel %vm359, %v1710, 0
        %1721 = vmatprep.subr.mxu0 %v1716
        %1722 = vmatpush1.msra.mxu0 %v1714
        %1723 = vmatprep.subr.mxu0 0.0
        %1724 = vmatpush1.msra.mxu0 0.0
        %1725 = vmatprep.subr.mxu0 0.0
        %1726 = vmatpush1.msra.mxu0 0.0
        %1727 = vmatprep.subr.mxu0 0.0
        %1728 = vmatpush1.msra.mxu0 0.0
        %1729 = vmatprep.subr.mxu0 0.0
        %1730 = vmatpush1.msra.mxu0 0.0
        %1731 = vmatprep.subr.mxu0 0.0
        %1732 = vmatpush1.msra.mxu0 0.0
        %1733 = vmatprep.subr.mxu0 0.0
        %1734 = vmatpush1.msra.mxu0 0.0
        %1735 = vmatprep.subr.mxu0 0.0
        %1736 = vmatpush1.msra.mxu0 0.0
        %1737 = vmatprep.subr.mxu0 0.0
        %1738 = vmatpush1.msra.mxu0 0.0
        %1739 = vmatprep.subr.mxu0 0.0
        %1740 = vmatpush1.msra.mxu0 0.0
        %1741 = vmatprep.subr.mxu0 0.0
        %1742 = vmatpush1.msra.mxu0 0.0
        %1743 = vmatprep.subr.mxu0 0.0
        %1744 = vmatpush1.msra.mxu0 0.0
        %1745 = vmatprep.subr.mxu0 0.0
        %1746 = vmatpush1.msra.mxu0 0.0
        %1747 = vmatprep.subr.mxu0 0.0
        %1748 = vmatpush1.msra.mxu0 0.0
        %1749 = vmatprep.subr.mxu0 0.0
        %1750 = vmatpush1.msra.mxu0 0.0
        %1751 = vmatprep.subr.mxu0 0.0
        %1752 = vmatpush1.msra.mxu0 0.0
        %1753 = vmatprep.subr.mxu0 0.0
        %1754 = vmatpush1.msra.mxu0 0.0
        %1755 = vmatprep.subr.mxu0 0.0
        %1756 = vmatpush1.msra.mxu0 0.0
        %1757 = vmatprep.subr.mxu0 0.0
        %1758 = vmatpush1.msra.mxu0 0.0
        %1759 = vmatprep.subr.mxu0 0.0
        %1760 = vmatpush1.msra.mxu0 0.0
        %1761 = vmatprep.subr.mxu0 0.0
        %1762 = vmatpush1.msra.mxu0 0.0
        %1763 = vmatprep.subr.mxu0 0.0
        %1764 = vmatpush1.msra.mxu0 0.0
        %1765 = vmatprep.subr.mxu0 0.0
        %1766 = vmatpush1.msra.mxu0 0.0
        %1767 = vmatprep.subr.mxu0 0.0
        %1768 = vmatpush1.msra.mxu0 0.0
        %1769 = vmatprep.subr.mxu0 0.0
        %1770 = vmatpush1.msra.mxu0 0.0
        %1771 = vmatprep.subr.mxu0 0.0
        %1772 = vmatpush1.msra.mxu0 0.0
        %1773 = vmatprep.subr.mxu0 0.0
        %1774 = vmatpush1.msra.mxu0 0.0
        %1775 = vmatprep.subr.mxu0 0.0
        %1776 = vmatpush1.msra.mxu0 0.0
        %1777 = vmatprep.subr.mxu0 0.0
        %1778 = vmatpush1.msra.mxu0 0.0
        %1779 = vmatprep.subr.mxu0 0.0
        %1780 = vmatpush1.msra.mxu0 0.0
        %1781 = vmatprep.subr.mxu0 0.0
        %1782 = vmatpush1.msra.mxu0 0.0
        %1783 = vmatprep.subr.mxu0 0.0
        %1784 = vmatpush1.msra.mxu0 0.0
        %1785 = vmatprep.mubr.f32.mxu0 0.0
        %1786 = vmatmul.mubr.f32.gmra.mrb[0].mxu0 %v1712
        %v1787 = vpop.f32.mrb[0].mxu0
        %v1788 = vadd.f32 0.0, %v1787
        %v1789 = vpop.f32.mrb[0].mxu0
        %v1790 = vadd.f32 0.0, %v1789
        %1791 = vdwg.mxu0
        %1792 = vmatprep.subr.mxu0 %v1373
        %1793 = vmatpush1.msra.mxu0 %v1719
        %1794 = vmatprep.subr.mxu0 0.0
        %1795 = vmatpush1.msra.mxu0 0.0
        %1796 = vmatprep.subr.mxu0 0.0
        %1797 = vmatpush1.msra.mxu0 0.0
        %1798 = vmatprep.subr.mxu0 0.0
        %1799 = vmatpush1.msra.mxu0 0.0
        %1800 = vmatprep.subr.mxu0 0.0
        %1801 = vmatpush1.msra.mxu0 0.0
        %1802 = vmatprep.subr.mxu0 0.0
        %1803 = vmatpush1.msra.mxu0 0.0
        %1804 = vmatprep.subr.mxu0 0.0
        %1805 = vmatpush1.msra.mxu0 0.0
        %1806 = vmatprep.subr.mxu0 0.0
        %1807 = vmatpush1.msra.mxu0 0.0
        %1808 = vmatprep.subr.mxu0 0.0
        %1809 = vmatpush1.msra.mxu0 0.0
        %1810 = vmatprep.subr.mxu0 0.0
        %1811 = vmatpush1.msra.mxu0 0.0
        %1812 = vmatprep.subr.mxu0 0.0
        %1813 = vmatpush1.msra.mxu0 0.0
        %1814 = vmatprep.subr.mxu0 0.0
        %1815 = vmatpush1.msra.mxu0 0.0
        %1816 = vmatprep.subr.mxu0 0.0
        %1817 = vmatpush1.msra.mxu0 0.0
        %1818 = vmatprep.subr.mxu0 0.0
        %1819 = vmatpush1.msra.mxu0 0.0
        %1820 = vmatprep.subr.mxu0 0.0
        %1821 = vmatpush1.msra.mxu0 0.0
        %1822 = vmatprep.subr.mxu0 0.0
        %1823 = vmatpush1.msra.mxu0 0.0
        %1824 = vmatprep.subr.mxu0 0.0
        %1825 = vmatpush1.msra.mxu0 0.0
        %1826 = vmatprep.subr.mxu0 0.0
        %1827 = vmatpush1.msra.mxu0 0.0
        %1828 = vmatprep.subr.mxu0 0.0
        %1829 = vmatpush1.msra.mxu0 0.0
        %1830 = vmatprep.subr.mxu0 0.0
        %1831 = vmatpush1.msra.mxu0 0.0
        %1832 = vmatprep.subr.mxu0 0.0
        %1833 = vmatpush1.msra.mxu0 0.0
        %1834 = vmatprep.subr.mxu0 0.0
        %1835 = vmatpush1.msra.mxu0 0.0
        %1836 = vmatprep.subr.mxu0 0.0
        %1837 = vmatpush1.msra.mxu0 0.0
        %1838 = vmatprep.subr.mxu0 0.0
        %1839 = vmatpush1.msra.mxu0 0.0
        %1840 = vmatprep.subr.mxu0 0.0
        %1841 = vmatpush1.msra.mxu0 0.0
        %1842 = vmatprep.subr.mxu0 0.0
        %1843 = vmatpush1.msra.mxu0 0.0
        %1844 = vmatprep.subr.mxu0 0.0
        %1845 = vmatpush1.msra.mxu0 0.0
        %1846 = vmatprep.subr.mxu0 0.0
        %1847 = vmatpush1.msra.mxu0 0.0
        %1848 = vmatprep.subr.mxu0 0.0
        %1849 = vmatpush1.msra.mxu0 0.0
        %1850 = vmatprep.subr.mxu0 0.0
        %1851 = vmatpush1.msra.mxu0 0.0
        %1852 = vmatprep.subr.mxu0 0.0
        %1853 = vmatpush1.msra.mxu0 0.0
        %1854 = vmatprep.subr.mxu0 0.0
        %1855 = vmatpush1.msra.mxu0 0.0
        %1856 = vmatprep.mubr.f32.mxu0 0.0
        %1857 = vmatmul.mubr.f32.gmra.mrb[0].mxu0 %v1712
        %v1858 = vpop.f32.mrb[0].mxu0
        %v1859 = vadd.f32 0.0, %v1858
        %v1860 = vpop.f32.mrb[0].mxu0
        %v1861 = vadd.f32 0.0, %v1860
        %1862 = vdwg.mxu0
        %v1863 = vadd.f32 %v1690, %v1788
        %v1864 = vadd.f32 %v1691, %v1790
        %v1865 = vadd.f32 %v1692, %v1859
        %v1866 = vadd.f32 %v1693, %v1861
        %v1867 = vld [vmem:[%s2] sm:$0xf]
        %1869 = vset.pattern.permute.xlu0 0
        %1870 = vperm.xlu0 %1869, %v1867
        %v1871 = vpop.permute.xlu0 %1870
        %v1873 = vadd.f32 %v1863, %v1871
        %v1874 = vadd.f32 %v1864, %v1871
        %v1875 = vadd.f32 %v1865, %v1871
        %v1876 = vadd.f32 %v1866, %v1871
        %v1877 = vmax.f32 %v1873, 0.0
        %v1878 = vmax.f32 %v1874, 0.0
        %v1879 = vmax.f32 %v1875, 0.0
        %v1880 = vmax.f32 %v1876, 0.0
        %v1881 = vlaneseq
        %v1882 = vshrl.u32 %v1881, 7
        %v1883 = vsub.s32 0, %v1882
        %v1884 = vrot.slane %v289, %v1883
        %v1885 = vlaneseq
        %v1886 = vshrl.u32 %v1885, 7
        %v1887 = vsub.s32 0, %v1886
        %v1888 = vrot.slane %v301, %v1887
        %v1889 = vlaneseq
        %v1890 = vshrl.u32 %v1889, 7
        %v1891 = vsub.s32 0, %v1890
        %v1892 = vrot.slane %v313, %v1891
        %v1893 = vlaneseq
        %v1894 = vshrl.u32 %v1893, 7
        %v1895 = vsub.s32 0, %v1894
        %v1896 = vrot.slane %v310, %v1895
        %v1897 = vmul.f32 %v1877, %v1884
        %v1898 = vmul.f32 %v1878, %v1888
        %v1899 = vmul.f32 %v1879, %v1892
        %v1900 = vmul.f32 %v1880, %v1896
        %v1901 = vsel %vm325, 1, 0
        %v1902 = vsel %vm326, 1, 0
        %v1903 = vsel %vm327, 1, 0
        %v1904 = vsel %vm328, 1, 0
        %vm1905 = vcmp.eq.s32.totalorder %v1901, 1
        %vm1906 = vcmp.eq.s32.totalorder %v1902, 1
        %vm1907 = vcmp.eq.s32.totalorder %v1903, 1
        %vm1908 = vcmp.eq.s32.totalorder %v1904, 1
        %v1909 = vsel %vm1905, %v1897, 0.0
        %v1910 = vsel %vm1906, %v1898, 0.0
        %v1911 = vsel %vm1907, %v1899, 0.0
        %v1912 = vsel %vm1908, %v1900, 0.0
        %v1913 = vld [vmem:[%s3] sm:$0xf]
        %1917 = vrot.lane.b32.xlu0 %v1909, 21
        %v1918 = vpop.permute.xlu0 %1917
        %1919 = vrot.lane.b32.xlu0 %v1910, 21
        %v1920 = vpop.permute.xlu0 %1919
        %1921 = vrot.lane.b32.xlu0 %v1911, 21
        %v1922 = vpop.permute.xlu0 %1921
        %v1923 = vsel %vm339, %v1918, %v1920
        %v1924 = vsel %vm339, %v1920, %v1922
        %v1926 = vsel %vm339, 0.0, %v1918
        %s1927 = scalar_lea.vmem %s3, 4
        %v1928 = vld [vmem:[%s1927] sm:$0xf]
        %1929 = vrot.lane.b32.xlu0 %v1909, 20
        %v1930 = vpop.permute.xlu0 %1929
        %1931 = vrot.lane.b32.xlu0 %v1910, 20
        %v1932 = vpop.permute.xlu0 %1931
        %1933 = vrot.lane.b32.xlu0 %v1911, 20
        %v1934 = vpop.permute.xlu0 %1933
        %v1935 = vsel %vm278, %v1930, %v1932
        %v1936 = vsel %vm278, %v1932, %v1934
        %v1938 = vsel %vm278, 0.0, %v1930
        %v1940 = vsel %vm302, %v1928, 0
        %v1943 = vsel %vm359, %v1938, 0
        %v1945 = vsel %vm359, %v1935, 0
        %v1947 = vsel %vm359, %v1936, 0
        %v1949 = vsel %vm359, %v1934, 0
        %1951 = vmatprep.subr.mxu0 %v1945
        %1952 = vmatpush1.msra.mxu0 %v1943
        %1953 = vmatprep.subr.mxu0 0.0
        %1954 = vmatpush1.msra.mxu0 0.0
        %1955 = vmatprep.subr.mxu0 0.0
        %1956 = vmatpush1.msra.mxu0 0.0
        %1957 = vmatprep.subr.mxu0 0.0
        %1958 = vmatpush1.msra.mxu0 0.0
        %1959 = vmatprep.subr.mxu0 0.0
        %1960 = vmatpush1.msra.mxu0 0.0
        %1961 = vmatprep.subr.mxu0 0.0
        %1962 = vmatpush1.msra.mxu0 0.0
        %1963 = vmatprep.subr.mxu0 0.0
        %1964 = vmatpush1.msra.mxu0 0.0
        %1965 = vmatprep.subr.mxu0 0.0
        %1966 = vmatpush1.msra.mxu0 0.0
        %1967 = vmatprep.subr.mxu0 0.0
        %1968 = vmatpush1.msra.mxu0 0.0
        %1969 = vmatprep.subr.mxu0 0.0
        %1970 = vmatpush1.msra.mxu0 0.0
        %1971 = vmatprep.subr.mxu0 0.0
        %1972 = vmatpush1.msra.mxu0 0.0
        %1973 = vmatprep.subr.mxu0 0.0
        %1974 = vmatpush1.msra.mxu0 0.0
        %1975 = vmatprep.subr.mxu0 0.0
        %1976 = vmatpush1.msra.mxu0 0.0
        %1977 = vmatprep.subr.mxu0 0.0
        %1978 = vmatpush1.msra.mxu0 0.0
        %1979 = vmatprep.subr.mxu0 0.0
        %1980 = vmatpush1.msra.mxu0 0.0
        %1981 = vmatprep.subr.mxu0 0.0
        %1982 = vmatpush1.msra.mxu0 0.0
        %1983 = vmatprep.subr.mxu0 0.0
        %1984 = vmatpush1.msra.mxu0 0.0
        %1985 = vmatprep.subr.mxu0 0.0
        %1986 = vmatpush1.msra.mxu0 0.0
        %1987 = vmatprep.subr.mxu0 0.0
        %1988 = vmatpush1.msra.mxu0 0.0
        %1989 = vmatprep.subr.mxu0 0.0
        %1990 = vmatpush1.msra.mxu0 0.0
        %1991 = vmatprep.subr.mxu0 0.0
        %1992 = vmatpush1.msra.mxu0 0.0
        %1993 = vmatprep.subr.mxu0 0.0
        %1994 = vmatpush1.msra.mxu0 0.0
        %1995 = vmatprep.subr.mxu0 0.0
        %1996 = vmatpush1.msra.mxu0 0.0
        %1997 = vmatprep.subr.mxu0 0.0
        %1998 = vmatpush1.msra.mxu0 0.0
        %1999 = vmatprep.subr.mxu0 0.0
        %2000 = vmatpush1.msra.mxu0 0.0
        %2001 = vmatprep.subr.mxu0 0.0
        %2002 = vmatpush1.msra.mxu0 0.0
        %2003 = vmatprep.subr.mxu0 0.0
        %2004 = vmatpush1.msra.mxu0 0.0
        %2005 = vmatprep.subr.mxu0 0.0
        %2006 = vmatpush1.msra.mxu0 0.0
        %2007 = vmatprep.subr.mxu0 0.0
        %2008 = vmatpush1.msra.mxu0 0.0
        %2009 = vmatprep.subr.mxu0 0.0
        %2010 = vmatpush1.msra.mxu0 0.0
        %2011 = vmatprep.subr.mxu0 0.0
        %2012 = vmatpush1.msra.mxu0 0.0
        %2013 = vmatprep.subr.mxu0 0.0
        %2014 = vmatpush1.msra.mxu0 0.0
        %2015 = vmatprep.mubr.f32.mxu0 0.0
        %2016 = vmatmul.mubr.f32.gmra.mrb[0].mxu0 %v1940
        %v2017 = vpop.f32.mrb[0].mxu0
        %v2018 = vadd.f32 0.0, %v2017
        %v2019 = vpop.f32.mrb[0].mxu0
        %v2020 = vadd.f32 0.0, %v2019
        %2021 = vdwg.mxu0
        %2022 = vmatprep.subr.mxu0 %v1949
        %2023 = vmatpush1.msra.mxu0 %v1947
        %2024 = vmatprep.subr.mxu0 0.0
        %2025 = vmatpush1.msra.mxu0 0.0
        %2026 = vmatprep.subr.mxu0 0.0
        %2027 = vmatpush1.msra.mxu0 0.0
        %2028 = vmatprep.subr.mxu0 0.0
        %2029 = vmatpush1.msra.mxu0 0.0
        %2030 = vmatprep.subr.mxu0 0.0
        %2031 = vmatpush1.msra.mxu0 0.0
        %2032 = vmatprep.subr.mxu0 0.0
        %2033 = vmatpush1.msra.mxu0 0.0
        %2034 = vmatprep.subr.mxu0 0.0
        %2035 = vmatpush1.msra.mxu0 0.0
        %2036 = vmatprep.subr.mxu0 0.0
        %2037 = vmatpush1.msra.mxu0 0.0
        %2038 = vmatprep.subr.mxu0 0.0
        %2039 = vmatpush1.msra.mxu0 0.0
        %2040 = vmatprep.subr.mxu0 0.0
        %2041 = vmatpush1.msra.mxu0 0.0
        %2042 = vmatprep.subr.mxu0 0.0
        %2043 = vmatpush1.msra.mxu0 0.0
        %2044 = vmatprep.subr.mxu0 0.0
        %2045 = vmatpush1.msra.mxu0 0.0
        %2046 = vmatprep.subr.mxu0 0.0
        %2047 = vmatpush1.msra.mxu0 0.0
        %2048 = vmatprep.subr.mxu0 0.0
        %2049 = vmatpush1.msra.mxu0 0.0
        %2050 = vmatprep.subr.mxu0 0.0
        %2051 = vmatpush1.msra.mxu0 0.0
        %2052 = vmatprep.subr.mxu0 0.0
        %2053 = vmatpush1.msra.mxu0 0.0
        %2054 = vmatprep.subr.mxu0 0.0
        %2055 = vmatpush1.msra.mxu0 0.0
        %2056 = vmatprep.subr.mxu0 0.0
        %2057 = vmatpush1.msra.mxu0 0.0
        %2058 = vmatprep.subr.mxu0 0.0
        %2059 = vmatpush1.msra.mxu0 0.0
        %2060 = vmatprep.subr.mxu0 0.0
        %2061 = vmatpush1.msra.mxu0 0.0
        %2062 = vmatprep.subr.mxu0 0.0
        %2063 = vmatpush1.msra.mxu0 0.0
        %2064 = vmatprep.subr.mxu0 0.0
        %2065 = vmatpush1.msra.mxu0 0.0
        %2066 = vmatprep.subr.mxu0 0.0
        %2067 = vmatpush1.msra.mxu0 0.0
        %2068 = vmatprep.subr.mxu0 0.0
        %2069 = vmatpush1.msra.mxu0 0.0
        %2070 = vmatprep.subr.mxu0 0.0
        %2071 = vmatpush1.msra.mxu0 0.0
        %2072 = vmatprep.subr.mxu0 0.0
        %2073 = vmatpush1.msra.mxu0 0.0
        %2074 = vmatprep.subr.mxu0 0.0
        %2075 = vmatpush1.msra.mxu0 0.0
        %2076 = vmatprep.subr.mxu0 0.0
        %2077 = vmatpush1.msra.mxu0 0.0
        %2078 = vmatprep.subr.mxu0 0.0
        %2079 = vmatpush1.msra.mxu0 0.0
        %2080 = vmatprep.subr.mxu0 0.0
        %2081 = vmatpush1.msra.mxu0 0.0
        %2082 = vmatprep.subr.mxu0 0.0
        %2083 = vmatpush1.msra.mxu0 0.0
        %2084 = vmatprep.subr.mxu0 0.0
        %2085 = vmatpush1.msra.mxu0 0.0
        %2086 = vmatprep.mubr.f32.mxu0 0.0
        %2087 = vmatmul.mubr.f32.gmra.mrb[0].mxu0 %v1940
        %v2088 = vpop.f32.mrb[0].mxu0
        %v2089 = vadd.f32 0.0, %v2088
        %v2090 = vpop.f32.mrb[0].mxu0
        %v2091 = vadd.f32 0.0, %v2090
        %2092 = vdwg.mxu0
        %v2094 = vsel %vm302, %v1913, 0
        %v2097 = vsel %vm359, %v1926, 0
        %v2099 = vsel %vm359, %v1923, 0
        %v2101 = vsel %vm359, %v1924, 0
        %v2103 = vsel %vm359, %v1922, 0
        %2105 = vmatprep.subr.mxu0 %v2099
        %2106 = vmatpush1.msra.mxu0 %v2097
        %2107 = vmatprep.subr.mxu0 0.0
        %2108 = vmatpush1.msra.mxu0 0.0
        %2109 = vmatprep.subr.mxu0 0.0
        %2110 = vmatpush1.msra.mxu0 0.0
        %2111 = vmatprep.subr.mxu0 0.0
        %2112 = vmatpush1.msra.mxu0 0.0
        %2113 = vmatprep.subr.mxu0 0.0
        %2114 = vmatpush1.msra.mxu0 0.0
        %2115 = vmatprep.subr.mxu0 0.0
        %2116 = vmatpush1.msra.mxu0 0.0
        %2117 = vmatprep.subr.mxu0 0.0
        %2118 = vmatpush1.msra.mxu0 0.0
        %2119 = vmatprep.subr.mxu0 0.0
        %2120 = vmatpush1.msra.mxu0 0.0
        %2121 = vmatprep.subr.mxu0 0.0
        %2122 = vmatpush1.msra.mxu0 0.0
        %2123 = vmatprep.subr.mxu0 0.0
        %2124 = vmatpush1.msra.mxu0 0.0
        %2125 = vmatprep.subr.mxu0 0.0
        %2126 = vmatpush1.msra.mxu0 0.0
        %2127 = vmatprep.subr.mxu0 0.0
        %2128 = vmatpush1.msra.mxu0 0.0
        %2129 = vmatprep.subr.mxu0 0.0
        %2130 = vmatpush1.msra.mxu0 0.0
        %2131 = vmatprep.subr.mxu0 0.0
        %2132 = vmatpush1.msra.mxu0 0.0
        %2133 = vmatprep.subr.mxu0 0.0
        %2134 = vmatpush1.msra.mxu0 0.0
        %2135 = vmatprep.subr.mxu0 0.0
        %2136 = vmatpush1.msra.mxu0 0.0
        %2137 = vmatprep.subr.mxu0 0.0
        %2138 = vmatpush1.msra.mxu0 0.0
        %2139 = vmatprep.subr.mxu0 0.0
        %2140 = vmatpush1.msra.mxu0 0.0
        %2141 = vmatprep.subr.mxu0 0.0
        %2142 = vmatpush1.msra.mxu0 0.0
        %2143 = vmatprep.subr.mxu0 0.0
        %2144 = vmatpush1.msra.mxu0 0.0
        %2145 = vmatprep.subr.mxu0 0.0
        %2146 = vmatpush1.msra.mxu0 0.0
        %2147 = vmatprep.subr.mxu0 0.0
        %2148 = vmatpush1.msra.mxu0 0.0
        %2149 = vmatprep.subr.mxu0 0.0
        %2150 = vmatpush1.msra.mxu0 0.0
        %2151 = vmatprep.subr.mxu0 0.0
        %2152 = vmatpush1.msra.mxu0 0.0
        %2153 = vmatprep.subr.mxu0 0.0
        %2154 = vmatpush1.msra.mxu0 0.0
        %2155 = vmatprep.subr.mxu0 0.0
        %2156 = vmatpush1.msra.mxu0 0.0
        %2157 = vmatprep.subr.mxu0 0.0
        %2158 = vmatpush1.msra.mxu0 0.0
        %2159 = vmatprep.subr.mxu0 0.0
        %2160 = vmatpush1.msra.mxu0 0.0
        %2161 = vmatprep.subr.mxu0 0.0
        %2162 = vmatpush1.msra.mxu0 0.0
        %2163 = vmatprep.subr.mxu0 0.0
        %2164 = vmatpush1.msra.mxu0 0.0
        %2165 = vmatprep.subr.mxu0 0.0
        %2166 = vmatpush1.msra.mxu0 0.0
        %2167 = vmatprep.subr.mxu0 0.0
        %2168 = vmatpush1.msra.mxu0 0.0
        %2169 = vmatprep.mubr.f32.mxu0 0.0
        %2170 = vmatmul.mubr.f32.gmra.mrb[0].mxu0 %v2094
        %v2171 = vpop.f32.mrb[0].mxu0
        %v2172 = vadd.f32 %v2018, %v2171
        %v2173 = vpop.f32.mrb[0].mxu0
        %v2174 = vadd.f32 %v2020, %v2173
        %2175 = vdwg.mxu0
        %2176 = vmatprep.subr.mxu0 %v2103
        %2177 = vmatpush1.msra.mxu0 %v2101
        %2178 = vmatprep.subr.mxu0 0.0
        %2179 = vmatpush1.msra.mxu0 0.0
        %2180 = vmatprep.subr.mxu0 0.0
        %2181 = vmatpush1.msra.mxu0 0.0
        %2182 = vmatprep.subr.mxu0 0.0
        %2183 = vmatpush1.msra.mxu0 0.0
        %2184 = vmatprep.subr.mxu0 0.0
        %2185 = vmatpush1.msra.mxu0 0.0
        %2186 = vmatprep.subr.mxu0 0.0
        %2187 = vmatpush1.msra.mxu0 0.0
        %2188 = vmatprep.subr.mxu0 0.0
        %2189 = vmatpush1.msra.mxu0 0.0
        %2190 = vmatprep.subr.mxu0 0.0
        %2191 = vmatpush1.msra.mxu0 0.0
        %2192 = vmatprep.subr.mxu0 0.0
        %2193 = vmatpush1.msra.mxu0 0.0
        %2194 = vmatprep.subr.mxu0 0.0
        %2195 = vmatpush1.msra.mxu0 0.0
        %2196 = vmatprep.subr.mxu0 0.0
        %2197 = vmatpush1.msra.mxu0 0.0
        %2198 = vmatprep.subr.mxu0 0.0
        %2199 = vmatpush1.msra.mxu0 0.0
        %2200 = vmatprep.subr.mxu0 0.0
        %2201 = vmatpush1.msra.mxu0 0.0
        %2202 = vmatprep.subr.mxu0 0.0
        %2203 = vmatpush1.msra.mxu0 0.0
        %2204 = vmatprep.subr.mxu0 0.0
        %2205 = vmatpush1.msra.mxu0 0.0
        %2206 = vmatprep.subr.mxu0 0.0
        %2207 = vmatpush1.msra.mxu0 0.0
        %2208 = vmatprep.subr.mxu0 0.0
        %2209 = vmatpush1.msra.mxu0 0.0
        %2210 = vmatprep.subr.mxu0 0.0
        %2211 = vmatpush1.msra.mxu0 0.0
        %2212 = vmatprep.subr.mxu0 0.0
        %2213 = vmatpush1.msra.mxu0 0.0
        %2214 = vmatprep.subr.mxu0 0.0
        %2215 = vmatpush1.msra.mxu0 0.0
        %2216 = vmatprep.subr.mxu0 0.0
        %2217 = vmatpush1.msra.mxu0 0.0
        %2218 = vmatprep.subr.mxu0 0.0
        %2219 = vmatpush1.msra.mxu0 0.0
        %2220 = vmatprep.subr.mxu0 0.0
        %2221 = vmatpush1.msra.mxu0 0.0
        %2222 = vmatprep.subr.mxu0 0.0
        %2223 = vmatpush1.msra.mxu0 0.0
        %2224 = vmatprep.subr.mxu0 0.0
        %2225 = vmatpush1.msra.mxu0 0.0
        %2226 = vmatprep.subr.mxu0 0.0
        %2227 = vmatpush1.msra.mxu0 0.0
        %2228 = vmatprep.subr.mxu0 0.0
        %2229 = vmatpush1.msra.mxu0 0.0
        %2230 = vmatprep.subr.mxu0 0.0
        %2231 = vmatpush1.msra.mxu0 0.0
        %2232 = vmatprep.subr.mxu0 0.0
        %2233 = vmatpush1.msra.mxu0 0.0
        %2234 = vmatprep.subr.mxu0 0.0
        %2235 = vmatpush1.msra.mxu0 0.0
        %2236 = vmatprep.subr.mxu0 0.0
        %2237 = vmatpush1.msra.mxu0 0.0
        %2238 = vmatprep.subr.mxu0 0.0
        %2239 = vmatpush1.msra.mxu0 0.0
        %2240 = vmatprep.mubr.f32.mxu0 0.0
        %2241 = vmatmul.mubr.f32.gmra.mrb[0].mxu0 %v2094
        %v2242 = vpop.f32.mrb[0].mxu0
        %v2243 = vadd.f32 %v2089, %v2242
        %v2244 = vpop.f32.mrb[0].mxu0
        %v2245 = vadd.f32 %v2091, %v2244
        %2246 = vdwg.mxu0
        %s2247 = scalar_lea.vmem %s3, 8
        %v2248 = vld [vmem:[%s2247] sm:$0xf]
        %2249 = vrot.lane.b32.xlu0 %v1909, 19
        %v2250 = vpop.permute.xlu0 %2249
        %2251 = vrot.lane.b32.xlu0 %v1910, 19
        %v2252 = vpop.permute.xlu0 %2251
        %2253 = vrot.lane.b32.xlu0 %v1911, 19
        %v2254 = vpop.permute.xlu0 %2253
        %v2255 = vsel %vm673, %v2250, %v2252
        %v2256 = vsel %vm673, %v2252, %v2254
        %v2258 = vsel %vm673, 0.0, %v2250
        %v2260 = vsel %vm302, %v2248, 0
        %v2263 = vsel %vm359, %v2258, 0
        %v2265 = vsel %vm359, %v2255, 0
        %v2267 = vsel %vm359, %v2256, 0
        %v2269 = vsel %vm359, %v2254, 0
        %2271 = vmatprep.subr.mxu0 %v2265
        %2272 = vmatpush1.msra.mxu0 %v2263
        %2273 = vmatprep.subr.mxu0 0.0
        %2274 = vmatpush1.msra.mxu0 0.0
        %2275 = vmatprep.subr.mxu0 0.0
        %2276 = vmatpush1.msra.mxu0 0.0
        %2277 = vmatprep.subr.mxu0 0.0
        %2278 = vmatpush1.msra.mxu0 0.0
        %2279 = vmatprep.subr.mxu0 0.0
        %2280 = vmatpush1.msra.mxu0 0.0
        %2281 = vmatprep.subr.mxu0 0.0
        %2282 = vmatpush1.msra.mxu0 0.0
        %2283 = vmatprep.subr.mxu0 0.0
        %2284 = vmatpush1.msra.mxu0 0.0
        %2285 = vmatprep.subr.mxu0 0.0
        %2286 = vmatpush1.msra.mxu0 0.0
        %2287 = vmatprep.subr.mxu0 0.0
        %2288 = vmatpush1.msra.mxu0 0.0
        %2289 = vmatprep.subr.mxu0 0.0
        %2290 = vmatpush1.msra.mxu0 0.0
        %2291 = vmatprep.subr.mxu0 0.0
        %2292 = vmatpush1.msra.mxu0 0.0
        %2293 = vmatprep.subr.mxu0 0.0
        %2294 = vmatpush1.msra.mxu0 0.0
        %2295 = vmatprep.subr.mxu0 0.0
        %2296 = vmatpush1.msra.mxu0 0.0
        %2297 = vmatprep.subr.mxu0 0.0
        %2298 = vmatpush1.msra.mxu0 0.0
        %2299 = vmatprep.subr.mxu0 0.0
        %2300 = vmatpush1.msra.mxu0 0.0
        %2301 = vmatprep.subr.mxu0 0.0
        %2302 = vmatpush1.msra.mxu0 0.0
        %2303 = vmatprep.subr.mxu0 0.0
        %2304 = vmatpush1.msra.mxu0 0.0
        %2305 = vmatprep.subr.mxu0 0.0
        %2306 = vmatpush1.msra.mxu0 0.0
        %2307 = vmatprep.subr.mxu0 0.0
        %2308 = vmatpush1.msra.mxu0 0.0
        %2309 = vmatprep.subr.mxu0 0.0
        %2310 = vmatpush1.msra.mxu0 0.0
        %2311 = vmatprep.subr.mxu0 0.0
        %2312 = vmatpush1.msra.mxu0 0.0
        %2313 = vmatprep.subr.mxu0 0.0
        %2314 = vmatpush1.msra.mxu0 0.0
        %2315 = vmatprep.subr.mxu0 0.0
        %2316 = vmatpush1.msra.mxu0 0.0
        %2317 = vmatprep.subr.mxu0 0.0
        %2318 = vmatpush1.msra.mxu0 0.0
        %2319 = vmatprep.subr.mxu0 0.0
        %2320 = vmatpush1.msra.mxu0 0.0
        %2321 = vmatprep.subr.mxu0 0.0
        %2322 = vmatpush1.msra.mxu0 0.0
        %2323 = vmatprep.subr.mxu0 0.0
        %2324 = vmatpush1.msra.mxu0 0.0
        %2325 = vmatprep.subr.mxu0 0.0
        %2326 = vmatpush1.msra.mxu0 0.0
        %2327 = vmatprep.subr.mxu0 0.0
        %2328 = vmatpush1.msra.mxu0 0.0
        %2329 = vmatprep.subr.mxu0 0.0
        %2330 = vmatpush1.msra.mxu0 0.0
        %2331 = vmatprep.subr.mxu0 0.0
        %2332 = vmatpush1.msra.mxu0 0.0
        %2333 = vmatprep.subr.mxu0 0.0
        %2334 = vmatpush1.msra.mxu0 0.0
        %2335 = vmatprep.mubr.f32.mxu0 0.0
        %2336 = vmatmul.mubr.f32.gmra.mrb[0].mxu0 %v2260
        %v2337 = vpop.f32.mrb[0].mxu0
        %v2338 = vadd.f32 0.0, %v2337
        %v2339 = vpop.f32.mrb[0].mxu0
        %v2340 = vadd.f32 0.0, %v2339
        %2341 = vdwg.mxu0
        %2342 = vmatprep.subr.mxu0 %v2269
        %2343 = vmatpush1.msra.mxu0 %v2267
        %2344 = vmatprep.subr.mxu0 0.0
        %2345 = vmatpush1.msra.mxu0 0.0
        %2346 = vmatprep.subr.mxu0 0.0
        %2347 = vmatpush1.msra.mxu0 0.0
        %2348 = vmatprep.subr.mxu0 0.0
        %2349 = vmatpush1.msra.mxu0 0.0
        %2350 = vmatprep.subr.mxu0 0.0
        %2351 = vmatpush1.msra.mxu0 0.0
        %2352 = vmatprep.subr.mxu0 0.0
        %2353 = vmatpush1.msra.mxu0 0.0
        %2354 = vmatprep.subr.mxu0 0.0
        %2355 = vmatpush1.msra.mxu0 0.0
        %2356 = vmatprep.subr.mxu0 0.0
        %2357 = vmatpush1.msra.mxu0 0.0
        %2358 = vmatprep.subr.mxu0 0.0
        %2359 = vmatpush1.msra.mxu0 0.0
        %2360 = vmatprep.subr.mxu0 0.0
        %2361 = vmatpush1.msra.mxu0 0.0
        %2362 = vmatprep.subr.mxu0 0.0
        %2363 = vmatpush1.msra.mxu0 0.0
        %2364 = vmatprep.subr.mxu0 0.0
        %2365 = vmatpush1.msra.mxu0 0.0
        %2366 = vmatprep.subr.mxu0 0.0
        %2367 = vmatpush1.msra.mxu0 0.0
        %2368 = vmatprep.subr.mxu0 0.0
        %2369 = vmatpush1.msra.mxu0 0.0
        %2370 = vmatprep.subr.mxu0 0.0
        %2371 = vmatpush1.msra.mxu0 0.0
        %2372 = vmatprep.subr.mxu0 0.0
        %2373 = vmatpush1.msra.mxu0 0.0
        %2374 = vmatprep.subr.mxu0 0.0
        %2375 = vmatpush1.msra.mxu0 0.0
        %2376 = vmatprep.subr.mxu0 0.0
        %2377 = vmatpush1.msra.mxu0 0.0
        %2378 = vmatprep.subr.mxu0 0.0
        %2379 = vmatpush1.msra.mxu0 0.0
        %2380 = vmatprep.subr.mxu0 0.0
        %2381 = vmatpush1.msra.mxu0 0.0
        %2382 = vmatprep.subr.mxu0 0.0
        %2383 = vmatpush1.msra.mxu0 0.0
        %2384 = vmatprep.subr.mxu0 0.0
        %2385 = vmatpush1.msra.mxu0 0.0
        %2386 = vmatprep.subr.mxu0 0.0
        %2387 = vmatpush1.msra.mxu0 0.0
        %2388 = vmatprep.subr.mxu0 0.0
        %2389 = vmatpush1.msra.mxu0 0.0
        %2390 = vmatprep.subr.mxu0 0.0
        %2391 = vmatpush1.msra.mxu0 0.0
        %2392 = vmatprep.subr.mxu0 0.0
        %2393 = vmatpush1.msra.mxu0 0.0
        %2394 = vmatprep.subr.mxu0 0.0
        %2395 = vmatpush1.msra.mxu0 0.0
        %2396 = vmatprep.subr.mxu0 0.0
        %2397 = vmatpush1.msra.mxu0 0.0
        %2398 = vmatprep.subr.mxu0 0.0
        %2399 = vmatpush1.msra.mxu0 0.0
        %2400 = vmatprep.subr.mxu0 0.0
        %2401 = vmatpush1.msra.mxu0 0.0
        %2402 = vmatprep.subr.mxu0 0.0
        %2403 = vmatpush1.msra.mxu0 0.0
        %2404 = vmatprep.subr.mxu0 0.0
        %2405 = vmatpush1.msra.mxu0 0.0
        %2406 = vmatprep.mubr.f32.mxu0 0.0
        %2407 = vmatmul.mubr.f32.gmra.mrb[0].mxu0 %v2260
        %v2408 = vpop.f32.mrb[0].mxu0
        %v2409 = vadd.f32 0.0, %v2408
        %v2410 = vpop.f32.mrb[0].mxu0
        %v2411 = vadd.f32 0.0, %v2410
        %2412 = vdwg.mxu0
        %v2413 = vadd.f32 %v2172, %v2338
        %v2414 = vadd.f32 %v2174, %v2340
        %v2415 = vadd.f32 %v2243, %v2409
        %v2416 = vadd.f32 %v2245, %v2411
        %s2417 = scalar_lea.vmem %s3, 12
        %v2418 = vld [vmem:[%s2417] sm:$0xf]
        %2420 = vrot.lane.b32.xlu0 %v1909, 1
        %v2421 = vpop.permute.xlu0 %2420
        %2422 = vrot.lane.b32.xlu0 %v1910, 1
        %v2423 = vpop.permute.xlu0 %2422
        %2424 = vrot.lane.b32.xlu0 %v1911, 1
        %v2425 = vpop.permute.xlu0 %2424
        %2426 = vrot.lane.b32.xlu0 %v1912, 1
        %v2427 = vpop.permute.xlu0 %2426
        %v2428 = vsel %vm847, %v2421, %v2423
        %v2429 = vsel %vm847, %v2423, %v2425
        %v2430 = vsel %vm847, %v2425, %v2427
        %v2432 = vsel %vm847, 0.0, %v2421
        %v2434 = vsel %vm302, %v2418, 0
        %v2437 = vsel %vm359, %v2432, 0
        %v2439 = vsel %vm359, %v2428, 0
        %v2441 = vsel %vm359, %v2429, 0
        %v2443 = vsel %vm359, %v2430, 0
        %2445 = vmatprep.subr.mxu0 %v2439
        %2446 = vmatpush1.msra.mxu0 %v2437
        %2447 = vmatprep.subr.mxu0 0.0
        %2448 = vmatpush1.msra.mxu0 0.0
        %2449 = vmatprep.subr.mxu0 0.0
        %2450 = vmatpush1.msra.mxu0 0.0
        %2451 = vmatprep.subr.mxu0 0.0
        %2452 = vmatpush1.msra.mxu0 0.0
        %2453 = vmatprep.subr.mxu0 0.0
        %2454 = vmatpush1.msra.mxu0 0.0
        %2455 = vmatprep.subr.mxu0 0.0
        %2456 = vmatpush1.msra.mxu0 0.0
        %2457 = vmatprep.subr.mxu0 0.0
        %2458 = vmatpush1.msra.mxu0 0.0
        %2459 = vmatprep.subr.mxu0 0.0
        %2460 = vmatpush1.msra.mxu0 0.0
        %2461 = vmatprep.subr.mxu0 0.0
        %2462 = vmatpush1.msra.mxu0 0.0
        %2463 = vmatprep.subr.mxu0 0.0
        %2464 = vmatpush1.msra.mxu0 0.0
        %2465 = vmatprep.subr.mxu0 0.0
        %2466 = vmatpush1.msra.mxu0 0.0
        %2467 = vmatprep.subr.mxu0 0.0
        %2468 = vmatpush1.msra.mxu0 0.0
        %2469 = vmatprep.subr.mxu0 0.0
        %2470 = vmatpush1.msra.mxu0 0.0
        %2471 = vmatprep.subr.mxu0 0.0
        %2472 = vmatpush1.msra.mxu0 0.0
        %2473 = vmatprep.subr.mxu0 0.0
        %2474 = vmatpush1.msra.mxu0 0.0
        %2475 = vmatprep.subr.mxu0 0.0
        %2476 = vmatpush1.msra.mxu0 0.0
        %2477 = vmatprep.subr.mxu0 0.0
        %2478 = vmatpush1.msra.mxu0 0.0
        %2479 = vmatprep.subr.mxu0 0.0
        %2480 = vmatpush1.msra.mxu0 0.0
        %2481 = vmatprep.subr.mxu0 0.0
        %2482 = vmatpush1.msra.mxu0 0.0
        %2483 = vmatprep.subr.mxu0 0.0
        %2484 = vmatpush1.msra.mxu0 0.0
        %2485 = vmatprep.subr.mxu0 0.0
        %2486 = vmatpush1.msra.mxu0 0.0
        %2487 = vmatprep.subr.mxu0 0.0
        %2488 = vmatpush1.msra.mxu0 0.0
        %2489 = vmatprep.subr.mxu0 0.0
        %2490 = vmatpush1.msra.mxu0 0.0
        %2491 = vmatprep.subr.mxu0 0.0
        %2492 = vmatpush1.msra.mxu0 0.0
        %2493 = vmatprep.subr.mxu0 0.0
        %2494 = vmatpush1.msra.mxu0 0.0
        %2495 = vmatprep.subr.mxu0 0.0
        %2496 = vmatpush1.msra.mxu0 0.0
        %2497 = vmatprep.subr.mxu0 0.0
        %2498 = vmatpush1.msra.mxu0 0.0
        %2499 = vmatprep.subr.mxu0 0.0
        %2500 = vmatpush1.msra.mxu0 0.0
        %2501 = vmatprep.subr.mxu0 0.0
        %2502 = vmatpush1.msra.mxu0 0.0
        %2503 = vmatprep.subr.mxu0 0.0
        %2504 = vmatpush1.msra.mxu0 0.0
        %2505 = vmatprep.subr.mxu0 0.0
        %2506 = vmatpush1.msra.mxu0 0.0
        %2507 = vmatprep.subr.mxu0 0.0
        %2508 = vmatpush1.msra.mxu0 0.0
        %2509 = vmatprep.mubr.f32.mxu0 0.0
        %2510 = vmatmul.mubr.f32.gmra.mrb[0].mxu0 %v2434
        %v2511 = vpop.f32.mrb[0].mxu0
        %v2512 = vadd.f32 0.0, %v2511
        %v2513 = vpop.f32.mrb[0].mxu0
        %v2514 = vadd.f32 0.0, %v2513
        %2515 = vdwg.mxu0
        %2516 = vmatprep.subr.mxu0 %v2443
        %2517 = vmatpush1.msra.mxu0 %v2441
        %2518 = vmatprep.subr.mxu0 0.0
        %2519 = vmatpush1.msra.mxu0 0.0
        %2520 = vmatprep.subr.mxu0 0.0
        %2521 = vmatpush1.msra.mxu0 0.0
        %2522 = vmatprep.subr.mxu0 0.0
        %2523 = vmatpush1.msra.mxu0 0.0
        %2524 = vmatprep.subr.mxu0 0.0
        %2525 = vmatpush1.msra.mxu0 0.0
        %2526 = vmatprep.subr.mxu0 0.0
        %2527 = vmatpush1.msra.mxu0 0.0
        %2528 = vmatprep.subr.mxu0 0.0
        %2529 = vmatpush1.msra.mxu0 0.0
        %2530 = vmatprep.subr.mxu0 0.0
        %2531 = vmatpush1.msra.mxu0 0.0
        %2532 = vmatprep.subr.mxu0 0.0
        %2533 = vmatpush1.msra.mxu0 0.0
        %2534 = vmatprep.subr.mxu0 0.0
        %2535 = vmatpush1.msra.mxu0 0.0
        %2536 = vmatprep.subr.mxu0 0.0
        %2537 = vmatpush1.msra.mxu0 0.0
        %2538 = vmatprep.subr.mxu0 0.0
        %2539 = vmatpush1.msra.mxu0 0.0
        %2540 = vmatprep.subr.mxu0 0.0
        %2541 = vmatpush1.msra.mxu0 0.0
        %2542 = vmatprep.subr.mxu0 0.0
        %2543 = vmatpush1.msra.mxu0 0.0
        %2544 = vmatprep.subr.mxu0 0.0
        %2545 = vmatpush1.msra.mxu0 0.0
        %2546 = vmatprep.subr.mxu0 0.0
        %2547 = vmatpush1.msra.mxu0 0.0
        %2548 = vmatprep.subr.mxu0 0.0
        %2549 = vmatpush1.msra.mxu0 0.0
        %2550 = vmatprep.subr.mxu0 0.0
        %2551 = vmatpush1.msra.mxu0 0.0
        %2552 = vmatprep.subr.mxu0 0.0
        %2553 = vmatpush1.msra.mxu0 0.0
        %2554 = vmatprep.subr.mxu0 0.0
        %2555 = vmatpush1.msra.mxu0 0.0
        %2556 = vmatprep.subr.mxu0 0.0
        %2557 = vmatpush1.msra.mxu0 0.0
        %2558 = vmatprep.subr.mxu0 0.0
        %2559 = vmatpush1.msra.mxu0 0.0
        %2560 = vmatprep.subr.mxu0 0.0
        %2561 = vmatpush1.msra.mxu0 0.0
        %2562 = vmatprep.subr.mxu0 0.0
        %2563 = vmatpush1.msra.mxu0 0.0
        %2564 = vmatprep.subr.mxu0 0.0
        %2565 = vmatpush1.msra.mxu0 0.0
        %2566 = vmatprep.subr.mxu0 0.0
        %2567 = vmatpush1.msra.mxu0 0.0
        %2568 = vmatprep.subr.mxu0 0.0
        %2569 = vmatpush1.msra.mxu0 0.0
        %2570 = vmatprep.subr.mxu0 0.0
        %2571 = vmatpush1.msra.mxu0 0.0
        %2572 = vmatprep.subr.mxu0 0.0
        %2573 = vmatpush1.msra.mxu0 0.0
        %2574 = vmatprep.subr.mxu0 0.0
        %2575 = vmatpush1.msra.mxu0 0.0
        %2576 = vmatprep.subr.mxu0 0.0
        %2577 = vmatpush1.msra.mxu0 0.0
        %2578 = vmatprep.subr.mxu0 0.0
        %2579 = vmatpush1.msra.mxu0 0.0
        %2580 = vmatprep.mubr.f32.mxu0 0.0
        %2581 = vmatmul.mubr.f32.gmra.mrb[0].mxu0 %v2434
        %v2582 = vpop.f32.mrb[0].mxu0
        %v2583 = vadd.f32 0.0, %v2582
        %v2584 = vpop.f32.mrb[0].mxu0
        %v2585 = vadd.f32 0.0, %v2584
        %2586 = vdwg.mxu0
        %v2587 = vadd.f32 %v2413, %v2512
        %v2588 = vadd.f32 %v2414, %v2514
        %v2589 = vadd.f32 %v2415, %v2583
        %v2590 = vadd.f32 %v2416, %v2585
        %s2591 = scalar_lea.vmem %s3, 16
        %v2592 = vld [vmem:[%s2591] sm:$0xf]
        %v2594 = vsel %vm302, %v2592, 0
        %v2596 = vsel %vm359, %v1909, 0
        %v2598 = vsel %vm359, %v1910, 0
        %v2600 = vsel %vm359, %v1911, 0
        %v2602 = vsel %vm359, %v1912, 0
        %2604 = vmatprep.subr.mxu0 %v2598
        %2605 = vmatpush1.msra.mxu0 %v2596
        %2606 = vmatprep.subr.mxu0 0.0
        %2607 = vmatpush1.msra.mxu0 0.0
        %2608 = vmatprep.subr.mxu0 0.0
        %2609 = vmatpush1.msra.mxu0 0.0
        %2610 = vmatprep.subr.mxu0 0.0
        %2611 = vmatpush1.msra.mxu0 0.0
        %2612 = vmatprep.subr.mxu0 0.0
        %2613 = vmatpush1.msra.mxu0 0.0
        %2614 = vmatprep.subr.mxu0 0.0
        %2615 = vmatpush1.msra.mxu0 0.0
        %2616 = vmatprep.subr.mxu0 0.0
        %2617 = vmatpush1.msra.mxu0 0.0
        %2618 = vmatprep.subr.mxu0 0.0
        %2619 = vmatpush1.msra.mxu0 0.0
        %2620 = vmatprep.subr.mxu0 0.0
        %2621 = vmatpush1.msra.mxu0 0.0
        %2622 = vmatprep.subr.mxu0 0.0
        %2623 = vmatpush1.msra.mxu0 0.0
        %2624 = vmatprep.subr.mxu0 0.0
        %2625 = vmatpush1.msra.mxu0 0.0
        %2626 = vmatprep.subr.mxu0 0.0
        %2627 = vmatpush1.msra.mxu0 0.0
        %2628 = vmatprep.subr.mxu0 0.0
        %2629 = vmatpush1.msra.mxu0 0.0
        %2630 = vmatprep.subr.mxu0 0.0
        %2631 = vmatpush1.msra.mxu0 0.0
        %2632 = vmatprep.subr.mxu0 0.0
        %2633 = vmatpush1.msra.mxu0 0.0
        %2634 = vmatprep.subr.mxu0 0.0
        %2635 = vmatpush1.msra.mxu0 0.0
        %2636 = vmatprep.subr.mxu0 0.0
        %2637 = vmatpush1.msra.mxu0 0.0
        %2638 = vmatprep.subr.mxu0 0.0
        %2639 = vmatpush1.msra.mxu0 0.0
        %2640 = vmatprep.subr.mxu0 0.0
        %2641 = vmatpush1.msra.mxu0 0.0
        %2642 = vmatprep.subr.mxu0 0.0
        %2643 = vmatpush1.msra.mxu0 0.0
        %2644 = vmatprep.subr.mxu0 0.0
        %2645 = vmatpush1.msra.mxu0 0.0
        %2646 = vmatprep.subr.mxu0 0.0
        %2647 = vmatpush1.msra.mxu0 0.0
        %2648 = vmatprep.subr.mxu0 0.0
        %2649 = vmatpush1.msra.mxu0 0.0
        %2650 = vmatprep.subr.mxu0 0.0
        %2651 = vmatpush1.msra.mxu0 0.0
        %2652 = vmatprep.subr.mxu0 0.0
        %2653 = vmatpush1.msra.mxu0 0.0
        %2654 = vmatprep.subr.mxu0 0.0
        %2655 = vmatpush1.msra.mxu0 0.0
        %2656 = vmatprep.subr.mxu0 0.0
        %2657 = vmatpush1.msra.mxu0 0.0
        %2658 = vmatprep.subr.mxu0 0.0
        %2659 = vmatpush1.msra.mxu0 0.0
        %2660 = vmatprep.subr.mxu0 0.0
        %2661 = vmatpush1.msra.mxu0 0.0
        %2662 = vmatprep.subr.mxu0 0.0
        %2663 = vmatpush1.msra.mxu0 0.0
        %2664 = vmatprep.subr.mxu0 0.0
        %2665 = vmatpush1.msra.mxu0 0.0
        %2666 = vmatprep.subr.mxu0 0.0
        %2667 = vmatpush1.msra.mxu0 0.0
        %2668 = vmatprep.mubr.f32.mxu0 0.0
        %2669 = vmatmul.mubr.f32.gmra.mrb[0].mxu0 %v2594
        %v2670 = vpop.f32.mrb[0].mxu0
        %v2671 = vadd.f32 0.0, %v2670
        %v2672 = vpop.f32.mrb[0].mxu0
        %v2673 = vadd.f32 0.0, %v2672
        %2674 = vdwg.mxu0
        %2675 = vmatprep.subr.mxu0 %v2602
        %2676 = vmatpush1.msra.mxu0 %v2600
        %2677 = vmatprep.subr.mxu0 0.0
        %2678 = vmatpush1.msra.mxu0 0.0
        %2679 = vmatprep.subr.mxu0 0.0
        %2680 = vmatpush1.msra.mxu0 0.0
        %2681 = vmatprep.subr.mxu0 0.0
        %2682 = vmatpush1.msra.mxu0 0.0
        %2683 = vmatprep.subr.mxu0 0.0
        %2684 = vmatpush1.msra.mxu0 0.0
        %2685 = vmatprep.subr.mxu0 0.0
        %2686 = vmatpush1.msra.mxu0 0.0
        %2687 = vmatprep.subr.mxu0 0.0
        %2688 = vmatpush1.msra.mxu0 0.0
        %2689 = vmatprep.subr.mxu0 0.0
        %2690 = vmatpush1.msra.mxu0 0.0
        %2691 = vmatprep.subr.mxu0 0.0
        %2692 = vmatpush1.msra.mxu0 0.0
        %2693 = vmatprep.subr.mxu0 0.0
        %2694 = vmatpush1.msra.mxu0 0.0
        %2695 = vmatprep.subr.mxu0 0.0
        %2696 = vmatpush1.msra.mxu0 0.0
        %2697 = vmatprep.subr.mxu0 0.0
        %2698 = vmatpush1.msra.mxu0 0.0
        %2699 = vmatprep.subr.mxu0 0.0
        %2700 = vmatpush1.msra.mxu0 0.0
        %2701 = vmatprep.subr.mxu0 0.0
        %2702 = vmatpush1.msra.mxu0 0.0
        %2703 = vmatprep.subr.mxu0 0.0
        %2704 = vmatpush1.msra.mxu0 0.0
        %2705 = vmatprep.subr.mxu0 0.0
        %2706 = vmatpush1.msra.mxu0 0.0
        %2707 = vmatprep.subr.mxu0 0.0
        %2708 = vmatpush1.msra.mxu0 0.0
        %2709 = vmatprep.subr.mxu0 0.0
        %2710 = vmatpush1.msra.mxu0 0.0
        %2711 = vmatprep.subr.mxu0 0.0
        %2712 = vmatpush1.msra.mxu0 0.0
        %2713 = vmatprep.subr.mxu0 0.0
        %2714 = vmatpush1.msra.mxu0 0.0
        %2715 = vmatprep.subr.mxu0 0.0
        %2716 = vmatpush1.msra.mxu0 0.0
        %2717 = vmatprep.subr.mxu0 0.0
        %2718 = vmatpush1.msra.mxu0 0.0
        %2719 = vmatprep.subr.mxu0 0.0
        %2720 = vmatpush1.msra.mxu0 0.0
        %2721 = vmatprep.subr.mxu0 0.0
        %2722 = vmatpush1.msra.mxu0 0.0
        %2723 = vmatprep.subr.mxu0 0.0
        %2724 = vmatpush1.msra.mxu0 0.0
        %2725 = vmatprep.subr.mxu0 0.0
        %2726 = vmatpush1.msra.mxu0 0.0
        %2727 = vmatprep.subr.mxu0 0.0
        %2728 = vmatpush1.msra.mxu0 0.0
        %2729 = vmatprep.subr.mxu0 0.0
        %2730 = vmatpush1.msra.mxu0 0.0
        %2731 = vmatprep.subr.mxu0 0.0
        %2732 = vmatpush1.msra.mxu0 0.0
        %2733 = vmatprep.subr.mxu0 0.0
        %2734 = vmatpush1.msra.mxu0 0.0
        %2735 = vmatprep.subr.mxu0 0.0
        %2736 = vmatpush1.msra.mxu0 0.0
        %2737 = vmatprep.subr.mxu0 0.0
        %2738 = vmatpush1.msra.mxu0 0.0
        %2739 = vmatprep.mubr.f32.mxu0 0.0
        %2740 = vmatmul.mubr.f32.gmra.mrb[0].mxu0 %v2594
        %v2741 = vpop.f32.mrb[0].mxu0
        %v2742 = vadd.f32 0.0, %v2741
        %v2743 = vpop.f32.mrb[0].mxu0
        %v2744 = vadd.f32 0.0, %v2743
        %2745 = vdwg.mxu0
        %v2746 = vadd.f32 %v2587, %v2671
        %v2747 = vadd.f32 %v2588, %v2673
        %v2748 = vadd.f32 %v2589, %v2742
        %v2749 = vadd.f32 %v2590, %v2744
        %s2750 = scalar_lea.vmem %s3, 20
        %v2751 = vld [vmem:[%s2750] sm:$0xf]
        %2752 = vrot.lane.b32.xlu0 %v1909, 127
        %v2753 = vpop.permute.xlu0 %2752
        %2754 = vrot.lane.b32.xlu0 %v1910, 127
        %v2755 = vpop.permute.xlu0 %2754
        %2756 = vrot.lane.b32.xlu0 %v1911, 127
        %v2757 = vpop.permute.xlu0 %2756
        %2758 = vrot.lane.b32.xlu0 %v1912, 127
        %v2759 = vpop.permute.xlu0 %2758
        %v2760 = vsel %vm1180, %v2753, %v2755
        %v2761 = vsel %vm1180, %v2755, %v2757
        %v2762 = vsel %vm1180, %v2757, %v2759
        %v2764 = vsel %vm1185, %v2759, 0.0
        %v2766 = vsel %vm302, %v2751, 0
        %v2768 = vsel %vm359, %v2760, 0
        %v2770 = vsel %vm359, %v2761, 0
        %v2772 = vsel %vm359, %v2762, 0
        %v2775 = vsel %vm359, %v2764, 0
        %2777 = vmatprep.subr.mxu0 %v2770
        %2778 = vmatpush1.msra.mxu0 %v2768
        %2779 = vmatprep.subr.mxu0 0.0
        %2780 = vmatpush1.msra.mxu0 0.0
        %2781 = vmatprep.subr.mxu0 0.0
        %2782 = vmatpush1.msra.mxu0 0.0
        %2783 = vmatprep.subr.mxu0 0.0
        %2784 = vmatpush1.msra.mxu0 0.0
        %2785 = vmatprep.subr.mxu0 0.0
        %2786 = vmatpush1.msra.mxu0 0.0
        %2787 = vmatprep.subr.mxu0 0.0
        %2788 = vmatpush1.msra.mxu0 0.0
        %2789 = vmatprep.subr.mxu0 0.0
        %2790 = vmatpush1.msra.mxu0 0.0
        %2791 = vmatprep.subr.mxu0 0.0
        %2792 = vmatpush1.msra.mxu0 0.0
        %2793 = vmatprep.subr.mxu0 0.0
        %2794 = vmatpush1.msra.mxu0 0.0
        %2795 = vmatprep.subr.mxu0 0.0
        %2796 = vmatpush1.msra.mxu0 0.0
        %2797 = vmatprep.subr.mxu0 0.0
        %2798 = vmatpush1.msra.mxu0 0.0
        %2799 = vmatprep.subr.mxu0 0.0
        %2800 = vmatpush1.msra.mxu0 0.0
        %2801 = vmatprep.subr.mxu0 0.0
        %2802 = vmatpush1.msra.mxu0 0.0
        %2803 = vmatprep.subr.mxu0 0.0
        %2804 = vmatpush1.msra.mxu0 0.0
        %2805 = vmatprep.subr.mxu0 0.0
        %2806 = vmatpush1.msra.mxu0 0.0
        %2807 = vmatprep.subr.mxu0 0.0
        %2808 = vmatpush1.msra.mxu0 0.0
        %2809 = vmatprep.subr.mxu0 0.0
        %2810 = vmatpush1.msra.mxu0 0.0
        %2811 = vmatprep.subr.mxu0 0.0
        %2812 = vmatpush1.msra.mxu0 0.0
        %2813 = vmatprep.subr.mxu0 0.0
        %2814 = vmatpush1.msra.mxu0 0.0
        %2815 = vmatprep.subr.mxu0 0.0
        %2816 = vmatpush1.msra.mxu0 0.0
        %2817 = vmatprep.subr.mxu0 0.0
        %2818 = vmatpush1.msra.mxu0 0.0
        %2819 = vmatprep.subr.mxu0 0.0
        %2820 = vmatpush1.msra.mxu0 0.0
        %2821 = vmatprep.subr.mxu0 0.0
        %2822 = vmatpush1.msra.mxu0 0.0
        %2823 = vmatprep.subr.mxu0 0.0
        %2824 = vmatpush1.msra.mxu0 0.0
        %2825 = vmatprep.subr.mxu0 0.0
        %2826 = vmatpush1.msra.mxu0 0.0
        %2827 = vmatprep.subr.mxu0 0.0
        %2828 = vmatpush1.msra.mxu0 0.0
        %2829 = vmatprep.subr.mxu0 0.0
        %2830 = vmatpush1.msra.mxu0 0.0
        %2831 = vmatprep.subr.mxu0 0.0
        %2832 = vmatpush1.msra.mxu0 0.0
        %2833 = vmatprep.subr.mxu0 0.0
        %2834 = vmatpush1.msra.mxu0 0.0
        %2835 = vmatprep.subr.mxu0 0.0
        %2836 = vmatpush1.msra.mxu0 0.0
        %2837 = vmatprep.subr.mxu0 0.0
        %2838 = vmatpush1.msra.mxu0 0.0
        %2839 = vmatprep.subr.mxu0 0.0
        %2840 = vmatpush1.msra.mxu0 0.0
        %2841 = vmatprep.mubr.f32.mxu0 0.0
        %2842 = vmatmul.mubr.f32.gmra.mrb[0].mxu0 %v2766
        %v2843 = vpop.f32.mrb[0].mxu0
        %v2844 = vadd.f32 0.0, %v2843
        %v2845 = vpop.f32.mrb[0].mxu0
        %v2846 = vadd.f32 0.0, %v2845
        %2847 = vdwg.mxu0
        %2848 = vmatprep.subr.mxu0 %v2775
        %2849 = vmatpush1.msra.mxu0 %v2772
        %2850 = vmatprep.subr.mxu0 0.0
        %2851 = vmatpush1.msra.mxu0 0.0
        %2852 = vmatprep.subr.mxu0 0.0
        %2853 = vmatpush1.msra.mxu0 0.0
        %2854 = vmatprep.subr.mxu0 0.0
        %2855 = vmatpush1.msra.mxu0 0.0
        %2856 = vmatprep.subr.mxu0 0.0
        %2857 = vmatpush1.msra.mxu0 0.0
        %2858 = vmatprep.subr.mxu0 0.0
        %2859 = vmatpush1.msra.mxu0 0.0
        %2860 = vmatprep.subr.mxu0 0.0
        %2861 = vmatpush1.msra.mxu0 0.0
        %2862 = vmatprep.subr.mxu0 0.0
        %2863 = vmatpush1.msra.mxu0 0.0
        %2864 = vmatprep.subr.mxu0 0.0
        %2865 = vmatpush1.msra.mxu0 0.0
        %2866 = vmatprep.subr.mxu0 0.0
        %2867 = vmatpush1.msra.mxu0 0.0
        %2868 = vmatprep.subr.mxu0 0.0
        %2869 = vmatpush1.msra.mxu0 0.0
        %2870 = vmatprep.subr.mxu0 0.0
        %2871 = vmatpush1.msra.mxu0 0.0
        %2872 = vmatprep.subr.mxu0 0.0
        %2873 = vmatpush1.msra.mxu0 0.0
        %2874 = vmatprep.subr.mxu0 0.0
        %2875 = vmatpush1.msra.mxu0 0.0
        %2876 = vmatprep.subr.mxu0 0.0
        %2877 = vmatpush1.msra.mxu0 0.0
        %2878 = vmatprep.subr.mxu0 0.0
        %2879 = vmatpush1.msra.mxu0 0.0
        %2880 = vmatprep.subr.mxu0 0.0
        %2881 = vmatpush1.msra.mxu0 0.0
        %2882 = vmatprep.subr.mxu0 0.0
        %2883 = vmatpush1.msra.mxu0 0.0
        %2884 = vmatprep.subr.mxu0 0.0
        %2885 = vmatpush1.msra.mxu0 0.0
        %2886 = vmatprep.subr.mxu0 0.0
        %2887 = vmatpush1.msra.mxu0 0.0
        %2888 = vmatprep.subr.mxu0 0.0
        %2889 = vmatpush1.msra.mxu0 0.0
        %2890 = vmatprep.subr.mxu0 0.0
        %2891 = vmatpush1.msra.mxu0 0.0
        %2892 = vmatprep.subr.mxu0 0.0
        %2893 = vmatpush1.msra.mxu0 0.0
        %2894 = vmatprep.subr.mxu0 0.0
        %2895 = vmatpush1.msra.mxu0 0.0
        %2896 = vmatprep.subr.mxu0 0.0
        %2897 = vmatpush1.msra.mxu0 0.0
        %2898 = vmatprep.subr.mxu0 0.0
        %2899 = vmatpush1.msra.mxu0 0.0
        %2900 = vmatprep.subr.mxu0 0.0
        %2901 = vmatpush1.msra.mxu0 0.0
        %2902 = vmatprep.subr.mxu0 0.0
        %2903 = vmatpush1.msra.mxu0 0.0
        %2904 = vmatprep.subr.mxu0 0.0
        %2905 = vmatpush1.msra.mxu0 0.0
        %2906 = vmatprep.subr.mxu0 0.0
        %2907 = vmatpush1.msra.mxu0 0.0
        %2908 = vmatprep.subr.mxu0 0.0
        %2909 = vmatpush1.msra.mxu0 0.0
        %2910 = vmatprep.subr.mxu0 0.0
        %2911 = vmatpush1.msra.mxu0 0.0
        %2912 = vmatprep.mubr.f32.mxu0 0.0
        %2913 = vmatmul.mubr.f32.gmra.mrb[0].mxu0 %v2766
        %v2914 = vpop.f32.mrb[0].mxu0
        %v2915 = vadd.f32 0.0, %v2914
        %v2916 = vpop.f32.mrb[0].mxu0
        %v2917 = vadd.f32 0.0, %v2916
        %2918 = vdwg.mxu0
        %v2919 = vadd.f32 %v2746, %v2844
        %v2920 = vadd.f32 %v2747, %v2846
        %v2921 = vadd.f32 %v2748, %v2915
        %v2922 = vadd.f32 %v2749, %v2917
        %s2923 = scalar_lea.vmem %s3, 24
        %v2924 = vld [vmem:[%s2923] sm:$0xf]
        %2925 = vrot.lane.b32.xlu0 %v1909, 109
        %v2926 = vpop.permute.xlu0 %2925
        %2927 = vrot.lane.b32.xlu0 %v1910, 109
        %v2928 = vpop.permute.xlu0 %2927
        %2929 = vrot.lane.b32.xlu0 %v1911, 109
        %v2930 = vpop.permute.xlu0 %2929
        %2931 = vrot.lane.b32.xlu0 %v1912, 109
        %v2932 = vpop.permute.xlu0 %2931
        %v2933 = vsel %vm1355, %v2926, %v2928
        %v2934 = vsel %vm1355, %v2928, %v2930
        %v2935 = vsel %vm1355, %v2930, %v2932
        %v2937 = vsel %vm1360, %v2935, 0.0
        %v2939 = vsel %vm302, %v2924, 0
        %v2941 = vsel %vm359, %v2933, 0
        %v2943 = vsel %vm359, %v2934, 0
        %v2946 = vsel %vm359, %v2937, 0
        %2948 = vmatprep.subr.mxu0 %v2943
        %2949 = vmatpush1.msra.mxu0 %v2941
        %2950 = vmatprep.subr.mxu0 0.0
        %2951 = vmatpush1.msra.mxu0 0.0
        %2952 = vmatprep.subr.mxu0 0.0
        %2953 = vmatpush1.msra.mxu0 0.0
        %2954 = vmatprep.subr.mxu0 0.0
        %2955 = vmatpush1.msra.mxu0 0.0
        %2956 = vmatprep.subr.mxu0 0.0
        %2957 = vmatpush1.msra.mxu0 0.0
        %2958 = vmatprep.subr.mxu0 0.0
        %2959 = vmatpush1.msra.mxu0 0.0
        %2960 = vmatprep.subr.mxu0 0.0
        %2961 = vmatpush1.msra.mxu0 0.0
        %2962 = vmatprep.subr.mxu0 0.0
        %2963 = vmatpush1.msra.mxu0 0.0
        %2964 = vmatprep.subr.mxu0 0.0
        %2965 = vmatpush1.msra.mxu0 0.0
        %2966 = vmatprep.subr.mxu0 0.0
        %2967 = vmatpush1.msra.mxu0 0.0
        %2968 = vmatprep.subr.mxu0 0.0
        %2969 = vmatpush1.msra.mxu0 0.0
        %2970 = vmatprep.subr.mxu0 0.0
        %2971 = vmatpush1.msra.mxu0 0.0
        %2972 = vmatprep.subr.mxu0 0.0
        %2973 = vmatpush1.msra.mxu0 0.0
        %2974 = vmatprep.subr.mxu0 0.0
        %2975 = vmatpush1.msra.mxu0 0.0
        %2976 = vmatprep.subr.mxu0 0.0
        %2977 = vmatpush1.msra.mxu0 0.0
        %2978 = vmatprep.subr.mxu0 0.0
        %2979 = vmatpush1.msra.mxu0 0.0
        %2980 = vmatprep.subr.mxu0 0.0
        %2981 = vmatpush1.msra.mxu0 0.0
        %2982 = vmatprep.subr.mxu0 0.0
        %2983 = vmatpush1.msra.mxu0 0.0
        %2984 = vmatprep.subr.mxu0 0.0
        %2985 = vmatpush1.msra.mxu0 0.0
        %2986 = vmatprep.subr.mxu0 0.0
        %2987 = vmatpush1.msra.mxu0 0.0
        %2988 = vmatprep.subr.mxu0 0.0
        %2989 = vmatpush1.msra.mxu0 0.0
        %2990 = vmatprep.subr.mxu0 0.0
        %2991 = vmatpush1.msra.mxu0 0.0
        %2992 = vmatprep.subr.mxu0 0.0
        %2993 = vmatpush1.msra.mxu0 0.0
        %2994 = vmatprep.subr.mxu0 0.0
        %2995 = vmatpush1.msra.mxu0 0.0
        %2996 = vmatprep.subr.mxu0 0.0
        %2997 = vmatpush1.msra.mxu0 0.0
        %2998 = vmatprep.subr.mxu0 0.0
        %2999 = vmatpush1.msra.mxu0 0.0
        %3000 = vmatprep.subr.mxu0 0.0
        %3001 = vmatpush1.msra.mxu0 0.0
        %3002 = vmatprep.subr.mxu0 0.0
        %3003 = vmatpush1.msra.mxu0 0.0
        %3004 = vmatprep.subr.mxu0 0.0
        %3005 = vmatpush1.msra.mxu0 0.0
        %3006 = vmatprep.subr.mxu0 0.0
        %3007 = vmatpush1.msra.mxu0 0.0
        %3008 = vmatprep.subr.mxu0 0.0
        %3009 = vmatpush1.msra.mxu0 0.0
        %3010 = vmatprep.subr.mxu0 0.0
        %3011 = vmatpush1.msra.mxu0 0.0
        %3012 = vmatprep.mubr.f32.mxu0 0.0
        %3013 = vmatmul.mubr.f32.gmra.mrb[0].mxu0 %v2939
        %v3014 = vpop.f32.mrb[0].mxu0
        %v3015 = vadd.f32 0.0, %v3014
        %v3016 = vpop.f32.mrb[0].mxu0
        %v3017 = vadd.f32 0.0, %v3016
        %3018 = vdwg.mxu0
        %3019 = vmatprep.subr.mxu0 %v1373
        %3020 = vmatpush1.msra.mxu0 %v2946
        %3021 = vmatprep.subr.mxu0 0.0
        %3022 = vmatpush1.msra.mxu0 0.0
        %3023 = vmatprep.subr.mxu0 0.0
        %3024 = vmatpush1.msra.mxu0 0.0
        %3025 = vmatprep.subr.mxu0 0.0
        %3026 = vmatpush1.msra.mxu0 0.0
        %3027 = vmatprep.subr.mxu0 0.0
        %3028 = vmatpush1.msra.mxu0 0.0
        %3029 = vmatprep.subr.mxu0 0.0
        %3030 = vmatpush1.msra.mxu0 0.0
        %3031 = vmatprep.subr.mxu0 0.0
        %3032 = vmatpush1.msra.mxu0 0.0
        %3033 = vmatprep.subr.mxu0 0.0
        %3034 = vmatpush1.msra.mxu0 0.0
        %3035 = vmatprep.subr.mxu0 0.0
        %3036 = vmatpush1.msra.mxu0 0.0
        %3037 = vmatprep.subr.mxu0 0.0
        %3038 = vmatpush1.msra.mxu0 0.0
        %3039 = vmatprep.subr.mxu0 0.0
        %3040 = vmatpush1.msra.mxu0 0.0
        %3041 = vmatprep.subr.mxu0 0.0
        %3042 = vmatpush1.msra.mxu0 0.0
        %3043 = vmatprep.subr.mxu0 0.0
        %3044 = vmatpush1.msra.mxu0 0.0
        %3045 = vmatprep.subr.mxu0 0.0
        %3046 = vmatpush1.msra.mxu0 0.0
        %3047 = vmatprep.subr.mxu0 0.0
        %3048 = vmatpush1.msra.mxu0 0.0
        %3049 = vmatprep.subr.mxu0 0.0
        %3050 = vmatpush1.msra.mxu0 0.0
        %3051 = vmatprep.subr.mxu0 0.0
        %3052 = vmatpush1.msra.mxu0 0.0
        %3053 = vmatprep.subr.mxu0 0.0
        %3054 = vmatpush1.msra.mxu0 0.0
        %3055 = vmatprep.subr.mxu0 0.0
        %3056 = vmatpush1.msra.mxu0 0.0
        %3057 = vmatprep.subr.mxu0 0.0
        %3058 = vmatpush1.msra.mxu0 0.0
        %3059 = vmatprep.subr.mxu0 0.0
        %3060 = vmatpush1.msra.mxu0 0.0
        %3061 = vmatprep.subr.mxu0 0.0
        %3062 = vmatpush1.msra.mxu0 0.0
        %3063 = vmatprep.subr.mxu0 0.0
        %3064 = vmatpush1.msra.mxu0 0.0
        %3065 = vmatprep.subr.mxu0 0.0
        %3066 = vmatpush1.msra.mxu0 0.0
        %3067 = vmatprep.subr.mxu0 0.0
        %3068 = vmatpush1.msra.mxu0 0.0
        %3069 = vmatprep.subr.mxu0 0.0
        %3070 = vmatpush1.msra.mxu0 0.0
        %3071 = vmatprep.subr.mxu0 0.0
        %3072 = vmatpush1.msra.mxu0 0.0
        %3073 = vmatprep.subr.mxu0 0.0
        %3074 = vmatpush1.msra.mxu0 0.0
        %3075 = vmatprep.subr.mxu0 0.0
        %3076 = vmatpush1.msra.mxu0 0.0
        %3077 = vmatprep.subr.mxu0 0.0
        %3078 = vmatpush1.msra.mxu0 0.0
        %3079 = vmatprep.subr.mxu0 0.0
        %3080 = vmatpush1.msra.mxu0 0.0
        %3081 = vmatprep.subr.mxu0 0.0
        %3082 = vmatpush1.msra.mxu0 0.0
        %3083 = vmatprep.mubr.f32.mxu0 0.0
        %3084 = vmatmul.mubr.f32.gmra.mrb[0].mxu0 %v2939
        %v3085 = vpop.f32.mrb[0].mxu0
        %v3086 = vadd.f32 0.0, %v3085
        %v3087 = vpop.f32.mrb[0].mxu0
        %v3088 = vadd.f32 0.0, %v3087
        %3089 = vdwg.mxu0
        %v3090 = vadd.f32 %v2919, %v3015
        %v3091 = vadd.f32 %v2920, %v3017
        %v3092 = vadd.f32 %v2921, %v3086
        %v3093 = vadd.f32 %v2922, %v3088
        %s3094 = scalar_lea.vmem %s3, 28
        %v3095 = vld [vmem:[%s3094] sm:$0xf]
        %3096 = vrot.lane.b32.xlu0 %v1909, 108
        %v3097 = vpop.permute.xlu0 %3096
        %3098 = vrot.lane.b32.xlu0 %v1910, 108
        %v3099 = vpop.permute.xlu0 %3098
        %3100 = vrot.lane.b32.xlu0 %v1911, 108
        %v3101 = vpop.permute.xlu0 %3100
        %3102 = vrot.lane.b32.xlu0 %v1912, 108
        %v3103 = vpop.permute.xlu0 %3102
        %v3104 = vsel %vm1531, %v3097, %v3099
        %v3105 = vsel %vm1531, %v3099, %v3101
        %v3106 = vsel %vm1531, %v3101, %v3103
        %v3108 = vsel %vm1536, %v3106, 0.0
        %v3110 = vsel %vm302, %v3095, 0
        %v3112 = vsel %vm359, %v3104, 0
        %v3114 = vsel %vm359, %v3105, 0
        %v3117 = vsel %vm359, %v3108, 0
        %3119 = vmatprep.subr.mxu0 %v3114
        %3120 = vmatpush1.msra.mxu0 %v3112
        %3121 = vmatprep.subr.mxu0 0.0
        %3122 = vmatpush1.msra.mxu0 0.0
        %3123 = vmatprep.subr.mxu0 0.0
        %3124 = vmatpush1.msra.mxu0 0.0
        %3125 = vmatprep.subr.mxu0 0.0
        %3126 = vmatpush1.msra.mxu0 0.0
        %3127 = vmatprep.subr.mxu0 0.0
        %3128 = vmatpush1.msra.mxu0 0.0
        %3129 = vmatprep.subr.mxu0 0.0
        %3130 = vmatpush1.msra.mxu0 0.0
        %3131 = vmatprep.subr.mxu0 0.0
        %3132 = vmatpush1.msra.mxu0 0.0
        %3133 = vmatprep.subr.mxu0 0.0
        %3134 = vmatpush1.msra.mxu0 0.0
        %3135 = vmatprep.subr.mxu0 0.0
        %3136 = vmatpush1.msra.mxu0 0.0
        %3137 = vmatprep.subr.mxu0 0.0
        %3138 = vmatpush1.msra.mxu0 0.0
        %3139 = vmatprep.subr.mxu0 0.0
        %3140 = vmatpush1.msra.mxu0 0.0
        %3141 = vmatprep.subr.mxu0 0.0
        %3142 = vmatpush1.msra.mxu0 0.0
        %3143 = vmatprep.subr.mxu0 0.0
        %3144 = vmatpush1.msra.mxu0 0.0
        %3145 = vmatprep.subr.mxu0 0.0
        %3146 = vmatpush1.msra.mxu0 0.0
        %3147 = vmatprep.subr.mxu0 0.0
        %3148 = vmatpush1.msra.mxu0 0.0
        %3149 = vmatprep.subr.mxu0 0.0
        %3150 = vmatpush1.msra.mxu0 0.0
        %3151 = vmatprep.subr.mxu0 0.0
        %3152 = vmatpush1.msra.mxu0 0.0
        %3153 = vmatprep.subr.mxu0 0.0
        %3154 = vmatpush1.msra.mxu0 0.0
        %3155 = vmatprep.subr.mxu0 0.0
        %3156 = vmatpush1.msra.mxu0 0.0
        %3157 = vmatprep.subr.mxu0 0.0
        %3158 = vmatpush1.msra.mxu0 0.0
        %3159 = vmatprep.subr.mxu0 0.0
        %3160 = vmatpush1.msra.mxu0 0.0
        %3161 = vmatprep.subr.mxu0 0.0
        %3162 = vmatpush1.msra.mxu0 0.0
        %3163 = vmatprep.subr.mxu0 0.0
        %3164 = vmatpush1.msra.mxu0 0.0
        %3165 = vmatprep.subr.mxu0 0.0
        %3166 = vmatpush1.msra.mxu0 0.0
        %3167 = vmatprep.subr.mxu0 0.0
        %3168 = vmatpush1.msra.mxu0 0.0
        %3169 = vmatprep.subr.mxu0 0.0
        %3170 = vmatpush1.msra.mxu0 0.0
        %3171 = vmatprep.subr.mxu0 0.0
        %3172 = vmatpush1.msra.mxu0 0.0
        %3173 = vmatprep.subr.mxu0 0.0
        %3174 = vmatpush1.msra.mxu0 0.0
        %3175 = vmatprep.subr.mxu0 0.0
        %3176 = vmatpush1.msra.mxu0 0.0
        %3177 = vmatprep.subr.mxu0 0.0
        %3178 = vmatpush1.msra.mxu0 0.0
        %3179 = vmatprep.subr.mxu0 0.0
        %3180 = vmatpush1.msra.mxu0 0.0
        %3181 = vmatprep.subr.mxu0 0.0
        %3182 = vmatpush1.msra.mxu0 0.0
        %3183 = vmatprep.mubr.f32.mxu0 0.0
        %3184 = vmatmul.mubr.f32.gmra.mrb[0].mxu0 %v3110
        %v3185 = vpop.f32.mrb[0].mxu0
        %v3186 = vadd.f32 0.0, %v3185
        %v3187 = vpop.f32.mrb[0].mxu0
        %v3188 = vadd.f32 0.0, %v3187
        %3189 = vdwg.mxu0
        %3190 = vmatprep.subr.mxu0 %v1373
        %3191 = vmatpush1.msra.mxu0 %v3117
        %3192 = vmatprep.subr.mxu0 0.0
        %3193 = vmatpush1.msra.mxu0 0.0
        %3194 = vmatprep.subr.mxu0 0.0
        %3195 = vmatpush1.msra.mxu0 0.0
        %3196 = vmatprep.subr.mxu0 0.0
        %3197 = vmatpush1.msra.mxu0 0.0
        %3198 = vmatprep.subr.mxu0 0.0
        %3199 = vmatpush1.msra.mxu0 0.0
        %3200 = vmatprep.subr.mxu0 0.0
        %3201 = vmatpush1.msra.mxu0 0.0
        %3202 = vmatprep.subr.mxu0 0.0
        %3203 = vmatpush1.msra.mxu0 0.0
        %3204 = vmatprep.subr.mxu0 0.0
        %3205 = vmatpush1.msra.mxu0 0.0
        %3206 = vmatprep.subr.mxu0 0.0
        %3207 = vmatpush1.msra.mxu0 0.0
        %3208 = vmatprep.subr.mxu0 0.0
        %3209 = vmatpush1.msra.mxu0 0.0
        %3210 = vmatprep.subr.mxu0 0.0
        %3211 = vmatpush1.msra.mxu0 0.0
        %3212 = vmatprep.subr.mxu0 0.0
        %3213 = vmatpush1.msra.mxu0 0.0
        %3214 = vmatprep.subr.mxu0 0.0
        %3215 = vmatpush1.msra.mxu0 0.0
        %3216 = vmatprep.subr.mxu0 0.0
        %3217 = vmatpush1.msra.mxu0 0.0
        %3218 = vmatprep.subr.mxu0 0.0
        %3219 = vmatpush1.msra.mxu0 0.0
        %3220 = vmatprep.subr.mxu0 0.0
        %3221 = vmatpush1.msra.mxu0 0.0
        %3222 = vmatprep.subr.mxu0 0.0
        %3223 = vmatpush1.msra.mxu0 0.0
        %3224 = vmatprep.subr.mxu0 0.0
        %3225 = vmatpush1.msra.mxu0 0.0
        %3226 = vmatprep.subr.mxu0 0.0
        %3227 = vmatpush1.msra.mxu0 0.0
        %3228 = vmatprep.subr.mxu0 0.0
        %3229 = vmatpush1.msra.mxu0 0.0
        %3230 = vmatprep.subr.mxu0 0.0
        %3231 = vmatpush1.msra.mxu0 0.0
        %3232 = vmatprep.subr.mxu0 0.0
        %3233 = vmatpush1.msra.mxu0 0.0
        %3234 = vmatprep.subr.mxu0 0.0
        %3235 = vmatpush1.msra.mxu0 0.0
        %3236 = vmatprep.subr.mxu0 0.0
        %3237 = vmatpush1.msra.mxu0 0.0
        %3238 = vmatprep.subr.mxu0 0.0
        %3239 = vmatpush1.msra.mxu0 0.0
        %3240 = vmatprep.subr.mxu0 0.0
        %3241 = vmatpush1.msra.mxu0 0.0
        %3242 = vmatprep.subr.mxu0 0.0
        %3243 = vmatpush1.msra.mxu0 0.0
        %3244 = vmatprep.subr.mxu0 0.0
        %3245 = vmatpush1.msra.mxu0 0.0
        %3246 = vmatprep.subr.mxu0 0.0
        %3247 = vmatpush1.msra.mxu0 0.0
        %3248 = vmatprep.subr.mxu0 0.0
        %3249 = vmatpush1.msra.mxu0 0.0
        %3250 = vmatprep.subr.mxu0 0.0
        %3251 = vmatpush1.msra.mxu0 0.0
        %3252 = vmatprep.subr.mxu0 0.0
        %3253 = vmatpush1.msra.mxu0 0.0
        %3254 = vmatprep.mubr.f32.mxu0 0.0
        %3255 = vmatmul.mubr.f32.gmra.mrb[0].mxu0 %v3110
        %v3256 = vpop.f32.mrb[0].mxu0
        %v3257 = vadd.f32 0.0, %v3256
        %v3258 = vpop.f32.mrb[0].mxu0
        %v3259 = vadd.f32 0.0, %v3258
        %3260 = vdwg.mxu0
        %v3261 = vadd.f32 %v3090, %v3186
        %v3262 = vadd.f32 %v3091, %v3188
        %v3263 = vadd.f32 %v3092, %v3257
        %v3264 = vadd.f32 %v3093, %v3259
        %s3265 = scalar_lea.vmem %s3, 32
        %v3266 = vld [vmem:[%s3265] sm:$0xf]
        %3267 = vrot.lane.b32.xlu0 %v1909, 107
        %v3268 = vpop.permute.xlu0 %3267
        %3269 = vrot.lane.b32.xlu0 %v1910, 107
        %v3270 = vpop.permute.xlu0 %3269
        %3271 = vrot.lane.b32.xlu0 %v1911, 107
        %v3272 = vpop.permute.xlu0 %3271
        %3273 = vrot.lane.b32.xlu0 %v1912, 107
        %v3274 = vpop.permute.xlu0 %3273
        %v3275 = vsel %vm1704, %v3268, %v3270
        %v3276 = vsel %vm1704, %v3270, %v3272
        %v3277 = vsel %vm1704, %v3272, %v3274
        %v3279 = vsel %vm1709, %v3277, 0.0
        %v3281 = vsel %vm302, %v3266, 0
        %v3283 = vsel %vm359, %v3275, 0
        %v3285 = vsel %vm359, %v3276, 0
        %v3288 = vsel %vm359, %v3279, 0
        %3290 = vmatprep.subr.mxu0 %v3285
        %3291 = vmatpush1.msra.mxu0 %v3283
        %3292 = vmatprep.subr.mxu0 0.0
        %3293 = vmatpush1.msra.mxu0 0.0
        %3294 = vmatprep.subr.mxu0 0.0
        %3295 = vmatpush1.msra.mxu0 0.0
        %3296 = vmatprep.subr.mxu0 0.0
        %3297 = vmatpush1.msra.mxu0 0.0
        %3298 = vmatprep.subr.mxu0 0.0
        %3299 = vmatpush1.msra.mxu0 0.0
        %3300 = vmatprep.subr.mxu0 0.0
        %3301 = vmatpush1.msra.mxu0 0.0
        %3302 = vmatprep.subr.mxu0 0.0
        %3303 = vmatpush1.msra.mxu0 0.0
        %3304 = vmatprep.subr.mxu0 0.0
        %3305 = vmatpush1.msra.mxu0 0.0
        %3306 = vmatprep.subr.mxu0 0.0
        %3307 = vmatpush1.msra.mxu0 0.0
        %3308 = vmatprep.subr.mxu0 0.0
        %3309 = vmatpush1.msra.mxu0 0.0
        %3310 = vmatprep.subr.mxu0 0.0
        %3311 = vmatpush1.msra.mxu0 0.0
        %3312 = vmatprep.subr.mxu0 0.0
        %3313 = vmatpush1.msra.mxu0 0.0
        %3314 = vmatprep.subr.mxu0 0.0
        %3315 = vmatpush1.msra.mxu0 0.0
        %3316 = vmatprep.subr.mxu0 0.0
        %3317 = vmatpush1.msra.mxu0 0.0
        %3318 = vmatprep.subr.mxu0 0.0
        %3319 = vmatpush1.msra.mxu0 0.0
        %3320 = vmatprep.subr.mxu0 0.0
        %3321 = vmatpush1.msra.mxu0 0.0
        %3322 = vmatprep.subr.mxu0 0.0
        %3323 = vmatpush1.msra.mxu0 0.0
        %3324 = vmatprep.subr.mxu0 0.0
        %3325 = vmatpush1.msra.mxu0 0.0
        %3326 = vmatprep.subr.mxu0 0.0
        %3327 = vmatpush1.msra.mxu0 0.0
        %3328 = vmatprep.subr.mxu0 0.0
        %3329 = vmatpush1.msra.mxu0 0.0
        %3330 = vmatprep.subr.mxu0 0.0
        %3331 = vmatpush1.msra.mxu0 0.0
        %3332 = vmatprep.subr.mxu0 0.0
        %3333 = vmatpush1.msra.mxu0 0.0
        %3334 = vmatprep.subr.mxu0 0.0
        %3335 = vmatpush1.msra.mxu0 0.0
        %3336 = vmatprep.subr.mxu0 0.0
        %3337 = vmatpush1.msra.mxu0 0.0
        %3338 = vmatprep.subr.mxu0 0.0
        %3339 = vmatpush1.msra.mxu0 0.0
        %3340 = vmatprep.subr.mxu0 0.0
        %3341 = vmatpush1.msra.mxu0 0.0
        %3342 = vmatprep.subr.mxu0 0.0
        %3343 = vmatpush1.msra.mxu0 0.0
        %3344 = vmatprep.subr.mxu0 0.0
        %3345 = vmatpush1.msra.mxu0 0.0
        %3346 = vmatprep.subr.mxu0 0.0
        %3347 = vmatpush1.msra.mxu0 0.0
        %3348 = vmatprep.subr.mxu0 0.0
        %3349 = vmatpush1.msra.mxu0 0.0
        %3350 = vmatprep.subr.mxu0 0.0
        %3351 = vmatpush1.msra.mxu0 0.0
        %3352 = vmatprep.subr.mxu0 0.0
        %3353 = vmatpush1.msra.mxu0 0.0
        %3354 = vmatprep.mubr.f32.mxu0 0.0
        %3355 = vmatmul.mubr.f32.gmra.mrb[0].mxu0 %v3281
        %v3356 = vpop.f32.mrb[0].mxu0
        %v3357 = vadd.f32 0.0, %v3356
        %v3358 = vpop.f32.mrb[0].mxu0
        %v3359 = vadd.f32 0.0, %v3358
        %3360 = vdwg.mxu0
        %3361 = vmatprep.subr.mxu0 %v1373
        %3362 = vmatpush1.msra.mxu0 %v3288
        %3363 = vmatprep.subr.mxu0 0.0
        %3364 = vmatpush1.msra.mxu0 0.0
        %3365 = vmatprep.subr.mxu0 0.0
        %3366 = vmatpush1.msra.mxu0 0.0
        %3367 = vmatprep.subr.mxu0 0.0
        %3368 = vmatpush1.msra.mxu0 0.0
        %3369 = vmatprep.subr.mxu0 0.0
        %3370 = vmatpush1.msra.mxu0 0.0
        %3371 = vmatprep.subr.mxu0 0.0
        %3372 = vmatpush1.msra.mxu0 0.0
        %3373 = vmatprep.subr.mxu0 0.0
        %3374 = vmatpush1.msra.mxu0 0.0
        %3375 = vmatprep.subr.mxu0 0.0
        %3376 = vmatpush1.msra.mxu0 0.0
        %3377 = vmatprep.subr.mxu0 0.0
        %3378 = vmatpush1.msra.mxu0 0.0
        %3379 = vmatprep.subr.mxu0 0.0
        %3380 = vmatpush1.msra.mxu0 0.0
        %3381 = vmatprep.subr.mxu0 0.0
        %3382 = vmatpush1.msra.mxu0 0.0
        %3383 = vmatprep.subr.mxu0 0.0
        %3384 = vmatpush1.msra.mxu0 0.0
        %3385 = vmatprep.subr.mxu0 0.0
        %3386 = vmatpush1.msra.mxu0 0.0
        %3387 = vmatprep.subr.mxu0 0.0
        %3388 = vmatpush1.msra.mxu0 0.0
        %3389 = vmatprep.subr.mxu0 0.0
        %3390 = vmatpush1.msra.mxu0 0.0
        %3391 = vmatprep.subr.mxu0 0.0
        %3392 = vmatpush1.msra.mxu0 0.0
        %3393 = vmatprep.subr.mxu0 0.0
        %3394 = vmatpush1.msra.mxu0 0.0
        %3395 = vmatprep.subr.mxu0 0.0
        %3396 = vmatpush1.msra.mxu0 0.0
        %3397 = vmatprep.subr.mxu0 0.0
        %3398 = vmatpush1.msra.mxu0 0.0
        %3399 = vmatprep.subr.mxu0 0.0
        %3400 = vmatpush1.msra.mxu0 0.0
        %3401 = vmatprep.subr.mxu0 0.0
        %3402 = vmatpush1.msra.mxu0 0.0
        %3403 = vmatprep.subr.mxu0 0.0
        %3404 = vmatpush1.msra.mxu0 0.0
        %3405 = vmatprep.subr.mxu0 0.0
        %3406 = vmatpush1.msra.mxu0 0.0
        %3407 = vmatprep.subr.mxu0 0.0
        %3408 = vmatpush1.msra.mxu0 0.0
        %3409 = vmatprep.subr.mxu0 0.0
        %3410 = vmatpush1.msra.mxu0 0.0
        %3411 = vmatprep.subr.mxu0 0.0
        %3412 = vmatpush1.msra.mxu0 0.0
        %3413 = vmatprep.subr.mxu0 0.0
        %3414 = vmatpush1.msra.mxu0 0.0
        %3415 = vmatprep.subr.mxu0 0.0
        %3416 = vmatpush1.msra.mxu0 0.0
        %3417 = vmatprep.subr.mxu0 0.0
        %3418 = vmatpush1.msra.mxu0 0.0
        %3419 = vmatprep.subr.mxu0 0.0
        %3420 = vmatpush1.msra.mxu0 0.0
        %3421 = vmatprep.subr.mxu0 0.0
        %3422 = vmatpush1.msra.mxu0 0.0
        %3423 = vmatprep.subr.mxu0 0.0
        %3424 = vmatpush1.msra.mxu0 0.0
        %3425 = vmatprep.mubr.f32.mxu0 0.0
        %3426 = vmatmul.mubr.f32.gmra.mrb[0].mxu0 %v3281
        %v3427 = vpop.f32.mrb[0].mxu0
        %v3428 = vadd.f32 0.0, %v3427
        %v3429 = vpop.f32.mrb[0].mxu0
        %v3430 = vadd.f32 0.0, %v3429
        %3431 = vdwg.mxu0
        %v3432 = vadd.f32 %v3261, %v3357
        %v3433 = vadd.f32 %v3262, %v3359
        %v3434 = vadd.f32 %v3263, %v3428
        %v3435 = vadd.f32 %v3264, %v3430
        %v3436 = vld [vmem:[%s4] sm:$0xf]
        %3438 = vset.pattern.permute.xlu0 0
        %3439 = vperm.xlu0 %3438, %v3436
        %v3440 = vpop.permute.xlu0 %3439
        %v3442 = vadd.f32 %v3432, %v3440
        %v3443 = vadd.f32 %v3433, %v3440
        %v3444 = vadd.f32 %v3434, %v3440
        %v3445 = vadd.f32 %v3435, %v3440
        %v3448 = vadd.f32 %v3442, %v223
        %v3449 = vadd.f32 %v3443, %v332
        %v3450 = vadd.f32 %v3444, %v224
        %v3451 = vadd.f32 %v3445, %v838
        %v3456 = vcombine.low %v3448, %v3449
        %v3457 = vcombine.low %v3450, %v3451
        %3460 = vst [vmem:[%s217] sm:$0xff] %v3456
        %vm3461 = vcmask 130052
        %vm3462 = vmor %vm3461, %vm359
        %3463 = vst.msk [vmem:[%s217 + $0x8] sm:$0xff] %vm3462, %v3457
        %s3464 = sand.u32 %s137, 1
        %s3465 = scalar_lea.sflag [#allocation3], %s3464
        %s3466 = sand.u32 %s137, 1
        %s3467 = smul.addr %s3466, 16
        %s3468 = scalar_lea.vmem [#allocation2], %s3467
        // Predicated region
        $region41: #{tpu_custom_call.1} parent=39 // pred_check
          %p3469 = pneg %p147
        $region42: #{tpu_custom_call.1} parent=39 // pred_check_branch
          %3471 = sbr.rel (%p3469) target = $region44
        $region43: #{tpu_custom_call.1} parent=39 // pred_region
          %s3473 = ssub.s32 256, 256
          %3474 = vsyncadd %s3465, %s3473
          %s3475 = smul.addr %s19, 4
          %s3476 = smul.addr %s3475, 64
          %s3477 = scalar_lea.hbm %s5, %s3476
          %s3479 = sshll.u32 %s3468, 4
          %s3480 = int_to_ptr.vmem [resolvable:$true] %s3479
          %3482 = dma.vmem_to_hbm [thread:$0]  %s3480, 256, %s3477, %s3465
        $region44: #{tpu_custom_call.1} parent=39 // pred_fallthru
          _
      $region40: #{tpu_custom_call.1} parent=5 // pred_fallthru
        _
      %p3483 = scmp.le.s32.totalorder 2, %s14
      // Predicated region
      $region45: #{tpu_custom_call.1} parent=5 // pred_check
        %p3484 = pneg %p3483
      $region46: #{tpu_custom_call.1} parent=5 // pred_check_branch
        %3486 = sbr.rel (%p3484) target = $region48
      $region47: #{tpu_custom_call.1} parent=5 // pred_region
        %s3487 = ssub.s32 %s14, 2
        // Predicated region
        $region49: #{tpu_custom_call.1} parent=47 // pred_check
          %p3488 = pneg %p153
        $region50: #{tpu_custom_call.1} parent=47 // pred_check_branch
          %3490 = sbr.rel (%p3488) target = $region52
        $region51: #{tpu_custom_call.1} parent=47 // pred_region
          %s3491 = sand.u32 %s138, 1
          %s3492 = scalar_lea.sflag [#allocation3], %s3491
          %s3493 = sand.u32 %s138, 1
          %s3494 = smul.addr %s3493, 16
          %s3495 = scalar_lea.vmem [#allocation2], %s3494
          %3496 = dma.done %s3492, 256
        $region52: #{tpu_custom_call.1} parent=47 // pred_fallthru
          _
      $region48: #{tpu_custom_call.1} parent=5 // pred_fallthru
        _
    $region6: #{tpu_custom_call.1} parent=1 // loop_footer
      %s18 = sadd.s32 1, %s14
    $region7: #{tpu_custom_call.1} parent=1 // loop_footer_branch
      %13 = sbr.rel target = $region3
    $region8: #{tpu_custom_call.1} parent=1 // loop_exit
      _
    %3497 = vsyncpa [#allocation3], 1
    %s3498 = scalar_lea.sflag [#allocation3], 1
    %3499 = vsyncpa %s3498, 1

</llo_original>
